<compile_context>
chip_gen: v7x
topology: tpu7x:2x2x1
jax: 0.10.0
libtpu: 0.0.40
codegen_flags: <defaults>
</compile_context>

<pallas_src>
import jax
import jax.numpy as jnp
import numpy as np
from jax.experimental import pallas as pl
from jax.experimental.pallas import tpu as pltpu


def vae_kernel(
    x_ref,            # (TB, 784) bf16 activation tile (streamed)
    w1_ref, b1_ref,   # (784, 256) bf16, (1, 256) f32
    w2_ref, b2_ref,   # (256, 512) bf16, (1, 512) f32
    wh_ref, bh_ref,   # (512, 4)   bf16, (1, 4)   f32   fused [w21 | w22]
    w3_ref, b3_ref,   # (2, 512)   f32,  (1, 512) f32
    w4_ref, b4_ref,   # (512, 784) bf16, (1, 784) f32
    eps_ref,          # (TB, 2) f32 standard-normal noise (streamed)
    recon_ref,        # (TB, 784) bf16 out (streamed)
    heads_ref,        # (TB, 4)   f32 out: [mu | logvar]
):
    bf16 = jnp.bfloat16

    # ---- encoder: Linear(784,256) -> ReLU -> Linear(256,512) -> Tanh
    h = jnp.dot(x_ref[...], w1_ref[...],
                preferred_element_type=jnp.float32) + b1_ref[...]
    h = jnp.maximum(h, 0.0)
    h1 = jnp.dot(h.astype(bf16), w2_ref[...],
                 preferred_element_type=jnp.float32) + b2_ref[...]
    h1 = jnp.tanh(h1)

    # ---- fused mu / logvar heads: one (512, 4) matmul, then static slices
    heads = jnp.dot(h1.astype(bf16), wh_ref[...],
                    preferred_element_type=jnp.float32) + bh_ref[...]
    mu = heads[:, 0:2]
    logvar = heads[:, 2:4]

    # ---- reparametrize: z = eps * exp(0.5 * logvar) + mu   (f32, EUP exp)
    std = jnp.exp(0.5 * logvar)
    z = eps_ref[...] * std + mu

    # ---- decoder: Linear(2,512) on the MXU (K=2 pass; MXU is otherwise idle,
    # so this is free and avoids lane-broadcast VPU/XLU work) -> ReLU
    d = jnp.dot(z, w3_ref[...], preferred_element_type=jnp.float32) + b3_ref[...]
    d = jnp.maximum(d, 0.0)

    # ---- decoder: Linear(512,784) -> Tanh, stored as bf16
    recon = jnp.dot(d.astype(bf16), w4_ref[...],
                    preferred_element_type=jnp.float32) + b4_ref[...]
    recon_ref[...] = jnp.tanh(recon).astype(recon_ref.dtype)

    heads_ref[...] = heads


def prepare_params(params):
    """Cast large matmul weights to bf16 and fuse the mu/logvar heads."""
    w1, b1, w2, b2, w21, b21, w22, b22, w3, b3, w4, b4 = params
    bf16 = jnp.bfloat16
    wh = jnp.concatenate([w21, w22], axis=1).astype(bf16)   # (512, 4)
    bh = jnp.concatenate([b21, b22], axis=1)                 # (1, 4), f32
    return [
        w1.astype(bf16), b1,
        w2.astype(bf16), b2,
        wh, bh,
        w3, b3,                # K=2 layer kept f32 (single cheap MXU pass)
        w4.astype(bf16), b4,
    ]


def _pick_tb(B):
    """Largest batch tile in {512,256,128} giving >=2 (ideally even) grid steps,
    so both v7x TensorCores get work and v6e/v5e amortize per-step overhead."""
    for tb in (512, 256, 128):
        n = -(-B // tb)
        if n >= 2 and n % 2 == 0:
            return tb
    for tb in (512, 256, 128):
        if -(-B // tb) >= 2:
            return tb
    return 128


def vae_forward(x, params, eps, *, tb=None):
    """Batch-gridded, weight-stationary VAE forward with bf16 streaming I/O."""
    B = x.shape[0]
    if tb is None:
        tb = _pick_tb(B)
    kparams = prepare_params(params)

    x = x.astype(jnp.bfloat16)        # cast once in wrapper: halves HBM stream
    eps = eps.astype(jnp.float32)

    n_tiles = pl.cdiv(B, tb)
    Bp = n_tiles * tb
    if Bp != B:                       # pad batch to a multiple of the tile
        x = jnp.pad(x, ((0, Bp - B), (0, 0)))
        eps = jnp.pad(eps, ((0, Bp - B), (0, 0)))

    def row_spec(cols):               # activation tiles: streamed per grid step
        return pl.BlockSpec((tb, cols), lambda i: (i, 0))

    def const_spec(shape):            # weights/biases: resident across steps
        return pl.BlockSpec(shape, lambda i: (0, 0))

    in_specs = [row_spec(784)]
    in_specs += [const_spec(p.shape) for p in kparams]
    in_specs += [row_spec(2)]

    recon, heads = pl.pallas_call(
        vae_kernel,
        grid=(n_tiles,),
        out_shape=(
            jax.ShapeDtypeStruct((Bp, 784), jnp.bfloat16),
            jax.ShapeDtypeStruct((Bp, 4), jnp.float32),
        ),
        in_specs=in_specs,
        out_specs=(row_spec(784), row_spec(4)),
        compiler_params=pltpu.CompilerParams(
            dimension_semantics=("parallel",),   # batch tiles are independent
            vmem_limit_bytes=32 << 20,           # working set is only a few MiB
        ),
    )(x, *kparams, eps)

    mu = heads[:B, 0:2]
    logvar = heads[:B, 2:4]
    return recon[:B], mu, logvar


def init_params(key):
    """Deterministic init matching nn.Linear shapes (stored as [in, out])."""
    dims = [
        (784, 256),  # fc1[0]
        (256, 512),  # fc1[2]
        (512, 2),    # fc21
        (512, 2),    # fc22
        (2, 512),    # fc3[0]
        (512, 784),  # fc3[2]
    ]
    params = []
    for (fan_in, fan_out) in dims:
        key, kw, kb = jax.random.split(key, 3)
        bound = 1.0 / np.sqrt(fan_in)
        w = jax.random.uniform(kw, (fan_in, fan_out), jnp.float32, -bound, bound)
        b = jax.random.uniform(kb, (1, fan_out), jnp.float32, -bound, bound)
        params.extend([w, b])
    return params


def vae_reference(x, params, eps):
    """Plain-JAX reference mirroring the kernel's precision policy
    (bf16 matmul operands, f32 accumulation, f32 transcendentals).
    NOTE: versus the all-f32 PyTorch module, the bf16 operands are a
    documented precision choice of this kernel."""
    w1, b1, w2, b2, w21, b21, w22, b22, w3, b3, w4, b4 = params
    bf16 = jnp.bfloat16

    def mm(a, w):
        return jnp.dot(a.astype(bf16), w.astype(bf16),
                       preferred_element_type=jnp.float32)

    h = jnp.maximum(mm(x, w1) + b1, 0.0)
    h1 = jnp.tanh(mm(h, w2) + b2)
    mu = mm(h1, w21) + b21
    logvar = mm(h1, w22) + b22
    z = eps * jnp.exp(0.5 * logvar) + mu
    d = jnp.maximum(z @ w3 + b3, 0.0)          # K=2 layer in f32 (as in kernel)
    recon = jnp.tanh(mm(d, w4) + b4)
    return recon, mu, logvar


if __name__ == "__main__":
    key = jax.random.PRNGKey(0)
    key, kx, keps, kp = jax.random.split(key, 4)

    B = 256                                                   # 2 batch tiles of 128
    x = jax.random.uniform(kx, (B, 784), jnp.float32)         # flattened 28x28 images
    eps = jax.random.normal(keps, (B, 2), jnp.float32)        # reparametrization noise
    params = init_params(kp)

    recon, mu, logvar = jax.block_until_ready(vae_forward(x, params, eps))

    r_recon, r_mu, r_logvar = vae_reference(x, params, eps)
    assert recon.shape == (B, 784) and mu.shape == (B, 2) and logvar.shape == (B, 2)
    # recon is bf16 (streaming-I/O choice) -> slightly looser tolerance.
    np.testing.assert_allclose(np.asarray(recon, dtype=np.float32),
                               np.asarray(r_recon), atol=1e-2, rtol=1e-2)
    np.testing.assert_allclose(np.asarray(mu), np.asarray(r_mu), atol=5e-3, rtol=5e-3)
    np.testing.assert_allclose(np.asarray(logvar), np.asarray(r_logvar), atol=5e-3, rtol=5e-3)

    print("KERNEL_OK")
</pallas_src>

<mosaic_0001>
module attributes {stable_mosaic.version = 11 : i64} {
  func.func @vae_kernel(%arg0: i32, %arg1: memref<128x784xbf16, #tpu.memory_space<vmem>>, %arg2: memref<784x256xbf16, #tpu.memory_space<vmem>>, %arg3: memref<1x256xf32, #tpu.memory_space<vmem>>, %arg4: memref<256x512xbf16, #tpu.memory_space<vmem>>, %arg5: memref<1x512xf32, #tpu.memory_space<vmem>>, %arg6: memref<512x4xbf16, #tpu.memory_space<vmem>>, %arg7: memref<1x4xf32, #tpu.memory_space<vmem>>, %arg8: memref<2x512xf32, #tpu.memory_space<vmem>>, %arg9: memref<1x512xf32, #tpu.memory_space<vmem>>, %arg10: memref<512x784xbf16, #tpu.memory_space<vmem>>, %arg11: memref<1x784xf32, #tpu.memory_space<vmem>>, %arg12: memref<128x2xf32, #tpu.memory_space<vmem>>, %arg13: memref<128x784xbf16, #tpu.memory_space<vmem>>, %arg14: memref<128x4xf32, #tpu.memory_space<vmem>>) attributes {dimension_semantics = [#tpu.dimension_semantics<parallel>], iteration_bounds = array<i64: 2>, scalar_prefetch = 0 : i64, scratch_operands = 0 : i64, tpu.core_type = #tpu.core_type<tc>, window_params = [{transform_indices = @transform_0, window_bounds = array<i64: 128, 784>}, {pipeline_mode = #tpu.pipeline_mode<synchronous>, transform_indices = @transform_1, window_bounds = array<i64: 784, 256>}, {pipeline_mode = #tpu.pipeline_mode<synchronous>, transform_indices = @transform_2, window_bounds = array<i64: 1, 256>}, {pipeline_mode = #tpu.pipeline_mode<synchronous>, transform_indices = @transform_3, window_bounds = array<i64: 256, 512>}, {pipeline_mode = #tpu.pipeline_mode<synchronous>, transform_indices = @transform_4, window_bounds = array<i64: 1, 512>}, {pipeline_mode = #tpu.pipeline_mode<synchronous>, transform_indices = @transform_5, window_bounds = array<i64: 512, 4>}, {pipeline_mode = #tpu.pipeline_mode<synchronous>, transform_indices = @transform_6, window_bounds = array<i64: 1, 4>}, {pipeline_mode = #tpu.pipeline_mode<synchronous>, transform_indices = @transform_7, window_bounds = array<i64: 2, 512>}, {pipeline_mode = #tpu.pipeline_mode<synchronous>, transform_indices = @transform_8, window_bounds = array<i64: 1, 512>}, {pipeline_mode = #tpu.pipeline_mode<synchronous>, transform_indices = @transform_9, window_bounds = array<i64: 512, 784>}, {pipeline_mode = #tpu.pipeline_mode<synchronous>, transform_indices = @transform_10, window_bounds = array<i64: 1, 784>}, {transform_indices = @transform_11, window_bounds = array<i64: 128, 2>}, {transform_indices = @transform_12, window_bounds = array<i64: 128, 784>}, {transform_indices = @transform_13, window_bounds = array<i64: 128, 4>}]} {
    %c0 = arith.constant 0 : index
    %c0_0 = arith.constant 0 : index
    %0 = vector.load %arg1[%c0, %c0_0] : memref<128x784xbf16, #tpu.memory_space<vmem>>, vector<128x784xbf16>
    %c0_1 = arith.constant 0 : index
    %c0_2 = arith.constant 0 : index
    %1 = vector.load %arg2[%c0_1, %c0_2] : memref<784x256xbf16, #tpu.memory_space<vmem>>, vector<784x256xbf16>
    %cst = arith.constant dense<0.000000e+00> : vector<128x256xf32>
    %2 = tpu.matmul %0, %1, %cst {dimension_numbers = #tpu.dot_dimension_numbers<[1], [0], [0], [1], [0, 0, 1, 1], [], []>} : vector<128x784xbf16>, vector<784x256xbf16>, vector<128x256xf32> -> vector<128x256xf32>
    %c0_3 = arith.constant 0 : index
    %c0_4 = arith.constant 0 : index
    %3 = vector.load %arg3[%c0_3, %c0_4] : memref<1x256xf32, #tpu.memory_space<vmem>>, vector<1x256xf32>
    %4 = vector.broadcast %3 : vector<1x256xf32> to vector<128x256xf32>
    %5 = arith.addf %2, %4 : vector<128x256xf32>
    %cst_5 = arith.constant 0.000000e+00 : f32
    %6 = vector.broadcast %cst_5 : f32 to vector<128x256xf32>
    %7 = arith.maximumf %5, %6 : vector<128x256xf32>
    %8 = arith.truncf %7 : vector<128x256xf32> to vector<128x256xbf16>
    %c0_6 = arith.constant 0 : index
    %c0_7 = arith.constant 0 : index
    %9 = vector.load %arg4[%c0_6, %c0_7] : memref<256x512xbf16, #tpu.memory_space<vmem>>, vector<256x512xbf16>
    %cst_8 = arith.constant dense<0.000000e+00> : vector<128x512xf32>
    %10 = tpu.matmul %8, %9, %cst_8 {dimension_numbers = #tpu.dot_dimension_numbers<[1], [0], [0], [1], [0, 0, 1, 1], [], []>} : vector<128x256xbf16>, vector<256x512xbf16>, vector<128x512xf32> -> vector<128x512xf32>
    %c0_9 = arith.constant 0 : index
    %c0_10 = arith.constant 0 : index
    %11 = vector.load %arg5[%c0_9, %c0_10] : memref<1x512xf32, #tpu.memory_space<vmem>>, vector<1x512xf32>
    %12 = vector.broadcast %11 : vector<1x512xf32> to vector<128x512xf32>
    %13 = arith.addf %10, %12 : vector<128x512xf32>
    %14 = math.tanh %13 : vector<128x512xf32>
    %15 = arith.truncf %14 : vector<128x512xf32> to vector<128x512xbf16>
    %c0_11 = arith.constant 0 : index
    %c0_12 = arith.constant 0 : index
    %16 = vector.load %arg6[%c0_11, %c0_12] : memref<512x4xbf16, #tpu.memory_space<vmem>>, vector<512x4xbf16>
    %cst_13 = arith.constant dense<0.000000e+00> : vector<128x4xf32>
    %17 = tpu.matmul %15, %16, %cst_13 {dimension_numbers = #tpu.dot_dimension_numbers<[1], [0], [0], [1], [0, 0, 1, 1], [], []>} : vector<128x512xbf16>, vector<512x4xbf16>, vector<128x4xf32> -> vector<128x4xf32>
    %c0_14 = arith.constant 0 : index
    %c0_15 = arith.constant 0 : index
    %18 = vector.load %arg7[%c0_14, %c0_15] : memref<1x4xf32, #tpu.memory_space<vmem>>, vector<1x4xf32>
    %19 = vector.broadcast %18 : vector<1x4xf32> to vector<128x4xf32>
    %20 = arith.addf %17, %19 : vector<128x4xf32>
    %21 = vector.extract_strided_slice %20 {offsets = [0, 0], sizes = [128, 2], strides = [1, 1]} : vector<128x4xf32> to vector<128x2xf32>
    %22 = vector.extract_strided_slice %20 {offsets = [0, 2], sizes = [128, 2], strides = [1, 1]} : vector<128x4xf32> to vector<128x2xf32>
    %cst_16 = arith.constant 5.000000e-01 : f32
    %23 = vector.broadcast %cst_16 : f32 to vector<128x2xf32>
    %24 = arith.mulf %23, %22 : vector<128x2xf32>
    %25 = math.exp %24 : vector<128x2xf32>
    %c0_17 = arith.constant 0 : index
    %c0_18 = arith.constant 0 : index
    %26 = vector.load %arg12[%c0_17, %c0_18] : memref<128x2xf32, #tpu.memory_space<vmem>>, vector<128x2xf32>
    %27 = arith.mulf %26, %25 : vector<128x2xf32>
    %28 = arith.addf %27, %21 : vector<128x2xf32>
    %c0_19 = arith.constant 0 : index
    %c0_20 = arith.constant 0 : index
    %29 = vector.load %arg8[%c0_19, %c0_20] : memref<2x512xf32, #tpu.memory_space<vmem>>, vector<2x512xf32>
    %cst_21 = arith.constant dense<0.000000e+00> : vector<128x512xf32>
    %30 = tpu.matmul %28, %29, %cst_21 {dimension_numbers = #tpu.dot_dimension_numbers<[1], [0], [0], [1], [0, 0, 1, 1], [], []>} : vector<128x2xf32>, vector<2x512xf32>, vector<128x512xf32> -> vector<128x512xf32>
    %c0_22 = arith.constant 0 : index
    %c0_23 = arith.constant 0 : index
    %31 = vector.load %arg9[%c0_22, %c0_23] : memref<1x512xf32, #tpu.memory_space<vmem>>, vector<1x512xf32>
    %32 = vector.broadcast %31 : vector<1x512xf32> to vector<128x512xf32>
    %33 = arith.addf %30, %32 : vector<128x512xf32>
    %cst_24 = arith.constant 0.000000e+00 : f32
    %34 = vector.broadcast %cst_24 : f32 to vector<128x512xf32>
    %35 = arith.maximumf %33, %34 : vector<128x512xf32>
    %36 = arith.truncf %35 : vector<128x512xf32> to vector<128x512xbf16>
    %c0_25 = arith.constant 0 : index
    %c0_26 = arith.constant 0 : index
    %37 = vector.load %arg10[%c0_25, %c0_26] : memref<512x784xbf16, #tpu.memory_space<vmem>>, vector<512x784xbf16>
    %cst_27 = arith.constant dense<0.000000e+00> : vector<128x784xf32>
    %38 = tpu.matmul %36, %37, %cst_27 {dimension_numbers = #tpu.dot_dimension_numbers<[1], [0], [0], [1], [0, 0, 1, 1], [], []>} : vector<128x512xbf16>, vector<512x784xbf16>, vector<128x784xf32> -> vector<128x784xf32>
    %c0_28 = arith.constant 0 : index
    %c0_29 = arith.constant 0 : index
    %39 = vector.load %arg11[%c0_28, %c0_29] : memref<1x784xf32, #tpu.memory_space<vmem>>, vector<1x784xf32>
    %40 = vector.broadcast %39 : vector<1x784xf32> to vector<128x784xf32>
    %41 = arith.addf %38, %40 : vector<128x784xf32>
    %42 = math.tanh %41 : vector<128x784xf32>
    %43 = arith.truncf %42 : vector<128x784xf32> to vector<128x784xbf16>
    %c0_30 = arith.constant 0 : index
    %c0_31 = arith.constant 0 : index
    %44 = vector.load %arg13[%c0_30, %c0_31] : memref<128x784xbf16, #tpu.memory_space<vmem>>, vector<128x784xbf16>
    tpu.vector_store %arg13[%c0_30, %c0_31], %43 {strides = array<i32>} : memref<128x784xbf16, #tpu.memory_space<vmem>>, vector<128x784xbf16>,
    %c0_32 = arith.constant 0 : index
    %c0_33 = arith.constant 0 : index
    %45 = vector.load %arg14[%c0_32, %c0_33] : memref<128x4xf32, #tpu.memory_space<vmem>>, vector<128x4xf32>
    tpu.vector_store %arg14[%c0_32, %c0_33], %20 {strides = array<i32>} : memref<128x4xf32, #tpu.memory_space<vmem>>, vector<128x4xf32>,
    return
  }
  func.func @transform_0(%arg0: i32) -> (i32, i32) {
    %c0_i32 = arith.constant 0 : i32
    %c0_i32_0 = arith.constant 0 : i32
    return %arg0, %c0_i32 : i32, i32
  }
  func.func @transform_1(%arg0: i32) -> (i32, i32) {
    %c0_i32 = arith.constant 0 : i32
    %c0_i32_0 = arith.constant 0 : i32
    %c0_i32_1 = arith.constant 0 : i32
    return %c0_i32, %c0_i32_0 : i32, i32
  }
  func.func @transform_2(%arg0: i32) -> (i32, i32) {
    %c0_i32 = arith.constant 0 : i32
    %c0_i32_0 = arith.constant 0 : i32
    %c0_i32_1 = arith.constant 0 : i32
    return %c0_i32, %c0_i32_0 : i32, i32
  }
  func.func @transform_3(%arg0: i32) -> (i32, i32) {
    %c0_i32 = arith.constant 0 : i32
    %c0_i32_0 = arith.constant 0 : i32
    %c0_i32_1 = arith.constant 0 : i32
    return %c0_i32, %c0_i32_0 : i32, i32
  }
  func.func @transform_4(%arg0: i32) -> (i32, i32) {
    %c0_i32 = arith.constant 0 : i32
    %c0_i32_0 = arith.constant 0 : i32
    %c0_i32_1 = arith.constant 0 : i32
    return %c0_i32, %c0_i32_0 : i32, i32
  }
  func.func @transform_5(%arg0: i32) -> (i32, i32) {
    %c0_i32 = arith.constant 0 : i32
    %c0_i32_0 = arith.constant 0 : i32
    %c0_i32_1 = arith.constant 0 : i32
    return %c0_i32, %c0_i32_0 : i32, i32
  }
  func.func @transform_6(%arg0: i32) -> (i32, i32) {
    %c0_i32 = arith.constant 0 : i32
    %c0_i32_0 = arith.constant 0 : i32
    %c0_i32_1 = arith.constant 0 : i32
    return %c0_i32, %c0_i32_0 : i32, i32
  }
  func.func @transform_7(%arg0: i32) -> (i32, i32) {
    %c0_i32 = arith.constant 0 : i32
    %c0_i32_0 = arith.constant 0 : i32
    %c0_i32_1 = arith.constant 0 : i32
    return %c0_i32, %c0_i32_0 : i32, i32
  }
  func.func @transform_8(%arg0: i32) -> (i32, i32) {
    %c0_i32 = arith.constant 0 : i32
    %c0_i32_0 = arith.constant 0 : i32
    %c0_i32_1 = arith.constant 0 : i32
    return %c0_i32, %c0_i32_0 : i32, i32
  }
  func.func @transform_9(%arg0: i32) -> (i32, i32) {
    %c0_i32 = arith.constant 0 : i32
    %c0_i32_0 = arith.constant 0 : i32
    %c0_i32_1 = arith.constant 0 : i32
    return %c0_i32, %c0_i32_0 : i32, i32
  }
  func.func @transform_10(%arg0: i32) -> (i32, i32) {
    %c0_i32 = arith.constant 0 : i32
    %c0_i32_0 = arith.constant 0 : i32
    %c0_i32_1 = arith.constant 0 : i32
    return %c0_i32, %c0_i32_0 : i32, i32
  }
  func.func @transform_11(%arg0: i32) -> (i32, i32) {
    %c0_i32 = arith.constant 0 : i32
    %c0_i32_0 = arith.constant 0 : i32
    return %arg0, %c0_i32 : i32, i32
  }
  func.func @transform_12(%arg0: i32) -> (i32, i32) {
    %c0_i32 = arith.constant 0 : i32
    %c0_i32_0 = arith.constant 0 : i32
    return %arg0, %c0_i32 : i32, i32
  }
  func.func @transform_13(%arg0: i32) -> (i32, i32) {
    %c0_i32 = arith.constant 0 : i32
    %c0_i32_0 = arith.constant 0 : i32
    return %arg0, %c0_i32 : i32, i32
  }
}

</mosaic_0001>

<llo_original>
// kernel: tpu_custom_call.1
$region0: #{tpu_custom_call.1}
  #allocation0 [shape = 'u32[]', space=smem, size = 0x4, offset = 0x4, fixed_abs, tag = 'smem constant byte address 0x4 - core index']
  #allocation1 [shape = 'u32[144,128]{1,0:T(1,128)}', space=vmem, size = 0x12000, scoped, tag = 'internal scratch']
  %s0 = inlined_call_operand.vmem [shape: bf16[256,784], index: 0, kind: input, shape index: {}]
  %s1 = inlined_call_operand.vmem [shape: bf16[784,256], index: 1, kind: input, shape index: {}]
  %s2 = inlined_call_operand.vmem [shape: f32[1,256], index: 2, kind: input, shape index: {}]
  %s3 = inlined_call_operand.vmem [shape: bf16[256,512], index: 3, kind: input, shape index: {}]
  %s4 = inlined_call_operand.vmem [shape: f32[1,512], index: 4, kind: input, shape index: {}]
  %s5 = inlined_call_operand.vmem [shape: bf16[512,4], index: 5, kind: input, shape index: {}]
  %s6 = inlined_call_operand.vmem [shape: f32[1,4], index: 6, kind: input, shape index: {}]
  %s7 = inlined_call_operand.vmem [shape: f32[2,512], index: 7, kind: input, shape index: {}]
  %s8 = inlined_call_operand.vmem [shape: f32[1,512], index: 8, kind: input, shape index: {}]
  %s9 = inlined_call_operand.vmem [shape: bf16[512,784], index: 9, kind: input, shape index: {}]
  %s10 = inlined_call_operand.vmem [shape: f32[1,784], index: 10, kind: input, shape index: {}]
  %s11 = inlined_call_operand.vmem [shape: f32[256,2], index: 11, kind: input, shape index: {}]
  %s12 = inlined_call_operand.vmem [shape: bf16[256,784], index: 12, kind: output, shape index: {0}]
  %s13 = inlined_call_operand.vmem [shape: f32[256,4], index: 13, kind: output, shape index: {1}]
  %14 = xla_tuple %s12, %s13
  %s15 = sld [smem:[#allocation0]]
  $region89: #{tpu_custom_call.1} parent=0
    _
  %s17 = ssub.s32 1, %s15
  %s18 = scalar_select 0, %s17, %s15
  loop: start=0, step=1, limit=4
  $region2: #{tpu_custom_call.1} parent=0 // loop_pre_header
    _
  $region3: #{tpu_custom_call.1} parent=0 // loop_header
    %s20 = sphi 0, %s24
    %p21 = scmp.ge.s32.totalorder %s20, 4
    %s30 = sphi 0, %s32
    %s33 = sphi 0, %s30
    %s34 = sphi 0, %s33
    %s50 = sphi 0, %s34
    %s54 = sphi 0, %s54
    %s56 = sphi 0, %s54
    %s57 = sphi 0, %s56
    %s71 = sphi 0, %s57
    %s75 = sphi 0, %s75
    %s77 = sphi 0, %s75
    %s78 = sphi 0, %s77
    %s92 = sphi 0, %s78
    %s96 = sphi 0, %s96
    %s98 = sphi 0, %s96
    %s99 = sphi 0, %s98
    %s113 = sphi 0, %s99
    %s117 = sphi 0, %s117
    %s119 = sphi 0, %s117
    %s120 = sphi 0, %s119
    %s134 = sphi 0, %s120
    %s138 = sphi 0, %s138
    %s140 = sphi 0, %s138
    %s141 = sphi 0, %s140
    %s155 = sphi 0, %s141
    %s159 = sphi 0, %s159
    %s161 = sphi 0, %s159
    %s162 = sphi 0, %s161
    %s176 = sphi 0, %s162
    %s180 = sphi 0, %s180
    %s182 = sphi 0, %s180
    %s183 = sphi 0, %s182
    %s197 = sphi 0, %s183
    %s201 = sphi 0, %s201
    %s203 = sphi 0, %s201
    %s204 = sphi 0, %s203
    %s218 = sphi 0, %s204
    %s222 = sphi 0, %s222
    %s224 = sphi 0, %s222
    %s225 = sphi 0, %s224
    %s239 = sphi 0, %s225
    %s243 = sphi 0, %s243
    %s245 = sphi 0, %s243
    %s246 = sphi 0, %s245
    %s260 = sphi 0, %s246
    %s266 = sphi 0, %s268
    %s269 = sphi 0, %s266
    %s270 = sphi 0, %s269
    %s286 = sphi 0, %s270
    %s292 = sphi 0, %s294
    %s295 = sphi 0, %s292
    %s296 = sphi 0, %s295
    %s312 = sphi 0, %s296
    %s318 = sphi 0, %s320
    %s321 = sphi 0, %s318
    %s322 = sphi 0, %s321
    %s338 = sphi 0, %s322
  $region4: #{tpu_custom_call.1} parent=0 // loop_header_branch
    %23 = sbr.rel (%p21) target = $region8
  $region5: #{tpu_custom_call.1} parent=0 // loop_body
    %s25 = ssub.s32 %s20, 1
    %s26 = ssub.s32 %s20, 2
    %s27 = sadd.s32 %s20, 1
    %s28 = ssub.s32 %s20, %s27
    %p29 = scmp.eq.s32.totalorder %s28, 0
    %s31 = sadd.s32 %s30, 1
    %s32 = scalar_select %p29, %s30, %s31
    %p35 = pneg %p29
    %p36 = scmp.eq.s32.totalorder %s20, 1
    %p37 = por %p35, %p36
    %p38 = scmp.ne.s32.totalorder %s30, %s33
    %p39 = scmp.eq.s32.totalorder %s20, 0
    %p40 = por %p38, %p39
    %p41 = scmp.ne.s32.totalorder %s30, %s33
    %p42 = scmp.eq.s32.totalorder %s25, 1
    %p43 = por %p41, %p42
    %p44 = scmp.ne.s32.totalorder %s33, %s34
    %p45 = scmp.eq.s32.totalorder %s25, 0
    %p46 = por %p44, %p45
    %p47 = scmp.ne.s32.totalorder %s33, %s34
    %p48 = scmp.eq.s32.totalorder %s26, 1
    %p49 = por %p47, %p48
    %p51 = scmp.ne.s32.totalorder %s34, %s50
    %p52 = scmp.eq.s32.totalorder %s26, 0
    %p53 = por %p51, %p52
    %s55 = sadd.s32 %s54, 1
    %p58 = scmp.eq.s32.totalorder %s20, 1
    %p59 = scmp.ne.s32.totalorder %s54, %s56
    %p60 = scmp.eq.s32.totalorder %s20, 0
    %p61 = por %p59, %p60
    %p62 = scmp.ne.s32.totalorder %s54, %s56
    %p63 = scmp.eq.s32.totalorder %s25, 1
    %p64 = por %p62, %p63
    %p65 = scmp.ne.s32.totalorder %s56, %s57
    %p66 = scmp.eq.s32.totalorder %s25, 0
    %p67 = por %p65, %p66
    %p68 = scmp.ne.s32.totalorder %s56, %s57
    %p69 = scmp.eq.s32.totalorder %s26, 1
    %p70 = por %p68, %p69
    %p72 = scmp.ne.s32.totalorder %s57, %s71
    %p73 = scmp.eq.s32.totalorder %s26, 0
    %p74 = por %p72, %p73
    %s76 = sadd.s32 %s75, 1
    %p79 = scmp.eq.s32.totalorder %s20, 1
    %p80 = scmp.ne.s32.totalorder %s75, %s77
    %p81 = scmp.eq.s32.totalorder %s20, 0
    %p82 = por %p80, %p81
    %p83 = scmp.ne.s32.totalorder %s75, %s77
    %p84 = scmp.eq.s32.totalorder %s25, 1
    %p85 = por %p83, %p84
    %p86 = scmp.ne.s32.totalorder %s77, %s78
    %p87 = scmp.eq.s32.totalorder %s25, 0
    %p88 = por %p86, %p87
    %p89 = scmp.ne.s32.totalorder %s77, %s78
    %p90 = scmp.eq.s32.totalorder %s26, 1
    %p91 = por %p89, %p90
    %p93 = scmp.ne.s32.totalorder %s78, %s92
    %p94 = scmp.eq.s32.totalorder %s26, 0
    %p95 = por %p93, %p94
    %s97 = sadd.s32 %s96, 1
    %p100 = scmp.eq.s32.totalorder %s20, 1
    %p101 = scmp.ne.s32.totalorder %s96, %s98
    %p102 = scmp.eq.s32.totalorder %s20, 0
    %p103 = por %p101, %p102
    %p104 = scmp.ne.s32.totalorder %s96, %s98
    %p105 = scmp.eq.s32.totalorder %s25, 1
    %p106 = por %p104, %p105
    %p107 = scmp.ne.s32.totalorder %s98, %s99
    %p108 = scmp.eq.s32.totalorder %s25, 0
    %p109 = por %p107, %p108
    %p110 = scmp.ne.s32.totalorder %s98, %s99
    %p111 = scmp.eq.s32.totalorder %s26, 1
    %p112 = por %p110, %p111
    %p114 = scmp.ne.s32.totalorder %s99, %s113
    %p115 = scmp.eq.s32.totalorder %s26, 0
    %p116 = por %p114, %p115
    %s118 = sadd.s32 %s117, 1
    %p121 = scmp.eq.s32.totalorder %s20, 1
    %p122 = scmp.ne.s32.totalorder %s117, %s119
    %p123 = scmp.eq.s32.totalorder %s20, 0
    %p124 = por %p122, %p123
    %p125 = scmp.ne.s32.totalorder %s117, %s119
    %p126 = scmp.eq.s32.totalorder %s25, 1
    %p127 = por %p125, %p126
    %p128 = scmp.ne.s32.totalorder %s119, %s120
    %p129 = scmp.eq.s32.totalorder %s25, 0
    %p130 = por %p128, %p129
    %p131 = scmp.ne.s32.totalorder %s119, %s120
    %p132 = scmp.eq.s32.totalorder %s26, 1
    %p133 = por %p131, %p132
    %p135 = scmp.ne.s32.totalorder %s120, %s134
    %p136 = scmp.eq.s32.totalorder %s26, 0
    %p137 = por %p135, %p136
    %s139 = sadd.s32 %s138, 1
    %p142 = scmp.eq.s32.totalorder %s20, 1
    %p143 = scmp.ne.s32.totalorder %s138, %s140
    %p144 = scmp.eq.s32.totalorder %s20, 0
    %p145 = por %p143, %p144
    %p146 = scmp.ne.s32.totalorder %s138, %s140
    %p147 = scmp.eq.s32.totalorder %s25, 1
    %p148 = por %p146, %p147
    %p149 = scmp.ne.s32.totalorder %s140, %s141
    %p150 = scmp.eq.s32.totalorder %s25, 0
    %p151 = por %p149, %p150
    %p152 = scmp.ne.s32.totalorder %s140, %s141
    %p153 = scmp.eq.s32.totalorder %s26, 1
    %p154 = por %p152, %p153
    %p156 = scmp.ne.s32.totalorder %s141, %s155
    %p157 = scmp.eq.s32.totalorder %s26, 0
    %p158 = por %p156, %p157
    %s160 = sadd.s32 %s159, 1
    %p163 = scmp.eq.s32.totalorder %s20, 1
    %p164 = scmp.ne.s32.totalorder %s159, %s161
    %p165 = scmp.eq.s32.totalorder %s20, 0
    %p166 = por %p164, %p165
    %p167 = scmp.ne.s32.totalorder %s159, %s161
    %p168 = scmp.eq.s32.totalorder %s25, 1
    %p169 = por %p167, %p168
    %p170 = scmp.ne.s32.totalorder %s161, %s162
    %p171 = scmp.eq.s32.totalorder %s25, 0
    %p172 = por %p170, %p171
    %p173 = scmp.ne.s32.totalorder %s161, %s162
    %p174 = scmp.eq.s32.totalorder %s26, 1
    %p175 = por %p173, %p174
    %p177 = scmp.ne.s32.totalorder %s162, %s176
    %p178 = scmp.eq.s32.totalorder %s26, 0
    %p179 = por %p177, %p178
    %s181 = sadd.s32 %s180, 1
    %p184 = scmp.eq.s32.totalorder %s20, 1
    %p185 = scmp.ne.s32.totalorder %s180, %s182
    %p186 = scmp.eq.s32.totalorder %s20, 0
    %p187 = por %p185, %p186
    %p188 = scmp.ne.s32.totalorder %s180, %s182
    %p189 = scmp.eq.s32.totalorder %s25, 1
    %p190 = por %p188, %p189
    %p191 = scmp.ne.s32.totalorder %s182, %s183
    %p192 = scmp.eq.s32.totalorder %s25, 0
    %p193 = por %p191, %p192
    %p194 = scmp.ne.s32.totalorder %s182, %s183
    %p195 = scmp.eq.s32.totalorder %s26, 1
    %p196 = por %p194, %p195
    %p198 = scmp.ne.s32.totalorder %s183, %s197
    %p199 = scmp.eq.s32.totalorder %s26, 0
    %p200 = por %p198, %p199
    %s202 = sadd.s32 %s201, 1
    %p205 = scmp.eq.s32.totalorder %s20, 1
    %p206 = scmp.ne.s32.totalorder %s201, %s203
    %p207 = scmp.eq.s32.totalorder %s20, 0
    %p208 = por %p206, %p207
    %p209 = scmp.ne.s32.totalorder %s201, %s203
    %p210 = scmp.eq.s32.totalorder %s25, 1
    %p211 = por %p209, %p210
    %p212 = scmp.ne.s32.totalorder %s203, %s204
    %p213 = scmp.eq.s32.totalorder %s25, 0
    %p214 = por %p212, %p213
    %p215 = scmp.ne.s32.totalorder %s203, %s204
    %p216 = scmp.eq.s32.totalorder %s26, 1
    %p217 = por %p215, %p216
    %p219 = scmp.ne.s32.totalorder %s204, %s218
    %p220 = scmp.eq.s32.totalorder %s26, 0
    %p221 = por %p219, %p220
    %s223 = sadd.s32 %s222, 1
    %p226 = scmp.eq.s32.totalorder %s20, 1
    %p227 = scmp.ne.s32.totalorder %s222, %s224
    %p228 = scmp.eq.s32.totalorder %s20, 0
    %p229 = por %p227, %p228
    %p230 = scmp.ne.s32.totalorder %s222, %s224
    %p231 = scmp.eq.s32.totalorder %s25, 1
    %p232 = por %p230, %p231
    %p233 = scmp.ne.s32.totalorder %s224, %s225
    %p234 = scmp.eq.s32.totalorder %s25, 0
    %p235 = por %p233, %p234
    %p236 = scmp.ne.s32.totalorder %s224, %s225
    %p237 = scmp.eq.s32.totalorder %s26, 1
    %p238 = por %p236, %p237
    %p240 = scmp.ne.s32.totalorder %s225, %s239
    %p241 = scmp.eq.s32.totalorder %s26, 0
    %p242 = por %p240, %p241
    %s244 = sadd.s32 %s243, 1
    %p247 = scmp.eq.s32.totalorder %s20, 1
    %p248 = scmp.ne.s32.totalorder %s243, %s245
    %p249 = scmp.eq.s32.totalorder %s20, 0
    %p250 = por %p248, %p249
    %p251 = scmp.ne.s32.totalorder %s243, %s245
    %p252 = scmp.eq.s32.totalorder %s25, 1
    %p253 = por %p251, %p252
    %p254 = scmp.ne.s32.totalorder %s245, %s246
    %p255 = scmp.eq.s32.totalorder %s25, 0
    %p256 = por %p254, %p255
    %p257 = scmp.ne.s32.totalorder %s245, %s246
    %p258 = scmp.eq.s32.totalorder %s26, 1
    %p259 = por %p257, %p258
    %p261 = scmp.ne.s32.totalorder %s246, %s260
    %p262 = scmp.eq.s32.totalorder %s26, 0
    %p263 = por %p261, %p262
    %s264 = ssub.s32 %s20, %s27
    %p265 = scmp.eq.s32.totalorder %s264, 0
    %s267 = sadd.s32 %s266, 1
    %s268 = scalar_select %p265, %s266, %s267
    %p271 = pneg %p265
    %p272 = scmp.eq.s32.totalorder %s20, 1
    %p273 = por %p271, %p272
    %p274 = scmp.ne.s32.totalorder %s266, %s269
    %p275 = scmp.eq.s32.totalorder %s20, 0
    %p276 = por %p274, %p275
    %p277 = scmp.ne.s32.totalorder %s266, %s269
    %p278 = scmp.eq.s32.totalorder %s25, 1
    %p279 = por %p277, %p278
    %p280 = scmp.ne.s32.totalorder %s269, %s270
    %p281 = scmp.eq.s32.totalorder %s25, 0
    %p282 = por %p280, %p281
    %p283 = scmp.ne.s32.totalorder %s269, %s270
    %p284 = scmp.eq.s32.totalorder %s26, 1
    %p285 = por %p283, %p284
    %p287 = scmp.ne.s32.totalorder %s270, %s286
    %p288 = scmp.eq.s32.totalorder %s26, 0
    %p289 = por %p287, %p288
    %s290 = ssub.s32 %s20, %s27
    %p291 = scmp.eq.s32.totalorder %s290, 0
    %s293 = sadd.s32 %s292, 1
    %s294 = scalar_select %p291, %s292, %s293
    %p297 = pneg %p291
    %p298 = scmp.eq.s32.totalorder %s20, 1
    %p299 = por %p297, %p298
    %p300 = scmp.ne.s32.totalorder %s292, %s295
    %p301 = scmp.eq.s32.totalorder %s20, 0
    %p302 = por %p300, %p301
    %p303 = scmp.ne.s32.totalorder %s292, %s295
    %p304 = scmp.eq.s32.totalorder %s25, 1
    %p305 = por %p303, %p304
    %p306 = scmp.ne.s32.totalorder %s295, %s296
    %p307 = scmp.eq.s32.totalorder %s25, 0
    %p308 = por %p306, %p307
    %p309 = scmp.ne.s32.totalorder %s295, %s296
    %p310 = scmp.eq.s32.totalorder %s26, 1
    %p311 = por %p309, %p310
    %p313 = scmp.ne.s32.totalorder %s296, %s312
    %p314 = scmp.eq.s32.totalorder %s26, 0
    %p315 = por %p313, %p314
    %s316 = ssub.s32 %s20, %s27
    %p317 = scmp.eq.s32.totalorder %s316, 0
    %s319 = sadd.s32 %s318, 1
    %s320 = scalar_select %p317, %s318, %s319
    %p323 = pneg %p317
    %p324 = scmp.eq.s32.totalorder %s20, 1
    %p325 = por %p323, %p324
    %p326 = scmp.ne.s32.totalorder %s318, %s321
    %p327 = scmp.eq.s32.totalorder %s20, 0
    %p328 = por %p326, %p327
    %p329 = scmp.ne.s32.totalorder %s318, %s321
    %p330 = scmp.eq.s32.totalorder %s25, 1
    %p331 = por %p329, %p330
    %p332 = scmp.ne.s32.totalorder %s321, %s322
    %p333 = scmp.eq.s32.totalorder %s25, 0
    %p334 = por %p332, %p333
    %p335 = scmp.ne.s32.totalorder %s321, %s322
    %p336 = scmp.eq.s32.totalorder %s26, 1
    %p337 = por %p335, %p336
    %p339 = scmp.ne.s32.totalorder %s322, %s338
    %p340 = scmp.eq.s32.totalorder %s26, 0
    %p341 = por %p339, %p340
    %p342 = scmp.le.s32.totalorder 1, %s20
    %p343 = scmp.lt.s32.totalorder %s20, 3
    %p344 = pnand %p342, %p343
    %p345 = pneg %p344
    // Predicated region
    $region9: #{tpu_custom_call.1} parent=5 // pred_check
      _
    $region10: #{tpu_custom_call.1} parent=5 // pred_check_branch
      %347 = sbr.rel (%p344) target = $region12
    $region11: #{tpu_custom_call.1} parent=5 // pred_region
      %s348 = ssub.s32 %s20, 1
      // Predicated region
      $region13: #{tpu_custom_call.1} parent=11 // pred_check
        %p349 = pneg %p67
      $region14: #{tpu_custom_call.1} parent=11 // pred_check_branch
        %351 = sbr.rel (%p349) target = $region16
      $region15: #{tpu_custom_call.1} parent=11 // pred_region
        _
      $region16: #{tpu_custom_call.1} parent=11 // pred_fallthru
        _
      // Predicated region
      $region17: #{tpu_custom_call.1} parent=11 // pred_check
        %p352 = pneg %p88
      $region18: #{tpu_custom_call.1} parent=11 // pred_check_branch
        %354 = sbr.rel (%p352) target = $region20
      $region19: #{tpu_custom_call.1} parent=11 // pred_region
        _
      $region20: #{tpu_custom_call.1} parent=11 // pred_fallthru
        _
      // Predicated region
      $region21: #{tpu_custom_call.1} parent=11 // pred_check
        %p355 = pneg %p109
      $region22: #{tpu_custom_call.1} parent=11 // pred_check_branch
        %357 = sbr.rel (%p355) target = $region24
      $region23: #{tpu_custom_call.1} parent=11 // pred_region
        _
      $region24: #{tpu_custom_call.1} parent=11 // pred_fallthru
        _
      // Predicated region
      $region25: #{tpu_custom_call.1} parent=11 // pred_check
        %p358 = pneg %p130
      $region26: #{tpu_custom_call.1} parent=11 // pred_check_branch
        %360 = sbr.rel (%p358) target = $region28
      $region27: #{tpu_custom_call.1} parent=11 // pred_region
        _
      $region28: #{tpu_custom_call.1} parent=11 // pred_fallthru
        _
      // Predicated region
      $region29: #{tpu_custom_call.1} parent=11 // pred_check
        %p361 = pneg %p151
      $region30: #{tpu_custom_call.1} parent=11 // pred_check_branch
        %363 = sbr.rel (%p361) target = $region32
      $region31: #{tpu_custom_call.1} parent=11 // pred_region
        _
      $region32: #{tpu_custom_call.1} parent=11 // pred_fallthru
        _
      // Predicated region
      $region33: #{tpu_custom_call.1} parent=11 // pred_check
        %p364 = pneg %p172
      $region34: #{tpu_custom_call.1} parent=11 // pred_check_branch
        %366 = sbr.rel (%p364) target = $region36
      $region35: #{tpu_custom_call.1} parent=11 // pred_region
        _
      $region36: #{tpu_custom_call.1} parent=11 // pred_fallthru
        _
      // Predicated region
      $region37: #{tpu_custom_call.1} parent=11 // pred_check
        %p367 = pneg %p193
      $region38: #{tpu_custom_call.1} parent=11 // pred_check_branch
        %369 = sbr.rel (%p367) target = $region40
      $region39: #{tpu_custom_call.1} parent=11 // pred_region
        _
      $region40: #{tpu_custom_call.1} parent=11 // pred_fallthru
        _
      // Predicated region
      $region41: #{tpu_custom_call.1} parent=11 // pred_check
        %p370 = pneg %p214
      $region42: #{tpu_custom_call.1} parent=11 // pred_check_branch
        %372 = sbr.rel (%p370) target = $region44
      $region43: #{tpu_custom_call.1} parent=11 // pred_region
        _
      $region44: #{tpu_custom_call.1} parent=11 // pred_fallthru
        _
      // Predicated region
      $region45: #{tpu_custom_call.1} parent=11 // pred_check
        %p373 = pneg %p235
      $region46: #{tpu_custom_call.1} parent=11 // pred_check_branch
        %375 = sbr.rel (%p373) target = $region48
      $region47: #{tpu_custom_call.1} parent=11 // pred_region
        _
      $region48: #{tpu_custom_call.1} parent=11 // pred_fallthru
        _
      // Predicated region
      $region49: #{tpu_custom_call.1} parent=11 // pred_check
        %p376 = pneg %p256
      $region50: #{tpu_custom_call.1} parent=11 // pred_check_branch
        %378 = sbr.rel (%p376) target = $region52
      $region51: #{tpu_custom_call.1} parent=11 // pred_region
        _
      $region52: #{tpu_custom_call.1} parent=11 // pred_fallthru
        _
    $region12: #{tpu_custom_call.1} parent=5 // pred_fallthru
      _
    %p379 = scmp.lt.s32.totalorder %s20, 2
    // Predicated region
    $region53: #{tpu_custom_call.1} parent=5 // pred_check
      %p380 = pneg %p379
    $region54: #{tpu_custom_call.1} parent=5 // pred_check_branch
      %382 = sbr.rel (%p380) target = $region56
    $region55: #{tpu_custom_call.1} parent=5 // pred_region
      // Predicated region
      $region57: #{tpu_custom_call.1} parent=55 // pred_check
        %p383 = pneg %p40
      $region58: #{tpu_custom_call.1} parent=55 // pred_check_branch
        %385 = sbr.rel (%p383) target = $region60
      $region59: #{tpu_custom_call.1} parent=55 // pred_region
        %s386 = smul.u32 16, %s20
        %p387 = scmp.lt.s32.totalorder %s386, 31
        %s388 = scalar_select %p387, %s386, 31
        %s389 = smul.addr %s388, 7
        %s390 = smul.addr %s389, 4
        %s391 = scalar_lea.vmem %s0, %s390
        %s392 = smul.u32 16, %s20
      $region60: #{tpu_custom_call.1} parent=55 // pred_fallthru
        _
      // Predicated region
      $region61: #{tpu_custom_call.1} parent=55 // pred_check
        %p393 = pneg %p276
      $region62: #{tpu_custom_call.1} parent=55 // pred_check_branch
        %395 = sbr.rel (%p393) target = $region64
      $region63: #{tpu_custom_call.1} parent=55 // pred_region
        %s396 = smul.u32 16, %s20
        %p397 = scmp.lt.s32.totalorder %s396, 31
        %s398 = scalar_select %p397, %s396, 31
        %s399 = smul.addr %s398, 8
        %s400 = scalar_lea.vmem %s11, %s399
        %s401 = smul.u32 16, %s20
      $region64: #{tpu_custom_call.1} parent=55 // pred_fallthru
        _
    $region56: #{tpu_custom_call.1} parent=5 // pred_fallthru
      _
    %p402 = scmp.le.s32.totalorder 1, %s20
    %p403 = scmp.lt.s32.totalorder %s20, 3
    %p404 = pnand %p402, %p403
    %p405 = pneg %p404
    // Predicated region
    $region65: #{tpu_custom_call.1} parent=5 // pred_check
      _
    $region66: #{tpu_custom_call.1} parent=5 // pred_check_branch
      %407 = sbr.rel (%p404) target = $region68
    $region67: #{tpu_custom_call.1} parent=5 // pred_region
      %s408 = ssub.s32 %s20, 1
      %s409 = smul.u32 16, %s25
      %p410 = scmp.lt.s32.totalorder %s409, 31
      %s411 = scalar_select %p410, %s409, 31
      %s412 = smul.addr %s411, 7
      %s413 = smul.addr %s412, 4
      %s414 = scalar_lea.vmem %s0, %s413
      %p415 = pneg %p46
      %p416 = pneg %p43
      %p417 = pneg %p67
      %p418 = pneg %p64
      %p419 = pneg %p88
      %p420 = pneg %p85
      %p421 = pneg %p109
      %p422 = pneg %p106
      %p423 = pneg %p130
      %p424 = pneg %p127
      %p425 = pneg %p151
      %p426 = pneg %p148
      %p427 = pneg %p172
      %p428 = pneg %p169
      %p429 = pneg %p193
      %p430 = pneg %p190
      %p431 = pneg %p214
      %p432 = pneg %p211
      %p433 = pneg %p235
      %p434 = pneg %p232
      %p435 = pneg %p256
      %p436 = pneg %p253
      %s437 = smul.u32 16, %s25
      %p438 = scmp.lt.s32.totalorder %s437, 31
      %s439 = scalar_select %p438, %s437, 31
      %s440 = smul.addr %s439, 8
      %s441 = scalar_lea.vmem %s11, %s440
      %p442 = pneg %p282
      %p443 = pneg %p279
      %p444 = pneg %p308
      %p445 = pneg %p305
      %s446 = smul.u32 16, %s25
      %p447 = scmp.lt.s32.totalorder %s446, 31
      %s448 = scalar_select %p447, %s446, 31
      %s449 = smul.addr %s448, 7
      %s450 = smul.addr %s449, 4
      %s451 = scalar_lea.vmem %s12, %s450
      %p452 = pneg %p334
      %p453 = pneg %p331
      %s454 = smul.u32 16, %s25
      %p455 = scmp.lt.s32.totalorder %s454, 31
      %s456 = scalar_select %p455, %s454, 31
      %s457 = smul.addr %s456, 8
      %s458 = scalar_lea.vmem %s13, %s457
      %s459 = smul.u32 16, %s25
      %p460 = scmp.lt.s32.totalorder %s459, 31
      %s461 = scalar_select %p460, %s459, 31
      %s462 = smul.addr %s461, 7
      %s463 = smul.addr %s462, 4
      %s464 = scalar_lea.vmem %s0, %s463
      %s465 = smul.u32 16, %s25
      %s466 = smul.u32 16, %s25
      %p467 = scmp.lt.s32.totalorder %s466, 31
      %s468 = scalar_select %p467, %s466, 31
      %s469 = smul.addr %s468, 8
      %s470 = scalar_lea.vmem %s11, %s469
      %s471 = smul.u32 16, %s25
      %s472 = smul.u32 16, %s25
      %p473 = scmp.lt.s32.totalorder %s472, 31
      %s474 = scalar_select %p473, %s472, 31
      %s475 = smul.addr %s474, 7
      %s476 = smul.addr %s475, 4
      %s477 = scalar_lea.vmem %s12, %s476
      %s478 = smul.u32 16, %s25
      %s479 = smul.u32 16, %s25
      %p480 = scmp.lt.s32.totalorder %s479, 31
      %s481 = scalar_select %p480, %s479, 31
      %s482 = smul.addr %s481, 8
      %s483 = scalar_lea.vmem %s13, %s482
      %s484 = smul.u32 16, %s25
      %v486 = vld [vmem:[%s464] sm:$0xff]
      %v487 = vld [vmem:[%s464 + $0x8] sm:$0xff]
      %v488 = vld [vmem:[%s464 + $0x10] sm:$0xff]
      %v489 = vld [vmem:[%s464 + $0x18] sm:$0xf]
      %v490 = vld [vmem:[%s464 + $0x1c] sm:$0xff]
      %v491 = vld [vmem:[%s464 + $0x24] sm:$0xff]
      %v492 = vld [vmem:[%s464 + $0x2c] sm:$0xff]
      %v493 = vld [vmem:[%s464 + $0x34] sm:$0xf]
      %v494 = vld [vmem:[%s464 + $0x38] sm:$0xff]
      %v495 = vld [vmem:[%s464 + $0x40] sm:$0xff]
      %v496 = vld [vmem:[%s464 + $0x48] sm:$0xff]
      %v497 = vld [vmem:[%s464 + $0x50] sm:$0xf]
      %v498 = vld [vmem:[%s464 + $0x54] sm:$0xff]
      %v499 = vld [vmem:[%s464 + $0x5c] sm:$0xff]
      %v500 = vld [vmem:[%s464 + $0x64] sm:$0xff]
      %v501 = vld [vmem:[%s464 + $0x6c] sm:$0xf]
      %v502 = vld [vmem:[%s464 + $0x70] sm:$0xff]
      %v503 = vld [vmem:[%s464 + $0x78] sm:$0xff]
      %v504 = vld [vmem:[%s464 + $0x80] sm:$0xff]
      %v505 = vld [vmem:[%s464 + $0x88] sm:$0xf]
      %v506 = vld [vmem:[%s464 + $0x8c] sm:$0xff]
      %v507 = vld [vmem:[%s464 + $0x94] sm:$0xff]
      %v508 = vld [vmem:[%s464 + $0x9c] sm:$0xff]
      %v509 = vld [vmem:[%s464 + $0xa4] sm:$0xf]
      %v510 = vld [vmem:[%s464 + $0xa8] sm:$0xff]
      %v511 = vld [vmem:[%s464 + $0xb0] sm:$0xff]
      %v512 = vld [vmem:[%s464 + $0xb8] sm:$0xff]
      %v513 = vld [vmem:[%s464 + $0xc0] sm:$0xf]
      %v514 = vld [vmem:[%s464 + $0xc4] sm:$0xff]
      %v515 = vld [vmem:[%s464 + $0xcc] sm:$0xff]
      %v516 = vld [vmem:[%s464 + $0xd4] sm:$0xff]
      %v517 = vld [vmem:[%s464 + $0xdc] sm:$0xf]
      %v518 = vld [vmem:[%s464 + $0xe0] sm:$0xff]
      %v519 = vld [vmem:[%s464 + $0xe8] sm:$0xff]
      %v520 = vld [vmem:[%s464 + $0xf0] sm:$0xff]
      %v521 = vld [vmem:[%s464 + $0xf8] sm:$0xf]
      %v522 = vld [vmem:[%s464 + $0xfc] sm:$0xff]
      %v523 = vld [vmem:[%s464 + $0x104] sm:$0xff]
      %v524 = vld [vmem:[%s464 + $0x10c] sm:$0xff]
      %v525 = vld [vmem:[%s464 + $0x114] sm:$0xf]
      %v526 = vld [vmem:[%s464 + $0x118] sm:$0xff]
      %v527 = vld [vmem:[%s464 + $0x120] sm:$0xff]
      %v528 = vld [vmem:[%s464 + $0x128] sm:$0xff]
      %v529 = vld [vmem:[%s464 + $0x130] sm:$0xf]
      %v530 = vld [vmem:[%s464 + $0x134] sm:$0xff]
      %v531 = vld [vmem:[%s464 + $0x13c] sm:$0xff]
      %v532 = vld [vmem:[%s464 + $0x144] sm:$0xff]
      %v533 = vld [vmem:[%s464 + $0x14c] sm:$0xf]
      %v534 = vld [vmem:[%s464 + $0x150] sm:$0xff]
      %v535 = vld [vmem:[%s464 + $0x158] sm:$0xff]
      %v536 = vld [vmem:[%s464 + $0x160] sm:$0xff]
      %v537 = vld [vmem:[%s464 + $0x168] sm:$0xf]
      %v538 = vld [vmem:[%s464 + $0x16c] sm:$0xff]
      %v539 = vld [vmem:[%s464 + $0x174] sm:$0xff]
      %v540 = vld [vmem:[%s464 + $0x17c] sm:$0xff]
      %v541 = vld [vmem:[%s464 + $0x184] sm:$0xf]
      %v542 = vld [vmem:[%s464 + $0x188] sm:$0xff]
      %v543 = vld [vmem:[%s464 + $0x190] sm:$0xff]
      %v544 = vld [vmem:[%s464 + $0x198] sm:$0xff]
      %v545 = vld [vmem:[%s464 + $0x1a0] sm:$0xf]
      %v546 = vld [vmem:[%s464 + $0x1a4] sm:$0xff]
      %v547 = vld [vmem:[%s464 + $0x1ac] sm:$0xff]
      %v548 = vld [vmem:[%s464 + $0x1b4] sm:$0xff]
      %v549 = vld [vmem:[%s464 + $0x1bc] sm:$0xf]
      %v550 = vld [vmem:[%s1] sm:$0xff]
      %v551 = vld [vmem:[%s1 + $0x8] sm:$0xff]
      %v552 = vld [vmem:[%s1 + $0x10] sm:$0xff]
      %v553 = vld [vmem:[%s1 + $0x18] sm:$0xff]
      %v554 = vld [vmem:[%s1 + $0x20] sm:$0xff]
      %v555 = vld [vmem:[%s1 + $0x28] sm:$0xff]
      %v556 = vld [vmem:[%s1 + $0x30] sm:$0xff]
      %v557 = vld [vmem:[%s1 + $0x38] sm:$0xff]
      %v558 = vld [vmem:[%s1 + $0x40] sm:$0xff]
      %v559 = vld [vmem:[%s1 + $0x48] sm:$0xff]
      %v560 = vld [vmem:[%s1 + $0x50] sm:$0xff]
      %v561 = vld [vmem:[%s1 + $0x58] sm:$0xff]
      %v562 = vld [vmem:[%s1 + $0x60] sm:$0xff]
      %v563 = vld [vmem:[%s1 + $0x68] sm:$0xff]
      %v564 = vld [vmem:[%s1 + $0x70] sm:$0xff]
      %v565 = vld [vmem:[%s1 + $0x78] sm:$0xff]
      %v566 = vld [vmem:[%s1 + $0x80] sm:$0xff]
      %v567 = vld [vmem:[%s1 + $0x88] sm:$0xff]
      %v568 = vld [vmem:[%s1 + $0x90] sm:$0xff]
      %v569 = vld [vmem:[%s1 + $0x98] sm:$0xff]
      %v570 = vld [vmem:[%s1 + $0xa0] sm:$0xff]
      %v571 = vld [vmem:[%s1 + $0xa8] sm:$0xff]
      %v572 = vld [vmem:[%s1 + $0xb0] sm:$0xff]
      %v573 = vld [vmem:[%s1 + $0xb8] sm:$0xff]
      %v574 = vld [vmem:[%s1 + $0xc0] sm:$0xff]
      %v575 = vld [vmem:[%s1 + $0xc8] sm:$0xff]
      %v576 = vld [vmem:[%s1 + $0xd0] sm:$0xff]
      %v577 = vld [vmem:[%s1 + $0xd8] sm:$0xff]
      %v578 = vld [vmem:[%s1 + $0xe0] sm:$0xff]
      %v579 = vld [vmem:[%s1 + $0xe8] sm:$0xff]
      %v580 = vld [vmem:[%s1 + $0xf0] sm:$0xff]
      %v581 = vld [vmem:[%s1 + $0xf8] sm:$0xff]
      %v582 = vld [vmem:[%s1 + $0x100] sm:$0xff]
      %v583 = vld [vmem:[%s1 + $0x108] sm:$0xff]
      %v584 = vld [vmem:[%s1 + $0x110] sm:$0xff]
      %v585 = vld [vmem:[%s1 + $0x118] sm:$0xff]
      %v586 = vld [vmem:[%s1 + $0x120] sm:$0xff]
      %v587 = vld [vmem:[%s1 + $0x128] sm:$0xff]
      %v588 = vld [vmem:[%s1 + $0x130] sm:$0xff]
      %v589 = vld [vmem:[%s1 + $0x138] sm:$0xff]
      %v590 = vld [vmem:[%s1 + $0x140] sm:$0xff]
      %v591 = vld [vmem:[%s1 + $0x148] sm:$0xff]
      %v592 = vld [vmem:[%s1 + $0x150] sm:$0xff]
      %v593 = vld [vmem:[%s1 + $0x158] sm:$0xff]
      %v594 = vld [vmem:[%s1 + $0x160] sm:$0xff]
      %v595 = vld [vmem:[%s1 + $0x168] sm:$0xff]
      %v596 = vld [vmem:[%s1 + $0x170] sm:$0xff]
      %v597 = vld [vmem:[%s1 + $0x178] sm:$0xff]
      %v598 = vld [vmem:[%s1 + $0x180] sm:$0xff]
      %v599 = vld [vmem:[%s1 + $0x188] sm:$0xff]
      %v600 = vld [vmem:[%s1 + $0x190] sm:$0xff]
      %v601 = vld [vmem:[%s1 + $0x198] sm:$0xff]
      %v602 = vld [vmem:[%s1 + $0x1a0] sm:$0xff]
      %v603 = vld [vmem:[%s1 + $0x1a8] sm:$0xff]
      %v604 = vld [vmem:[%s1 + $0x1b0] sm:$0xff]
      %v605 = vld [vmem:[%s1 + $0x1b8] sm:$0xff]
      %v606 = vld [vmem:[%s1 + $0x1c0] sm:$0xff]
      %v607 = vld [vmem:[%s1 + $0x1c8] sm:$0xff]
      %v608 = vld [vmem:[%s1 + $0x1d0] sm:$0xff]
      %v609 = vld [vmem:[%s1 + $0x1d8] sm:$0xff]
      %v610 = vld [vmem:[%s1 + $0x1e0] sm:$0xff]
      %v611 = vld [vmem:[%s1 + $0x1e8] sm:$0xff]
      %v612 = vld [vmem:[%s1 + $0x1f0] sm:$0xff]
      %v613 = vld [vmem:[%s1 + $0x1f8] sm:$0xff]
      %v614 = vld [vmem:[%s1 + $0x200] sm:$0xff]
      %v615 = vld [vmem:[%s1 + $0x208] sm:$0xff]
      %v616 = vld [vmem:[%s1 + $0x210] sm:$0xff]
      %v617 = vld [vmem:[%s1 + $0x218] sm:$0xff]
      %v618 = vld [vmem:[%s1 + $0x220] sm:$0xff]
      %v619 = vld [vmem:[%s1 + $0x228] sm:$0xff]
      %v620 = vld [vmem:[%s1 + $0x230] sm:$0xff]
      %v621 = vld [vmem:[%s1 + $0x238] sm:$0xff]
      %v622 = vld [vmem:[%s1 + $0x240] sm:$0xff]
      %v623 = vld [vmem:[%s1 + $0x248] sm:$0xff]
      %v624 = vld [vmem:[%s1 + $0x250] sm:$0xff]
      %v625 = vld [vmem:[%s1 + $0x258] sm:$0xff]
      %v626 = vld [vmem:[%s1 + $0x260] sm:$0xff]
      %v627 = vld [vmem:[%s1 + $0x268] sm:$0xff]
      %v628 = vld [vmem:[%s1 + $0x270] sm:$0xff]
      %v629 = vld [vmem:[%s1 + $0x278] sm:$0xff]
      %v630 = vld [vmem:[%s1 + $0x280] sm:$0xff]
      %v631 = vld [vmem:[%s1 + $0x288] sm:$0xff]
      %v632 = vld [vmem:[%s1 + $0x290] sm:$0xff]
      %v633 = vld [vmem:[%s1 + $0x298] sm:$0xff]
      %v634 = vld [vmem:[%s1 + $0x2a0] sm:$0xff]
      %v635 = vld [vmem:[%s1 + $0x2a8] sm:$0xff]
      %v636 = vld [vmem:[%s1 + $0x2b0] sm:$0xff]
      %v637 = vld [vmem:[%s1 + $0x2b8] sm:$0xff]
      %v638 = vld [vmem:[%s1 + $0x2c0] sm:$0xff]
      %v639 = vld [vmem:[%s1 + $0x2c8] sm:$0xff]
      %v640 = vld [vmem:[%s1 + $0x2d0] sm:$0xff]
      %v641 = vld [vmem:[%s1 + $0x2d8] sm:$0xff]
      %v642 = vld [vmem:[%s1 + $0x2e0] sm:$0xff]
      %v643 = vld [vmem:[%s1 + $0x2e8] sm:$0xff]
      %v644 = vld [vmem:[%s1 + $0x2f0] sm:$0xff]
      %v645 = vld [vmem:[%s1 + $0x2f8] sm:$0xff]
      %v646 = vld [vmem:[%s1 + $0x300] sm:$0xff]
      %v647 = vld [vmem:[%s1 + $0x308] sm:$0xff]
      %v648 = vld [vmem:[%s2] sm:$0x3]
      %v650 = vlaneseq
      %v651 = vshrl.u32 %v650, 7
      %v652 = vsub.s32 0, %v651
      %v653 = vrot.slane %v648, %v652
      %v654 = vlaneseq
      %v655 = vshrl.u32 %v654, 7
      %v656 = vsub.s32 1, %v655
      %v657 = vrot.slane %v648, %v656
      %v724 = vunpack.c.l.b16 %v486
      %v725 = vunpack.c.h.b16 %v486
      %v726 = vunpack.c.l.b16 %v487
      %v727 = vunpack.c.h.b16 %v487
      %v728 = vunpack.c.l.b16 %v488
      %v729 = vunpack.c.h.b16 %v488
      %v730 = vunpack.c.l.b16 %v489
      %v731 = vunpack.c.l.b16 %v490
      %v732 = vunpack.c.h.b16 %v490
      %v733 = vunpack.c.l.b16 %v491
      %v734 = vunpack.c.h.b16 %v491
      %v735 = vunpack.c.l.b16 %v492
      %v736 = vunpack.c.h.b16 %v492
      %v737 = vunpack.c.l.b16 %v493
      %v738 = vunpack.c.l.b16 %v494
      %v739 = vunpack.c.h.b16 %v494
      %v740 = vunpack.c.l.b16 %v495
      %v741 = vunpack.c.h.b16 %v495
      %v742 = vunpack.c.l.b16 %v496
      %v743 = vunpack.c.h.b16 %v496
      %v744 = vunpack.c.l.b16 %v497
      %v745 = vunpack.c.l.b16 %v498
      %v746 = vunpack.c.h.b16 %v498
      %v747 = vunpack.c.l.b16 %v499
      %v748 = vunpack.c.h.b16 %v499
      %v749 = vunpack.c.l.b16 %v500
      %v750 = vunpack.c.h.b16 %v500
      %v751 = vunpack.c.l.b16 %v501
      %v752 = vunpack.c.l.b16 %v502
      %v753 = vunpack.c.h.b16 %v502
      %v754 = vunpack.c.l.b16 %v503
      %v755 = vunpack.c.h.b16 %v503
      %v756 = vunpack.c.l.b16 %v504
      %v757 = vunpack.c.h.b16 %v504
      %v758 = vunpack.c.l.b16 %v505
      %v759 = vunpack.c.l.b16 %v506
      %v760 = vunpack.c.h.b16 %v506
      %v761 = vunpack.c.l.b16 %v507
      %v762 = vunpack.c.h.b16 %v507
      %v763 = vunpack.c.l.b16 %v508
      %v764 = vunpack.c.h.b16 %v508
      %v765 = vunpack.c.l.b16 %v509
      %v766 = vunpack.c.l.b16 %v510
      %v767 = vunpack.c.h.b16 %v510
      %v768 = vunpack.c.l.b16 %v511
      %v769 = vunpack.c.h.b16 %v511
      %v770 = vunpack.c.l.b16 %v512
      %v771 = vunpack.c.h.b16 %v512
      %v772 = vunpack.c.l.b16 %v513
      %v773 = vunpack.c.l.b16 %v514
      %v774 = vunpack.c.h.b16 %v514
      %v775 = vunpack.c.l.b16 %v515
      %v776 = vunpack.c.h.b16 %v515
      %v777 = vunpack.c.l.b16 %v516
      %v778 = vunpack.c.h.b16 %v516
      %v779 = vunpack.c.l.b16 %v517
      %v780 = vunpack.c.l.b16 %v518
      %v781 = vunpack.c.h.b16 %v518
      %v782 = vunpack.c.l.b16 %v519
      %v783 = vunpack.c.h.b16 %v519
      %v784 = vunpack.c.l.b16 %v520
      %v785 = vunpack.c.h.b16 %v520
      %v786 = vunpack.c.l.b16 %v521
      %v787 = vunpack.c.l.b16 %v522
      %v788 = vunpack.c.h.b16 %v522
      %v789 = vunpack.c.l.b16 %v523
      %v790 = vunpack.c.h.b16 %v523
      %v791 = vunpack.c.l.b16 %v524
      %v792 = vunpack.c.h.b16 %v524
      %v793 = vunpack.c.l.b16 %v525
      %v794 = vunpack.c.l.b16 %v526
      %v795 = vunpack.c.h.b16 %v526
      %v796 = vunpack.c.l.b16 %v527
      %v797 = vunpack.c.h.b16 %v527
      %v798 = vunpack.c.l.b16 %v528
      %v799 = vunpack.c.h.b16 %v528
      %v800 = vunpack.c.l.b16 %v529
      %v801 = vunpack.c.l.b16 %v530
      %v802 = vunpack.c.h.b16 %v530
      %v803 = vunpack.c.l.b16 %v531
      %v804 = vunpack.c.h.b16 %v531
      %v805 = vunpack.c.l.b16 %v532
      %v806 = vunpack.c.h.b16 %v532
      %v807 = vunpack.c.l.b16 %v533
      %v808 = vunpack.c.l.b16 %v534
      %v809 = vunpack.c.h.b16 %v534
      %v810 = vunpack.c.l.b16 %v535
      %v811 = vunpack.c.h.b16 %v535
      %v812 = vunpack.c.l.b16 %v536
      %v813 = vunpack.c.h.b16 %v536
      %v814 = vunpack.c.l.b16 %v537
      %v815 = vunpack.c.l.b16 %v538
      %v816 = vunpack.c.h.b16 %v538
      %v817 = vunpack.c.l.b16 %v539
      %v818 = vunpack.c.h.b16 %v539
      %v819 = vunpack.c.l.b16 %v540
      %v820 = vunpack.c.h.b16 %v540
      %v821 = vunpack.c.l.b16 %v541
      %v822 = vunpack.c.l.b16 %v542
      %v823 = vunpack.c.h.b16 %v542
      %v824 = vunpack.c.l.b16 %v543
      %v825 = vunpack.c.h.b16 %v543
      %v826 = vunpack.c.l.b16 %v544
      %v827 = vunpack.c.h.b16 %v544
      %v828 = vunpack.c.l.b16 %v545
      %v829 = vunpack.c.l.b16 %v546
      %v830 = vunpack.c.h.b16 %v546
      %v831 = vunpack.c.l.b16 %v547
      %v832 = vunpack.c.h.b16 %v547
      %v833 = vunpack.c.l.b16 %v548
      %v834 = vunpack.c.h.b16 %v548
      %v835 = vunpack.c.l.b16 %v549
      %v836 = vpack.c.b16 %v731, %v724
      %v837 = vpack.c.b16 %v732, %v725
      %v838 = vpack.c.b16 %v733, %v726
      %v839 = vpack.c.b16 %v734, %v727
      %v840 = vpack.c.b16 %v735, %v728
      %v841 = vpack.c.b16 %v736, %v729
      %v842 = vpack.c.b16 %v737, %v730
      %v843 = vpack.c.b16 %v745, %v738
      %v844 = vpack.c.b16 %v746, %v739
      %v845 = vpack.c.b16 %v747, %v740
      %v846 = vpack.c.b16 %v748, %v741
      %v847 = vpack.c.b16 %v749, %v742
      %v848 = vpack.c.b16 %v750, %v743
      %v849 = vpack.c.b16 %v751, %v744
      %v850 = vpack.c.b16 %v759, %v752
      %v851 = vpack.c.b16 %v760, %v753
      %v852 = vpack.c.b16 %v761, %v754
      %v853 = vpack.c.b16 %v762, %v755
      %v854 = vpack.c.b16 %v763, %v756
      %v855 = vpack.c.b16 %v764, %v757
      %v856 = vpack.c.b16 %v765, %v758
      %v857 = vpack.c.b16 %v773, %v766
      %v858 = vpack.c.b16 %v774, %v767
      %v859 = vpack.c.b16 %v775, %v768
      %v860 = vpack.c.b16 %v776, %v769
      %v861 = vpack.c.b16 %v777, %v770
      %v862 = vpack.c.b16 %v778, %v771
      %v863 = vpack.c.b16 %v779, %v772
      %v864 = vpack.c.b16 %v787, %v780
      %v865 = vpack.c.b16 %v788, %v781
      %v866 = vpack.c.b16 %v789, %v782
      %v867 = vpack.c.b16 %v790, %v783
      %v868 = vpack.c.b16 %v791, %v784
      %v869 = vpack.c.b16 %v792, %v785
      %v870 = vpack.c.b16 %v793, %v786
      %v871 = vpack.c.b16 %v801, %v794
      %v872 = vpack.c.b16 %v802, %v795
      %v873 = vpack.c.b16 %v803, %v796
      %v874 = vpack.c.b16 %v804, %v797
      %v875 = vpack.c.b16 %v805, %v798
      %v876 = vpack.c.b16 %v806, %v799
      %v877 = vpack.c.b16 %v807, %v800
      %v878 = vpack.c.b16 %v815, %v808
      %v879 = vpack.c.b16 %v816, %v809
      %v880 = vpack.c.b16 %v817, %v810
      %v881 = vpack.c.b16 %v818, %v811
      %v882 = vpack.c.b16 %v819, %v812
      %v883 = vpack.c.b16 %v820, %v813
      %v884 = vpack.c.b16 %v821, %v814
      %v885 = vpack.c.b16 %v829, %v822
      %v886 = vpack.c.b16 %v830, %v823
      %v887 = vpack.c.b16 %v831, %v824
      %v888 = vpack.c.b16 %v832, %v825
      %v889 = vpack.c.b16 %v833, %v826
      %v890 = vpack.c.b16 %v834, %v827
      %v891 = vpack.c.b16 %v835, %v828
      %v1038 = vunpack.c.l.b16 %v550
      %v1039 = vunpack.c.h.b16 %v550
      %v1040 = vunpack.c.l.b16 %v551
      %v1041 = vunpack.c.h.b16 %v551
      %v1042 = vunpack.c.l.b16 %v552
      %v1043 = vunpack.c.h.b16 %v552
      %v1044 = vunpack.c.l.b16 %v553
      %v1045 = vunpack.c.h.b16 %v553
      %v1046 = vunpack.c.l.b16 %v554
      %v1047 = vunpack.c.h.b16 %v554
      %v1048 = vunpack.c.l.b16 %v555
      %v1049 = vunpack.c.h.b16 %v555
      %v1050 = vunpack.c.l.b16 %v556
      %v1051 = vunpack.c.h.b16 %v556
      %v1052 = vunpack.c.l.b16 %v557
      %v1053 = vunpack.c.h.b16 %v557
      %v1054 = vunpack.c.l.b16 %v558
      %v1055 = vunpack.c.h.b16 %v558
      %v1056 = vunpack.c.l.b16 %v559
      %v1057 = vunpack.c.h.b16 %v559
      %v1058 = vunpack.c.l.b16 %v560
      %v1059 = vunpack.c.h.b16 %v560
      %v1060 = vunpack.c.l.b16 %v561
      %v1061 = vunpack.c.h.b16 %v561
      %v1062 = vunpack.c.l.b16 %v562
      %v1063 = vunpack.c.h.b16 %v562
      %v1064 = vunpack.c.l.b16 %v563
      %v1065 = vunpack.c.h.b16 %v563
      %v1066 = vunpack.c.l.b16 %v564
      %v1067 = vunpack.c.h.b16 %v564
      %v1068 = vunpack.c.l.b16 %v565
      %v1069 = vunpack.c.h.b16 %v565
      %v1070 = vunpack.c.l.b16 %v566
      %v1071 = vunpack.c.h.b16 %v566
      %v1072 = vunpack.c.l.b16 %v567
      %v1073 = vunpack.c.h.b16 %v567
      %v1074 = vunpack.c.l.b16 %v568
      %v1075 = vunpack.c.h.b16 %v568
      %v1076 = vunpack.c.l.b16 %v569
      %v1077 = vunpack.c.h.b16 %v569
      %v1078 = vunpack.c.l.b16 %v570
      %v1079 = vunpack.c.h.b16 %v570
      %v1080 = vunpack.c.l.b16 %v571
      %v1081 = vunpack.c.h.b16 %v571
      %v1082 = vunpack.c.l.b16 %v572
      %v1083 = vunpack.c.h.b16 %v572
      %v1084 = vunpack.c.l.b16 %v573
      %v1085 = vunpack.c.h.b16 %v573
      %v1086 = vunpack.c.l.b16 %v574
      %v1087 = vunpack.c.h.b16 %v574
      %v1088 = vunpack.c.l.b16 %v575
      %v1089 = vunpack.c.h.b16 %v575
      %v1090 = vunpack.c.l.b16 %v576
      %v1091 = vunpack.c.h.b16 %v576
      %v1092 = vunpack.c.l.b16 %v577
      %v1093 = vunpack.c.h.b16 %v577
      %v1094 = vunpack.c.l.b16 %v578
      %v1095 = vunpack.c.h.b16 %v578
      %v1096 = vunpack.c.l.b16 %v579
      %v1097 = vunpack.c.h.b16 %v579
      %v1098 = vunpack.c.l.b16 %v580
      %v1099 = vunpack.c.h.b16 %v580
      %v1100 = vunpack.c.l.b16 %v581
      %v1101 = vunpack.c.h.b16 %v581
      %v1102 = vunpack.c.l.b16 %v582
      %v1103 = vunpack.c.h.b16 %v582
      %v1104 = vunpack.c.l.b16 %v583
      %v1105 = vunpack.c.h.b16 %v583
      %v1106 = vunpack.c.l.b16 %v584
      %v1107 = vunpack.c.h.b16 %v584
      %v1108 = vunpack.c.l.b16 %v585
      %v1109 = vunpack.c.h.b16 %v585
      %v1110 = vunpack.c.l.b16 %v586
      %v1111 = vunpack.c.h.b16 %v586
      %v1112 = vunpack.c.l.b16 %v587
      %v1113 = vunpack.c.h.b16 %v587
      %v1114 = vunpack.c.l.b16 %v588
      %v1115 = vunpack.c.h.b16 %v588
      %v1116 = vunpack.c.l.b16 %v589
      %v1117 = vunpack.c.h.b16 %v589
      %v1118 = vunpack.c.l.b16 %v590
      %v1119 = vunpack.c.h.b16 %v590
      %v1120 = vunpack.c.l.b16 %v591
      %v1121 = vunpack.c.h.b16 %v591
      %v1122 = vunpack.c.l.b16 %v592
      %v1123 = vunpack.c.h.b16 %v592
      %v1124 = vunpack.c.l.b16 %v593
      %v1125 = vunpack.c.h.b16 %v593
      %v1126 = vunpack.c.l.b16 %v594
      %v1127 = vunpack.c.h.b16 %v594
      %v1128 = vunpack.c.l.b16 %v595
      %v1129 = vunpack.c.h.b16 %v595
      %v1130 = vunpack.c.l.b16 %v596
      %v1131 = vunpack.c.h.b16 %v596
      %v1132 = vunpack.c.l.b16 %v597
      %v1133 = vunpack.c.h.b16 %v597
      %v1134 = vunpack.c.l.b16 %v598
      %v1135 = vunpack.c.h.b16 %v598
      %v1136 = vunpack.c.l.b16 %v599
      %v1137 = vunpack.c.h.b16 %v599
      %v1138 = vunpack.c.l.b16 %v600
      %v1139 = vunpack.c.h.b16 %v600
      %v1140 = vunpack.c.l.b16 %v601
      %v1141 = vunpack.c.h.b16 %v601
      %v1142 = vunpack.c.l.b16 %v602
      %v1143 = vunpack.c.h.b16 %v602
      %v1144 = vunpack.c.l.b16 %v603
      %v1145 = vunpack.c.h.b16 %v603
      %v1146 = vunpack.c.l.b16 %v604
      %v1147 = vunpack.c.h.b16 %v604
      %v1148 = vunpack.c.l.b16 %v605
      %v1149 = vunpack.c.h.b16 %v605
      %v1150 = vunpack.c.l.b16 %v606
      %v1151 = vunpack.c.h.b16 %v606
      %v1152 = vunpack.c.l.b16 %v607
      %v1153 = vunpack.c.h.b16 %v607
      %v1154 = vunpack.c.l.b16 %v608
      %v1155 = vunpack.c.h.b16 %v608
      %v1156 = vunpack.c.l.b16 %v609
      %v1157 = vunpack.c.h.b16 %v609
      %v1158 = vunpack.c.l.b16 %v610
      %v1159 = vunpack.c.h.b16 %v610
      %v1160 = vunpack.c.l.b16 %v611
      %v1161 = vunpack.c.h.b16 %v611
      %v1162 = vunpack.c.l.b16 %v612
      %v1163 = vunpack.c.h.b16 %v612
      %v1164 = vunpack.c.l.b16 %v613
      %v1165 = vunpack.c.h.b16 %v613
      %v1166 = vunpack.c.l.b16 %v614
      %v1167 = vunpack.c.h.b16 %v614
      %v1168 = vunpack.c.l.b16 %v615
      %v1169 = vunpack.c.h.b16 %v615
      %v1170 = vunpack.c.l.b16 %v616
      %v1171 = vunpack.c.h.b16 %v616
      %v1172 = vunpack.c.l.b16 %v617
      %v1173 = vunpack.c.h.b16 %v617
      %v1174 = vunpack.c.l.b16 %v618
      %v1175 = vunpack.c.h.b16 %v618
      %v1176 = vunpack.c.l.b16 %v619
      %v1177 = vunpack.c.h.b16 %v619
      %v1178 = vunpack.c.l.b16 %v620
      %v1179 = vunpack.c.h.b16 %v620
      %v1180 = vunpack.c.l.b16 %v621
      %v1181 = vunpack.c.h.b16 %v621
      %v1182 = vunpack.c.l.b16 %v622
      %v1183 = vunpack.c.h.b16 %v622
      %v1184 = vunpack.c.l.b16 %v623
      %v1185 = vunpack.c.h.b16 %v623
      %v1186 = vunpack.c.l.b16 %v624
      %v1187 = vunpack.c.h.b16 %v624
      %v1188 = vunpack.c.l.b16 %v625
      %v1189 = vunpack.c.h.b16 %v625
      %v1190 = vunpack.c.l.b16 %v626
      %v1191 = vunpack.c.h.b16 %v626
      %v1192 = vunpack.c.l.b16 %v627
      %v1193 = vunpack.c.h.b16 %v627
      %v1194 = vunpack.c.l.b16 %v628
      %v1195 = vunpack.c.h.b16 %v628
      %v1196 = vunpack.c.l.b16 %v629
      %v1197 = vunpack.c.h.b16 %v629
      %v1198 = vunpack.c.l.b16 %v630
      %v1199 = vunpack.c.h.b16 %v630
      %v1200 = vunpack.c.l.b16 %v631
      %v1201 = vunpack.c.h.b16 %v631
      %v1202 = vunpack.c.l.b16 %v632
      %v1203 = vunpack.c.h.b16 %v632
      %v1204 = vunpack.c.l.b16 %v633
      %v1205 = vunpack.c.h.b16 %v633
      %v1206 = vunpack.c.l.b16 %v634
      %v1207 = vunpack.c.h.b16 %v634
      %v1208 = vunpack.c.l.b16 %v635
      %v1209 = vunpack.c.h.b16 %v635
      %v1210 = vunpack.c.l.b16 %v636
      %v1211 = vunpack.c.h.b16 %v636
      %v1212 = vunpack.c.l.b16 %v637
      %v1213 = vunpack.c.h.b16 %v637
      %v1214 = vunpack.c.l.b16 %v638
      %v1215 = vunpack.c.h.b16 %v638
      %v1216 = vunpack.c.l.b16 %v639
      %v1217 = vunpack.c.h.b16 %v639
      %v1218 = vunpack.c.l.b16 %v640
      %v1219 = vunpack.c.h.b16 %v640
      %v1220 = vunpack.c.l.b16 %v641
      %v1221 = vunpack.c.h.b16 %v641
      %v1222 = vunpack.c.l.b16 %v642
      %v1223 = vunpack.c.h.b16 %v642
      %v1224 = vunpack.c.l.b16 %v643
      %v1225 = vunpack.c.h.b16 %v643
      %v1226 = vunpack.c.l.b16 %v644
      %v1227 = vunpack.c.h.b16 %v644
      %v1228 = vunpack.c.l.b16 %v645
      %v1229 = vunpack.c.h.b16 %v645
      %v1230 = vunpack.c.l.b16 %v646
      %v1231 = vunpack.c.h.b16 %v646
      %v1232 = vunpack.c.l.b16 %v647
      %v1233 = vunpack.c.h.b16 %v647
      %v1234 = vpack.c.b16 %v1040, %v1038
      %v1235 = vpack.c.b16 %v1041, %v1039
      %v1236 = vpack.c.b16 %v1044, %v1042
      %v1237 = vpack.c.b16 %v1045, %v1043
      %v1238 = vpack.c.b16 %v1048, %v1046
      %v1239 = vpack.c.b16 %v1049, %v1047
      %v1240 = vpack.c.b16 %v1052, %v1050
      %v1241 = vpack.c.b16 %v1053, %v1051
      %v1242 = vpack.c.b16 %v1056, %v1054
      %v1243 = vpack.c.b16 %v1057, %v1055
      %v1244 = vpack.c.b16 %v1060, %v1058
      %v1245 = vpack.c.b16 %v1061, %v1059
      %v1246 = vpack.c.b16 %v1064, %v1062
      %v1247 = vpack.c.b16 %v1065, %v1063
      %v1248 = vpack.c.b16 %v1068, %v1066
      %v1249 = vpack.c.b16 %v1069, %v1067
      %v1250 = vpack.c.b16 %v1072, %v1070
      %v1251 = vpack.c.b16 %v1073, %v1071
      %v1252 = vpack.c.b16 %v1076, %v1074
      %v1253 = vpack.c.b16 %v1077, %v1075
      %v1254 = vpack.c.b16 %v1080, %v1078
      %v1255 = vpack.c.b16 %v1081, %v1079
      %v1256 = vpack.c.b16 %v1084, %v1082
      %v1257 = vpack.c.b16 %v1085, %v1083
      %v1258 = vpack.c.b16 %v1088, %v1086
      %v1259 = vpack.c.b16 %v1089, %v1087
      %v1260 = vpack.c.b16 %v1092, %v1090
      %v1261 = vpack.c.b16 %v1093, %v1091
      %v1262 = vpack.c.b16 %v1096, %v1094
      %v1263 = vpack.c.b16 %v1097, %v1095
      %v1264 = vpack.c.b16 %v1100, %v1098
      %v1265 = vpack.c.b16 %v1101, %v1099
      %v1266 = vpack.c.b16 %v1104, %v1102
      %v1267 = vpack.c.b16 %v1105, %v1103
      %v1268 = vpack.c.b16 %v1108, %v1106
      %v1269 = vpack.c.b16 %v1109, %v1107
      %v1270 = vpack.c.b16 %v1112, %v1110
      %v1271 = vpack.c.b16 %v1113, %v1111
      %v1272 = vpack.c.b16 %v1116, %v1114
      %v1273 = vpack.c.b16 %v1117, %v1115
      %v1274 = vpack.c.b16 %v1120, %v1118
      %v1275 = vpack.c.b16 %v1121, %v1119
      %v1276 = vpack.c.b16 %v1124, %v1122
      %v1277 = vpack.c.b16 %v1125, %v1123
      %v1278 = vpack.c.b16 %v1128, %v1126
      %v1279 = vpack.c.b16 %v1129, %v1127
      %v1280 = vpack.c.b16 %v1132, %v1130
      %v1281 = vpack.c.b16 %v1133, %v1131
      %v1282 = vpack.c.b16 %v1136, %v1134
      %v1283 = vpack.c.b16 %v1137, %v1135
      %v1284 = vpack.c.b16 %v1140, %v1138
      %v1285 = vpack.c.b16 %v1141, %v1139
      %v1286 = vpack.c.b16 %v1144, %v1142
      %v1287 = vpack.c.b16 %v1145, %v1143
      %v1288 = vpack.c.b16 %v1148, %v1146
      %v1289 = vpack.c.b16 %v1149, %v1147
      %v1290 = vpack.c.b16 %v1152, %v1150
      %v1291 = vpack.c.b16 %v1153, %v1151
      %v1292 = vpack.c.b16 %v1156, %v1154
      %v1293 = vpack.c.b16 %v1157, %v1155
      %v1294 = vpack.c.b16 %v1160, %v1158
      %v1295 = vpack.c.b16 %v1161, %v1159
      %v1296 = vpack.c.b16 %v1164, %v1162
      %v1297 = vpack.c.b16 %v1165, %v1163
      %v1298 = vpack.c.b16 %v1168, %v1166
      %v1299 = vpack.c.b16 %v1169, %v1167
      %v1300 = vpack.c.b16 %v1172, %v1170
      %v1301 = vpack.c.b16 %v1173, %v1171
      %v1302 = vpack.c.b16 %v1176, %v1174
      %v1303 = vpack.c.b16 %v1177, %v1175
      %v1304 = vpack.c.b16 %v1180, %v1178
      %v1305 = vpack.c.b16 %v1181, %v1179
      %v1306 = vpack.c.b16 %v1184, %v1182
      %v1307 = vpack.c.b16 %v1185, %v1183
      %v1308 = vpack.c.b16 %v1188, %v1186
      %v1309 = vpack.c.b16 %v1189, %v1187
      %v1310 = vpack.c.b16 %v1192, %v1190
      %v1311 = vpack.c.b16 %v1193, %v1191
      %v1312 = vpack.c.b16 %v1196, %v1194
      %v1313 = vpack.c.b16 %v1197, %v1195
      %v1314 = vpack.c.b16 %v1200, %v1198
      %v1315 = vpack.c.b16 %v1201, %v1199
      %v1316 = vpack.c.b16 %v1204, %v1202
      %v1317 = vpack.c.b16 %v1205, %v1203
      %v1318 = vpack.c.b16 %v1208, %v1206
      %v1319 = vpack.c.b16 %v1209, %v1207
      %v1320 = vpack.c.b16 %v1212, %v1210
      %v1321 = vpack.c.b16 %v1213, %v1211
      %v1322 = vpack.c.b16 %v1216, %v1214
      %v1323 = vpack.c.b16 %v1217, %v1215
      %v1324 = vpack.c.b16 %v1220, %v1218
      %v1325 = vpack.c.b16 %v1221, %v1219
      %v1326 = vpack.c.b16 %v1224, %v1222
      %v1327 = vpack.c.b16 %v1225, %v1223
      %v1328 = vpack.c.b16 %v1228, %v1226
      %v1329 = vpack.c.b16 %v1229, %v1227
      %v1330 = vpack.c.b16 %v1232, %v1230
      %v1331 = vpack.c.b16 %v1233, %v1231
      %vm1430 = vcmask 130048
      %v1432 = vsel %vm1430, %v842, 0
      %v1435 = vsel %vm1430, %v849, 0
      %v1438 = vsel %vm1430, %v856, 0
      %v1441 = vsel %vm1430, %v863, 0
      %v1444 = vsel %vm1430, %v870, 0
      %v1447 = vsel %vm1430, %v877, 0
      %v1450 = vsel %vm1430, %v884, 0
      %v1453 = vsel %vm1430, %v891, 0
      %1455 = vmatprep.subr.bf16.mxu0 %v1235
      %1456 = vmatpush1.bf16.msra.mxu0 %v1234
      %1457 = vmatprep.subr.bf16.mxu0 %v1237
      %1458 = vmatpush1.bf16.msra.mxu0 %v1236
      %1459 = vmatprep.subr.bf16.mxu0 %v1239
      %1460 = vmatpush1.bf16.msra.mxu0 %v1238
      %1461 = vmatprep.subr.bf16.mxu0 %v1241
      %1462 = vmatpush1.bf16.msra.mxu0 %v1240
      %1463 = vmatprep.subr.bf16.mxu0 %v1243
      %1464 = vmatpush1.bf16.msra.mxu0 %v1242
      %1465 = vmatprep.subr.bf16.mxu0 %v1245
      %1466 = vmatpush1.bf16.msra.mxu0 %v1244
      %1467 = vmatprep.subr.bf16.mxu0 %v1247
      %1468 = vmatpush1.bf16.msra.mxu0 %v1246
      %1469 = vmatprep.subr.bf16.mxu0 %v1249
      %1470 = vmatpush1.bf16.msra.mxu0 %v1248
      %1471 = vmatprep.subr.bf16.mxu0 %v1251
      %1472 = vmatpush1.bf16.msra.mxu0 %v1250
      %1473 = vmatprep.subr.bf16.mxu0 %v1253
      %1474 = vmatpush1.bf16.msra.mxu0 %v1252
      %1475 = vmatprep.subr.bf16.mxu0 %v1255
      %1476 = vmatpush1.bf16.msra.mxu0 %v1254
      %1477 = vmatprep.subr.bf16.mxu0 %v1257
      %1478 = vmatpush1.bf16.msra.mxu0 %v1256
      %1479 = vmatprep.subr.bf16.mxu0 %v1259
      %1480 = vmatpush1.bf16.msra.mxu0 %v1258
      %1481 = vmatprep.subr.bf16.mxu0 %v1261
      %1482 = vmatpush1.bf16.msra.mxu0 %v1260
      %1483 = vmatprep.subr.bf16.mxu0 %v1263
      %1484 = vmatpush1.bf16.msra.mxu0 %v1262
      %1485 = vmatprep.subr.bf16.mxu0 %v1265
      %1486 = vmatpush1.bf16.msra.mxu0 %v1264
      %1487 = vmatprep.mubr.bf16.mxu0 %v837
      %1488 = vmatmul.mubr.bf16.gmra.mrb[0].mxu0 %v836
      %v1489 = vpop.f32.mrb[0].mxu0
      %v1490 = vadd.f32 %v653, %v1489
      %v1491 = vpop.f32.mrb[0].mxu0
      %v1492 = vadd.f32 %v657, %v1491
      %v1493 = vpop.f32.mrb[0].mxu0
      %v1494 = vadd.f32 %v653, %v1493
      %v1495 = vpop.f32.mrb[0].mxu0
      %v1496 = vadd.f32 %v657, %v1495
      %1497 = vmatprep.mubr.bf16.mxu0 %v844
      %1498 = vmatmul.mubr.bf16.gmra.mrb[0].mxu0 %v843
      %v1499 = vpop.f32.mrb[0].mxu0
      %v1500 = vadd.f32 %v653, %v1499
      %v1501 = vpop.f32.mrb[0].mxu0
      %v1502 = vadd.f32 %v657, %v1501
      %v1503 = vpop.f32.mrb[0].mxu0
      %v1504 = vadd.f32 %v653, %v1503
      %v1505 = vpop.f32.mrb[0].mxu0
      %v1506 = vadd.f32 %v657, %v1505
      %1507 = vmatprep.mubr.bf16.mxu0 %v851
      %1508 = vmatmul.mubr.bf16.gmra.mrb[0].mxu0 %v850
      %v1509 = vpop.f32.mrb[0].mxu0
      %v1510 = vadd.f32 %v653, %v1509
      %v1511 = vpop.f32.mrb[0].mxu0
      %v1512 = vadd.f32 %v657, %v1511
      %v1513 = vpop.f32.mrb[0].mxu0
      %v1514 = vadd.f32 %v653, %v1513
      %v1515 = vpop.f32.mrb[0].mxu0
      %v1516 = vadd.f32 %v657, %v1515
      %1517 = vmatprep.mubr.bf16.mxu0 %v858
      %1518 = vmatmul.mubr.bf16.gmra.mrb[0].mxu0 %v857
      %v1519 = vpop.f32.mrb[0].mxu0
      %v1520 = vadd.f32 %v653, %v1519
      %v1521 = vpop.f32.mrb[0].mxu0
      %v1522 = vadd.f32 %v657, %v1521
      %v1523 = vpop.f32.mrb[0].mxu0
      %v1524 = vadd.f32 %v653, %v1523
      %v1525 = vpop.f32.mrb[0].mxu0
      %v1526 = vadd.f32 %v657, %v1525
      %1527 = vmatprep.mubr.bf16.mxu0 %v865
      %1528 = vmatmul.mubr.bf16.gmra.mrb[0].mxu0 %v864
      %v1529 = vpop.f32.mrb[0].mxu0
      %v1530 = vadd.f32 %v653, %v1529
      %v1531 = vpop.f32.mrb[0].mxu0
      %v1532 = vadd.f32 %v657, %v1531
      %v1533 = vpop.f32.mrb[0].mxu0
      %v1534 = vadd.f32 %v653, %v1533
      %v1535 = vpop.f32.mrb[0].mxu0
      %v1536 = vadd.f32 %v657, %v1535
      %1537 = vmatprep.mubr.bf16.mxu0 %v872
      %1538 = vmatmul.mubr.bf16.gmra.mrb[0].mxu0 %v871
      %v1539 = vpop.f32.mrb[0].mxu0
      %v1540 = vadd.f32 %v653, %v1539
      %v1541 = vpop.f32.mrb[0].mxu0
      %v1542 = vadd.f32 %v657, %v1541
      %v1543 = vpop.f32.mrb[0].mxu0
      %v1544 = vadd.f32 %v653, %v1543
      %v1545 = vpop.f32.mrb[0].mxu0
      %v1546 = vadd.f32 %v657, %v1545
      %1547 = vmatprep.mubr.bf16.mxu0 %v879
      %1548 = vmatmul.mubr.bf16.gmra.mrb[0].mxu0 %v878
      %v1549 = vpop.f32.mrb[0].mxu0
      %v1550 = vadd.f32 %v653, %v1549
      %v1551 = vpop.f32.mrb[0].mxu0
      %v1552 = vadd.f32 %v657, %v1551
      %v1553 = vpop.f32.mrb[0].mxu0
      %v1554 = vadd.f32 %v653, %v1553
      %v1555 = vpop.f32.mrb[0].mxu0
      %v1556 = vadd.f32 %v657, %v1555
      %1557 = vmatprep.mubr.bf16.mxu0 %v886
      %1558 = vmatmul.mubr.bf16.gmra.mrb[0].mxu0 %v885
      %v1559 = vpop.f32.mrb[0].mxu0
      %v1560 = vadd.f32 %v653, %v1559
      %v1561 = vpop.f32.mrb[0].mxu0
      %v1562 = vadd.f32 %v657, %v1561
      %v1563 = vpop.f32.mrb[0].mxu0
      %v1564 = vadd.f32 %v653, %v1563
      %v1565 = vpop.f32.mrb[0].mxu0
      %v1566 = vadd.f32 %v657, %v1565
      %1567 = vdwg.mxu0
      %1568 = vmatprep.subr.bf16.mxu0 %v1267
      %1569 = vmatpush1.bf16.msra.mxu0 %v1266
      %1570 = vmatprep.subr.bf16.mxu0 %v1269
      %1571 = vmatpush1.bf16.msra.mxu0 %v1268
      %1572 = vmatprep.subr.bf16.mxu0 %v1271
      %1573 = vmatpush1.bf16.msra.mxu0 %v1270
      %1574 = vmatprep.subr.bf16.mxu0 %v1273
      %1575 = vmatpush1.bf16.msra.mxu0 %v1272
      %1576 = vmatprep.subr.bf16.mxu0 %v1275
      %1577 = vmatpush1.bf16.msra.mxu0 %v1274
      %1578 = vmatprep.subr.bf16.mxu0 %v1277
      %1579 = vmatpush1.bf16.msra.mxu0 %v1276
      %1580 = vmatprep.subr.bf16.mxu0 %v1279
      %1581 = vmatpush1.bf16.msra.mxu0 %v1278
      %1582 = vmatprep.subr.bf16.mxu0 %v1281
      %1583 = vmatpush1.bf16.msra.mxu0 %v1280
      %1584 = vmatprep.subr.bf16.mxu0 %v1283
      %1585 = vmatpush1.bf16.msra.mxu0 %v1282
      %1586 = vmatprep.subr.bf16.mxu0 %v1285
      %1587 = vmatpush1.bf16.msra.mxu0 %v1284
      %1588 = vmatprep.subr.bf16.mxu0 %v1287
      %1589 = vmatpush1.bf16.msra.mxu0 %v1286
      %1590 = vmatprep.subr.bf16.mxu0 %v1289
      %1591 = vmatpush1.bf16.msra.mxu0 %v1288
      %1592 = vmatprep.subr.bf16.mxu0 %v1291
      %1593 = vmatpush1.bf16.msra.mxu0 %v1290
      %1594 = vmatprep.subr.bf16.mxu0 %v1293
      %1595 = vmatpush1.bf16.msra.mxu0 %v1292
      %1596 = vmatprep.subr.bf16.mxu0 %v1295
      %1597 = vmatpush1.bf16.msra.mxu0 %v1294
      %1598 = vmatprep.subr.bf16.mxu0 %v1297
      %1599 = vmatpush1.bf16.msra.mxu0 %v1296
      %1600 = vmatprep.mubr.bf16.mxu0 %v839
      %1601 = vmatmul.mubr.bf16.gmra.mrb[0].mxu0 %v838
      %v1602 = vpop.f32.mrb[0].mxu0
      %v1603 = vadd.f32 %v1490, %v1602
      %v1604 = vpop.f32.mrb[0].mxu0
      %v1605 = vadd.f32 %v1492, %v1604
      %v1606 = vpop.f32.mrb[0].mxu0
      %v1607 = vadd.f32 %v1494, %v1606
      %v1608 = vpop.f32.mrb[0].mxu0
      %v1609 = vadd.f32 %v1496, %v1608
      %1610 = vmatprep.mubr.bf16.mxu0 %v846
      %1611 = vmatmul.mubr.bf16.gmra.mrb[0].mxu0 %v845
      %v1612 = vpop.f32.mrb[0].mxu0
      %v1613 = vadd.f32 %v1500, %v1612
      %v1614 = vpop.f32.mrb[0].mxu0
      %v1615 = vadd.f32 %v1502, %v1614
      %v1616 = vpop.f32.mrb[0].mxu0
      %v1617 = vadd.f32 %v1504, %v1616
      %v1618 = vpop.f32.mrb[0].mxu0
      %v1619 = vadd.f32 %v1506, %v1618
      %1620 = vmatprep.mubr.bf16.mxu0 %v853
      %1621 = vmatmul.mubr.bf16.gmra.mrb[0].mxu0 %v852
      %v1622 = vpop.f32.mrb[0].mxu0
      %v1623 = vadd.f32 %v1510, %v1622
      %v1624 = vpop.f32.mrb[0].mxu0
      %v1625 = vadd.f32 %v1512, %v1624
      %v1626 = vpop.f32.mrb[0].mxu0
      %v1627 = vadd.f32 %v1514, %v1626
      %v1628 = vpop.f32.mrb[0].mxu0
      %v1629 = vadd.f32 %v1516, %v1628
      %1630 = vmatprep.mubr.bf16.mxu0 %v860
      %1631 = vmatmul.mubr.bf16.gmra.mrb[0].mxu0 %v859
      %v1632 = vpop.f32.mrb[0].mxu0
      %v1633 = vadd.f32 %v1520, %v1632
      %v1634 = vpop.f32.mrb[0].mxu0
      %v1635 = vadd.f32 %v1522, %v1634
      %v1636 = vpop.f32.mrb[0].mxu0
      %v1637 = vadd.f32 %v1524, %v1636
      %v1638 = vpop.f32.mrb[0].mxu0
      %v1639 = vadd.f32 %v1526, %v1638
      %1640 = vmatprep.mubr.bf16.mxu0 %v867
      %1641 = vmatmul.mubr.bf16.gmra.mrb[0].mxu0 %v866
      %v1642 = vpop.f32.mrb[0].mxu0
      %v1643 = vadd.f32 %v1530, %v1642
      %v1644 = vpop.f32.mrb[0].mxu0
      %v1645 = vadd.f32 %v1532, %v1644
      %v1646 = vpop.f32.mrb[0].mxu0
      %v1647 = vadd.f32 %v1534, %v1646
      %v1648 = vpop.f32.mrb[0].mxu0
      %v1649 = vadd.f32 %v1536, %v1648
      %1650 = vmatprep.mubr.bf16.mxu0 %v874
      %1651 = vmatmul.mubr.bf16.gmra.mrb[0].mxu0 %v873
      %v1652 = vpop.f32.mrb[0].mxu0
      %v1653 = vadd.f32 %v1540, %v1652
      %v1654 = vpop.f32.mrb[0].mxu0
      %v1655 = vadd.f32 %v1542, %v1654
      %v1656 = vpop.f32.mrb[0].mxu0
      %v1657 = vadd.f32 %v1544, %v1656
      %v1658 = vpop.f32.mrb[0].mxu0
      %v1659 = vadd.f32 %v1546, %v1658
      %1660 = vmatprep.mubr.bf16.mxu0 %v881
      %1661 = vmatmul.mubr.bf16.gmra.mrb[0].mxu0 %v880
      %v1662 = vpop.f32.mrb[0].mxu0
      %v1663 = vadd.f32 %v1550, %v1662
      %v1664 = vpop.f32.mrb[0].mxu0
      %v1665 = vadd.f32 %v1552, %v1664
      %v1666 = vpop.f32.mrb[0].mxu0
      %v1667 = vadd.f32 %v1554, %v1666
      %v1668 = vpop.f32.mrb[0].mxu0
      %v1669 = vadd.f32 %v1556, %v1668
      %1670 = vmatprep.mubr.bf16.mxu0 %v888
      %1671 = vmatmul.mubr.bf16.gmra.mrb[0].mxu0 %v887
      %v1672 = vpop.f32.mrb[0].mxu0
      %v1673 = vadd.f32 %v1560, %v1672
      %v1674 = vpop.f32.mrb[0].mxu0
      %v1675 = vadd.f32 %v1562, %v1674
      %v1676 = vpop.f32.mrb[0].mxu0
      %v1677 = vadd.f32 %v1564, %v1676
      %v1678 = vpop.f32.mrb[0].mxu0
      %v1679 = vadd.f32 %v1566, %v1678
      %1680 = vdwg.mxu0
      %1681 = vmatprep.subr.bf16.mxu0 %v1299
      %1682 = vmatpush1.bf16.msra.mxu0 %v1298
      %1683 = vmatprep.subr.bf16.mxu0 %v1301
      %1684 = vmatpush1.bf16.msra.mxu0 %v1300
      %1685 = vmatprep.subr.bf16.mxu0 %v1303
      %1686 = vmatpush1.bf16.msra.mxu0 %v1302
      %1687 = vmatprep.subr.bf16.mxu0 %v1305
      %1688 = vmatpush1.bf16.msra.mxu0 %v1304
      %1689 = vmatprep.subr.bf16.mxu0 %v1307
      %1690 = vmatpush1.bf16.msra.mxu0 %v1306
      %1691 = vmatprep.subr.bf16.mxu0 %v1309
      %1692 = vmatpush1.bf16.msra.mxu0 %v1308
      %1693 = vmatprep.subr.bf16.mxu0 %v1311
      %1694 = vmatpush1.bf16.msra.mxu0 %v1310
      %1695 = vmatprep.subr.bf16.mxu0 %v1313
      %1696 = vmatpush1.bf16.msra.mxu0 %v1312
      %1697 = vmatprep.subr.bf16.mxu0 %v1315
      %1698 = vmatpush1.bf16.msra.mxu0 %v1314
      %1699 = vmatprep.subr.bf16.mxu0 %v1317
      %1700 = vmatpush1.bf16.msra.mxu0 %v1316
      %1701 = vmatprep.subr.bf16.mxu0 %v1319
      %1702 = vmatpush1.bf16.msra.mxu0 %v1318
      %1703 = vmatprep.subr.bf16.mxu0 %v1321
      %1704 = vmatpush1.bf16.msra.mxu0 %v1320
      %1705 = vmatprep.subr.bf16.mxu0 %v1323
      %1706 = vmatpush1.bf16.msra.mxu0 %v1322
      %1707 = vmatprep.subr.bf16.mxu0 %v1325
      %1708 = vmatpush1.bf16.msra.mxu0 %v1324
      %1709 = vmatprep.subr.bf16.mxu0 %v1327
      %1710 = vmatpush1.bf16.msra.mxu0 %v1326
      %1711 = vmatprep.subr.bf16.mxu0 %v1329
      %1712 = vmatpush1.bf16.msra.mxu0 %v1328
      %1713 = vmatprep.mubr.bf16.mxu0 %v841
      %1714 = vmatmul.mubr.bf16.gmra.mrb[0].mxu0 %v840
      %v1715 = vpop.f32.mrb[0].mxu0
      %v1716 = vadd.f32 %v1603, %v1715
      %v1717 = vpop.f32.mrb[0].mxu0
      %v1718 = vadd.f32 %v1605, %v1717
      %v1719 = vpop.f32.mrb[0].mxu0
      %v1720 = vadd.f32 %v1607, %v1719
      %v1721 = vpop.f32.mrb[0].mxu0
      %v1722 = vadd.f32 %v1609, %v1721
      %1723 = vmatprep.mubr.bf16.mxu0 %v848
      %1724 = vmatmul.mubr.bf16.gmra.mrb[0].mxu0 %v847
      %v1725 = vpop.f32.mrb[0].mxu0
      %v1726 = vadd.f32 %v1613, %v1725
      %v1727 = vpop.f32.mrb[0].mxu0
      %v1728 = vadd.f32 %v1615, %v1727
      %v1729 = vpop.f32.mrb[0].mxu0
      %v1730 = vadd.f32 %v1617, %v1729
      %v1731 = vpop.f32.mrb[0].mxu0
      %v1732 = vadd.f32 %v1619, %v1731
      %1733 = vmatprep.mubr.bf16.mxu0 %v855
      %1734 = vmatmul.mubr.bf16.gmra.mrb[0].mxu0 %v854
      %v1735 = vpop.f32.mrb[0].mxu0
      %v1736 = vadd.f32 %v1623, %v1735
      %v1737 = vpop.f32.mrb[0].mxu0
      %v1738 = vadd.f32 %v1625, %v1737
      %v1739 = vpop.f32.mrb[0].mxu0
      %v1740 = vadd.f32 %v1627, %v1739
      %v1741 = vpop.f32.mrb[0].mxu0
      %v1742 = vadd.f32 %v1629, %v1741
      %1743 = vmatprep.mubr.bf16.mxu0 %v862
      %1744 = vmatmul.mubr.bf16.gmra.mrb[0].mxu0 %v861
      %v1745 = vpop.f32.mrb[0].mxu0
      %v1746 = vadd.f32 %v1633, %v1745
      %v1747 = vpop.f32.mrb[0].mxu0
      %v1748 = vadd.f32 %v1635, %v1747
      %v1749 = vpop.f32.mrb[0].mxu0
      %v1750 = vadd.f32 %v1637, %v1749
      %v1751 = vpop.f32.mrb[0].mxu0
      %v1752 = vadd.f32 %v1639, %v1751
      %1753 = vmatprep.mubr.bf16.mxu0 %v869
      %1754 = vmatmul.mubr.bf16.gmra.mrb[0].mxu0 %v868
      %v1755 = vpop.f32.mrb[0].mxu0
      %v1756 = vadd.f32 %v1643, %v1755
      %v1757 = vpop.f32.mrb[0].mxu0
      %v1758 = vadd.f32 %v1645, %v1757
      %v1759 = vpop.f32.mrb[0].mxu0
      %v1760 = vadd.f32 %v1647, %v1759
      %v1761 = vpop.f32.mrb[0].mxu0
      %v1762 = vadd.f32 %v1649, %v1761
      %1763 = vmatprep.mubr.bf16.mxu0 %v876
      %1764 = vmatmul.mubr.bf16.gmra.mrb[0].mxu0 %v875
      %v1765 = vpop.f32.mrb[0].mxu0
      %v1766 = vadd.f32 %v1653, %v1765
      %v1767 = vpop.f32.mrb[0].mxu0
      %v1768 = vadd.f32 %v1655, %v1767
      %v1769 = vpop.f32.mrb[0].mxu0
      %v1770 = vadd.f32 %v1657, %v1769
      %v1771 = vpop.f32.mrb[0].mxu0
      %v1772 = vadd.f32 %v1659, %v1771
      %1773 = vmatprep.mubr.bf16.mxu0 %v883
      %1774 = vmatmul.mubr.bf16.gmra.mrb[0].mxu0 %v882
      %v1775 = vpop.f32.mrb[0].mxu0
      %v1776 = vadd.f32 %v1663, %v1775
      %v1777 = vpop.f32.mrb[0].mxu0
      %v1778 = vadd.f32 %v1665, %v1777
      %v1779 = vpop.f32.mrb[0].mxu0
      %v1780 = vadd.f32 %v1667, %v1779
      %v1781 = vpop.f32.mrb[0].mxu0
      %v1782 = vadd.f32 %v1669, %v1781
      %1783 = vmatprep.mubr.bf16.mxu0 %v890
      %1784 = vmatmul.mubr.bf16.gmra.mrb[0].mxu0 %v889
      %v1785 = vpop.f32.mrb[0].mxu0
      %v1786 = vadd.f32 %v1673, %v1785
      %v1787 = vpop.f32.mrb[0].mxu0
      %v1788 = vadd.f32 %v1675, %v1787
      %v1789 = vpop.f32.mrb[0].mxu0
      %v1790 = vadd.f32 %v1677, %v1789
      %v1791 = vpop.f32.mrb[0].mxu0
      %v1792 = vadd.f32 %v1679, %v1791
      %1793 = vdwg.mxu0
      %1794 = vmatprep.subr.bf16.mxu0 %v1331
      %1795 = vmatpush1.bf16.msra.mxu0 %v1330
      %1796 = vmatprep.subr.bf16.mxu0 0
      %1797 = vmatpush1.bf16.msra.mxu0 0
      %1798 = vmatprep.subr.bf16.mxu0 0
      %1799 = vmatpush1.bf16.msra.mxu0 0
      %1800 = vmatprep.subr.bf16.mxu0 0
      %1801 = vmatpush1.bf16.msra.mxu0 0
      %1802 = vmatprep.subr.bf16.mxu0 0
      %1803 = vmatpush1.bf16.msra.mxu0 0
      %1804 = vmatprep.subr.bf16.mxu0 0
      %1805 = vmatpush1.bf16.msra.mxu0 0
      %1806 = vmatprep.subr.bf16.mxu0 0
      %1807 = vmatpush1.bf16.msra.mxu0 0
      %1808 = vmatprep.subr.bf16.mxu0 0
      %1809 = vmatpush1.bf16.msra.mxu0 0
      %1810 = vmatprep.subr.bf16.mxu0 0
      %1811 = vmatpush1.bf16.msra.mxu0 0
      %1812 = vmatprep.subr.bf16.mxu0 0
      %1813 = vmatpush1.bf16.msra.mxu0 0
      %1814 = vmatprep.subr.bf16.mxu0 0
      %1815 = vmatpush1.bf16.msra.mxu0 0
      %1816 = vmatprep.subr.bf16.mxu0 0
      %1817 = vmatpush1.bf16.msra.mxu0 0
      %1818 = vmatprep.subr.bf16.mxu0 0
      %1819 = vmatpush1.bf16.msra.mxu0 0
      %1820 = vmatprep.subr.bf16.mxu0 0
      %1821 = vmatpush1.bf16.msra.mxu0 0
      %1822 = vmatprep.subr.bf16.mxu0 0
      %1823 = vmatpush1.bf16.msra.mxu0 0
      %1824 = vmatprep.subr.bf16.mxu0 0
      %1825 = vmatpush1.bf16.msra.mxu0 0
      %1826 = vmatprep.mubr.bf16.mxu0 0
      %1827 = vmatmul.mubr.bf16.gmra.mrb[0].mxu0 %v1432
      %v1828 = vpop.f32.mrb[0].mxu0
      %v1829 = vadd.f32 %v1716, %v1828
      %v1830 = vpop.f32.mrb[0].mxu0
      %v1831 = vadd.f32 %v1718, %v1830
      %v1832 = vpop.f32.mrb[0].mxu0
      %v1833 = vadd.f32 %v1720, %v1832
      %v1834 = vpop.f32.mrb[0].mxu0
      %v1835 = vadd.f32 %v1722, %v1834
      %1836 = vmatprep.mubr.bf16.mxu0 0
      %1837 = vmatmul.mubr.bf16.gmra.mrb[0].mxu0 %v1435
      %v1838 = vpop.f32.mrb[0].mxu0
      %v1839 = vadd.f32 %v1726, %v1838
      %v1840 = vpop.f32.mrb[0].mxu0
      %v1841 = vadd.f32 %v1728, %v1840
      %v1842 = vpop.f32.mrb[0].mxu0
      %v1843 = vadd.f32 %v1730, %v1842
      %v1844 = vpop.f32.mrb[0].mxu0
      %v1845 = vadd.f32 %v1732, %v1844
      %1846 = vmatprep.mubr.bf16.mxu0 0
      %1847 = vmatmul.mubr.bf16.gmra.mrb[0].mxu0 %v1438
      %v1848 = vpop.f32.mrb[0].mxu0
      %v1849 = vadd.f32 %v1736, %v1848
      %v1850 = vpop.f32.mrb[0].mxu0
      %v1851 = vadd.f32 %v1738, %v1850
      %v1852 = vpop.f32.mrb[0].mxu0
      %v1853 = vadd.f32 %v1740, %v1852
      %v1854 = vpop.f32.mrb[0].mxu0
      %v1855 = vadd.f32 %v1742, %v1854
      %1856 = vmatprep.mubr.bf16.mxu0 0
      %1857 = vmatmul.mubr.bf16.gmra.mrb[0].mxu0 %v1441
      %v1858 = vpop.f32.mrb[0].mxu0
      %v1859 = vadd.f32 %v1746, %v1858
      %v1860 = vpop.f32.mrb[0].mxu0
      %v1861 = vadd.f32 %v1748, %v1860
      %v1862 = vpop.f32.mrb[0].mxu0
      %v1863 = vadd.f32 %v1750, %v1862
      %v1864 = vpop.f32.mrb[0].mxu0
      %v1865 = vadd.f32 %v1752, %v1864
      %1866 = vmatprep.mubr.bf16.mxu0 0
      %1867 = vmatmul.mubr.bf16.gmra.mrb[0].mxu0 %v1444
      %v1868 = vpop.f32.mrb[0].mxu0
      %v1869 = vadd.f32 %v1756, %v1868
      %v1870 = vpop.f32.mrb[0].mxu0
      %v1871 = vadd.f32 %v1758, %v1870
      %v1872 = vpop.f32.mrb[0].mxu0
      %v1873 = vadd.f32 %v1760, %v1872
      %v1874 = vpop.f32.mrb[0].mxu0
      %v1875 = vadd.f32 %v1762, %v1874
      %1876 = vmatprep.mubr.bf16.mxu0 0
      %1877 = vmatmul.mubr.bf16.gmra.mrb[0].mxu0 %v1447
      %v1878 = vpop.f32.mrb[0].mxu0
      %v1879 = vadd.f32 %v1766, %v1878
      %v1880 = vpop.f32.mrb[0].mxu0
      %v1881 = vadd.f32 %v1768, %v1880
      %v1882 = vpop.f32.mrb[0].mxu0
      %v1883 = vadd.f32 %v1770, %v1882
      %v1884 = vpop.f32.mrb[0].mxu0
      %v1885 = vadd.f32 %v1772, %v1884
      %1886 = vmatprep.mubr.bf16.mxu0 0
      %1887 = vmatmul.mubr.bf16.gmra.mrb[0].mxu0 %v1450
      %v1888 = vpop.f32.mrb[0].mxu0
      %v1889 = vadd.f32 %v1776, %v1888
      %v1890 = vpop.f32.mrb[0].mxu0
      %v1891 = vadd.f32 %v1778, %v1890
      %v1892 = vpop.f32.mrb[0].mxu0
      %v1893 = vadd.f32 %v1780, %v1892
      %v1894 = vpop.f32.mrb[0].mxu0
      %v1895 = vadd.f32 %v1782, %v1894
      %1896 = vmatprep.mubr.bf16.mxu0 0
      %1897 = vmatmul.mubr.bf16.gmra.mrb[0].mxu0 %v1453
      %v1898 = vpop.f32.mrb[0].mxu0
      %v1899 = vadd.f32 %v1786, %v1898
      %v1900 = vpop.f32.mrb[0].mxu0
      %v1901 = vadd.f32 %v1788, %v1900
      %v1902 = vpop.f32.mrb[0].mxu0
      %v1903 = vadd.f32 %v1790, %v1902
      %v1904 = vpop.f32.mrb[0].mxu0
      %v1905 = vadd.f32 %v1792, %v1904
      %1906 = vdwg.mxu0
      %v1907 = vmax.f32 %v1829, 0.0
      %v1908 = vmax.f32 %v1831, 0.0
      %v1909 = vmax.f32 %v1833, 0.0
      %v1910 = vmax.f32 %v1835, 0.0
      %v1911 = vmax.f32 %v1839, 0.0
      %v1912 = vmax.f32 %v1841, 0.0
      %v1913 = vmax.f32 %v1843, 0.0
      %v1914 = vmax.f32 %v1845, 0.0
      %v1915 = vmax.f32 %v1849, 0.0
      %v1916 = vmax.f32 %v1851, 0.0
      %v1917 = vmax.f32 %v1853, 0.0
      %v1918 = vmax.f32 %v1855, 0.0
      %v1919 = vmax.f32 %v1859, 0.0
      %v1920 = vmax.f32 %v1861, 0.0
      %v1921 = vmax.f32 %v1863, 0.0
      %v1922 = vmax.f32 %v1865, 0.0
      %v1923 = vmax.f32 %v1869, 0.0
      %v1924 = vmax.f32 %v1871, 0.0
      %v1925 = vmax.f32 %v1873, 0.0
      %v1926 = vmax.f32 %v1875, 0.0
      %v1927 = vmax.f32 %v1879, 0.0
      %v1928 = vmax.f32 %v1881, 0.0
      %v1929 = vmax.f32 %v1883, 0.0
      %v1930 = vmax.f32 %v1885, 0.0
      %v1931 = vmax.f32 %v1889, 0.0
      %v1932 = vmax.f32 %v1891, 0.0
      %v1933 = vmax.f32 %v1893, 0.0
      %v1934 = vmax.f32 %v1895, 0.0
      %v1935 = vmax.f32 %v1899, 0.0
      %v1936 = vmax.f32 %v1901, 0.0
      %v1937 = vmax.f32 %v1903, 0.0
      %v1938 = vmax.f32 %v1905, 0.0
      %v1939 = vpack.c.bf16 %v1909, %v1907
      %v1940 = vpack.c.bf16 %v1910, %v1908
      %v1941 = vpack.c.bf16 %v1913, %v1911
      %v1942 = vpack.c.bf16 %v1914, %v1912
      %v1943 = vpack.c.bf16 %v1917, %v1915
      %v1944 = vpack.c.bf16 %v1918, %v1916
      %v1945 = vpack.c.bf16 %v1921, %v1919
      %v1946 = vpack.c.bf16 %v1922, %v1920
      %v1947 = vpack.c.bf16 %v1925, %v1923
      %v1948 = vpack.c.bf16 %v1926, %v1924
      %v1949 = vpack.c.bf16 %v1929, %v1927
      %v1950 = vpack.c.bf16 %v1930, %v1928
      %v1951 = vpack.c.bf16 %v1933, %v1931
      %v1952 = vpack.c.bf16 %v1934, %v1932
      %v1953 = vpack.c.bf16 %v1937, %v1935
      %v1954 = vpack.c.bf16 %v1938, %v1936
      %v1955 = vld [vmem:[%s3] sm:$0xff]
      %v1956 = vld [vmem:[%s3 + $0x8] sm:$0xff]
      %v1957 = vld [vmem:[%s3 + $0x10] sm:$0xff]
      %v1958 = vld [vmem:[%s3 + $0x18] sm:$0xff]
      %v1959 = vld [vmem:[%s3 + $0x20] sm:$0xff]
      %v1960 = vld [vmem:[%s3 + $0x28] sm:$0xff]
      %v1961 = vld [vmem:[%s3 + $0x30] sm:$0xff]
      %v1962 = vld [vmem:[%s3 + $0x38] sm:$0xff]
      %v1963 = vld [vmem:[%s3 + $0x40] sm:$0xff]
      %v1964 = vld [vmem:[%s3 + $0x48] sm:$0xff]
      %v1965 = vld [vmem:[%s3 + $0x50] sm:$0xff]
      %v1966 = vld [vmem:[%s3 + $0x58] sm:$0xff]
      %v1967 = vld [vmem:[%s3 + $0x60] sm:$0xff]
      %v1968 = vld [vmem:[%s3 + $0x68] sm:$0xff]
      %v1969 = vld [vmem:[%s3 + $0x70] sm:$0xff]
      %v1970 = vld [vmem:[%s3 + $0x78] sm:$0xff]
      %v1971 = vld [vmem:[%s3 + $0x80] sm:$0xff]
      %v1972 = vld [vmem:[%s3 + $0x88] sm:$0xff]
      %v1973 = vld [vmem:[%s3 + $0x90] sm:$0xff]
      %v1974 = vld [vmem:[%s3 + $0x98] sm:$0xff]
      %v1975 = vld [vmem:[%s3 + $0xa0] sm:$0xff]
      %v1976 = vld [vmem:[%s3 + $0xa8] sm:$0xff]
      %v1977 = vld [vmem:[%s3 + $0xb0] sm:$0xff]
      %v1978 = vld [vmem:[%s3 + $0xb8] sm:$0xff]
      %v1979 = vld [vmem:[%s3 + $0xc0] sm:$0xff]
      %v1980 = vld [vmem:[%s3 + $0xc8] sm:$0xff]
      %v1981 = vld [vmem:[%s3 + $0xd0] sm:$0xff]
      %v1982 = vld [vmem:[%s3 + $0xd8] sm:$0xff]
      %v1983 = vld [vmem:[%s3 + $0xe0] sm:$0xff]
      %v1984 = vld [vmem:[%s3 + $0xe8] sm:$0xff]
      %v1985 = vld [vmem:[%s3 + $0xf0] sm:$0xff]
      %v1986 = vld [vmem:[%s3 + $0xf8] sm:$0xff]
      %v1987 = vld [vmem:[%s3 + $0x100] sm:$0xff]
      %v1988 = vld [vmem:[%s3 + $0x108] sm:$0xff]
      %v1989 = vld [vmem:[%s3 + $0x110] sm:$0xff]
      %v1990 = vld [vmem:[%s3 + $0x118] sm:$0xff]
      %v1991 = vld [vmem:[%s3 + $0x120] sm:$0xff]
      %v1992 = vld [vmem:[%s3 + $0x128] sm:$0xff]
      %v1993 = vld [vmem:[%s3 + $0x130] sm:$0xff]
      %v1994 = vld [vmem:[%s3 + $0x138] sm:$0xff]
      %v1995 = vld [vmem:[%s3 + $0x140] sm:$0xff]
      %v1996 = vld [vmem:[%s3 + $0x148] sm:$0xff]
      %v1997 = vld [vmem:[%s3 + $0x150] sm:$0xff]
      %v1998 = vld [vmem:[%s3 + $0x158] sm:$0xff]
      %v1999 = vld [vmem:[%s3 + $0x160] sm:$0xff]
      %v2000 = vld [vmem:[%s3 + $0x168] sm:$0xff]
      %v2001 = vld [vmem:[%s3 + $0x170] sm:$0xff]
      %v2002 = vld [vmem:[%s3 + $0x178] sm:$0xff]
      %v2003 = vld [vmem:[%s3 + $0x180] sm:$0xff]
      %v2004 = vld [vmem:[%s3 + $0x188] sm:$0xff]
      %v2005 = vld [vmem:[%s3 + $0x190] sm:$0xff]
      %v2006 = vld [vmem:[%s3 + $0x198] sm:$0xff]
      %v2007 = vld [vmem:[%s3 + $0x1a0] sm:$0xff]
      %v2008 = vld [vmem:[%s3 + $0x1a8] sm:$0xff]
      %v2009 = vld [vmem:[%s3 + $0x1b0] sm:$0xff]
      %v2010 = vld [vmem:[%s3 + $0x1b8] sm:$0xff]
      %v2011 = vld [vmem:[%s3 + $0x1c0] sm:$0xff]
      %v2012 = vld [vmem:[%s3 + $0x1c8] sm:$0xff]
      %v2013 = vld [vmem:[%s3 + $0x1d0] sm:$0xff]
      %v2014 = vld [vmem:[%s3 + $0x1d8] sm:$0xff]
      %v2015 = vld [vmem:[%s3 + $0x1e0] sm:$0xff]
      %v2016 = vld [vmem:[%s3 + $0x1e8] sm:$0xff]
      %v2017 = vld [vmem:[%s3 + $0x1f0] sm:$0xff]
      %v2018 = vld [vmem:[%s3 + $0x1f8] sm:$0xff]
      %v2019 = vld [vmem:[%s4] sm:$0xf]
      %v2021 = vlaneseq
      %v2022 = vshrl.u32 %v2021, 7
      %v2023 = vsub.s32 0, %v2022
      %v2024 = vrot.slane %v2019, %v2023
      %v2025 = vlaneseq
      %v2026 = vshrl.u32 %v2025, 7
      %v2027 = vsub.s32 1, %v2026
      %v2028 = vrot.slane %v2019, %v2027
      %v2029 = vlaneseq
      %v2030 = vshrl.u32 %v2029, 7
      %v2031 = vsub.s32 2, %v2030
      %v2032 = vrot.slane %v2019, %v2031
      %v2033 = vlaneseq
      %v2034 = vshrl.u32 %v2033, 7
      %v2035 = vsub.s32 3, %v2034
      %v2036 = vrot.slane %v2019, %v2035
      %v2105 = vunpack.c.l.b16 %v1955
      %v2106 = vunpack.c.h.b16 %v1955
      %v2107 = vunpack.c.l.b16 %v1956
      %v2108 = vunpack.c.h.b16 %v1956
      %v2109 = vunpack.c.l.b16 %v1957
      %v2110 = vunpack.c.h.b16 %v1957
      %v2111 = vunpack.c.l.b16 %v1958
      %v2112 = vunpack.c.h.b16 %v1958
      %v2113 = vunpack.c.l.b16 %v1959
      %v2114 = vunpack.c.h.b16 %v1959
      %v2115 = vunpack.c.l.b16 %v1960
      %v2116 = vunpack.c.h.b16 %v1960
      %v2117 = vunpack.c.l.b16 %v1961
      %v2118 = vunpack.c.h.b16 %v1961
      %v2119 = vunpack.c.l.b16 %v1962
      %v2120 = vunpack.c.h.b16 %v1962
      %v2121 = vunpack.c.l.b16 %v1963
      %v2122 = vunpack.c.h.b16 %v1963
      %v2123 = vunpack.c.l.b16 %v1964
      %v2124 = vunpack.c.h.b16 %v1964
      %v2125 = vunpack.c.l.b16 %v1965
      %v2126 = vunpack.c.h.b16 %v1965
      %v2127 = vunpack.c.l.b16 %v1966
      %v2128 = vunpack.c.h.b16 %v1966
      %v2129 = vunpack.c.l.b16 %v1967
      %v2130 = vunpack.c.h.b16 %v1967
      %v2131 = vunpack.c.l.b16 %v1968
      %v2132 = vunpack.c.h.b16 %v1968
      %v2133 = vunpack.c.l.b16 %v1969
      %v2134 = vunpack.c.h.b16 %v1969
      %v2135 = vunpack.c.l.b16 %v1970
      %v2136 = vunpack.c.h.b16 %v1970
      %v2137 = vunpack.c.l.b16 %v1971
      %v2138 = vunpack.c.h.b16 %v1971
      %v2139 = vunpack.c.l.b16 %v1972
      %v2140 = vunpack.c.h.b16 %v1972
      %v2141 = vunpack.c.l.b16 %v1973
      %v2142 = vunpack.c.h.b16 %v1973
      %v2143 = vunpack.c.l.b16 %v1974
      %v2144 = vunpack.c.h.b16 %v1974
      %v2145 = vunpack.c.l.b16 %v1975
      %v2146 = vunpack.c.h.b16 %v1975
      %v2147 = vunpack.c.l.b16 %v1976
      %v2148 = vunpack.c.h.b16 %v1976
      %v2149 = vunpack.c.l.b16 %v1977
      %v2150 = vunpack.c.h.b16 %v1977
      %v2151 = vunpack.c.l.b16 %v1978
      %v2152 = vunpack.c.h.b16 %v1978
      %v2153 = vunpack.c.l.b16 %v1979
      %v2154 = vunpack.c.h.b16 %v1979
      %v2155 = vunpack.c.l.b16 %v1980
      %v2156 = vunpack.c.h.b16 %v1980
      %v2157 = vunpack.c.l.b16 %v1981
      %v2158 = vunpack.c.h.b16 %v1981
      %v2159 = vunpack.c.l.b16 %v1982
      %v2160 = vunpack.c.h.b16 %v1982
      %v2161 = vunpack.c.l.b16 %v1983
      %v2162 = vunpack.c.h.b16 %v1983
      %v2163 = vunpack.c.l.b16 %v1984
      %v2164 = vunpack.c.h.b16 %v1984
      %v2165 = vunpack.c.l.b16 %v1985
      %v2166 = vunpack.c.h.b16 %v1985
      %v2167 = vunpack.c.l.b16 %v1986
      %v2168 = vunpack.c.h.b16 %v1986
      %v2169 = vunpack.c.l.b16 %v1987
      %v2170 = vunpack.c.h.b16 %v1987
      %v2171 = vunpack.c.l.b16 %v1988
      %v2172 = vunpack.c.h.b16 %v1988
      %v2173 = vunpack.c.l.b16 %v1989
      %v2174 = vunpack.c.h.b16 %v1989
      %v2175 = vunpack.c.l.b16 %v1990
      %v2176 = vunpack.c.h.b16 %v1990
      %v2177 = vunpack.c.l.b16 %v1991
      %v2178 = vunpack.c.h.b16 %v1991
      %v2179 = vunpack.c.l.b16 %v1992
      %v2180 = vunpack.c.h.b16 %v1992
      %v2181 = vunpack.c.l.b16 %v1993
      %v2182 = vunpack.c.h.b16 %v1993
      %v2183 = vunpack.c.l.b16 %v1994
      %v2184 = vunpack.c.h.b16 %v1994
      %v2185 = vunpack.c.l.b16 %v1995
      %v2186 = vunpack.c.h.b16 %v1995
      %v2187 = vunpack.c.l.b16 %v1996
      %v2188 = vunpack.c.h.b16 %v1996
      %v2189 = vunpack.c.l.b16 %v1997
      %v2190 = vunpack.c.h.b16 %v1997
      %v2191 = vunpack.c.l.b16 %v1998
      %v2192 = vunpack.c.h.b16 %v1998
      %v2193 = vunpack.c.l.b16 %v1999
      %v2194 = vunpack.c.h.b16 %v1999
      %v2195 = vunpack.c.l.b16 %v2000
      %v2196 = vunpack.c.h.b16 %v2000
      %v2197 = vunpack.c.l.b16 %v2001
      %v2198 = vunpack.c.h.b16 %v2001
      %v2199 = vunpack.c.l.b16 %v2002
      %v2200 = vunpack.c.h.b16 %v2002
      %v2201 = vunpack.c.l.b16 %v2003
      %v2202 = vunpack.c.h.b16 %v2003
      %v2203 = vunpack.c.l.b16 %v2004
      %v2204 = vunpack.c.h.b16 %v2004
      %v2205 = vunpack.c.l.b16 %v2005
      %v2206 = vunpack.c.h.b16 %v2005
      %v2207 = vunpack.c.l.b16 %v2006
      %v2208 = vunpack.c.h.b16 %v2006
      %v2209 = vunpack.c.l.b16 %v2007
      %v2210 = vunpack.c.h.b16 %v2007
      %v2211 = vunpack.c.l.b16 %v2008
      %v2212 = vunpack.c.h.b16 %v2008
      %v2213 = vunpack.c.l.b16 %v2009
      %v2214 = vunpack.c.h.b16 %v2009
      %v2215 = vunpack.c.l.b16 %v2010
      %v2216 = vunpack.c.h.b16 %v2010
      %v2217 = vunpack.c.l.b16 %v2011
      %v2218 = vunpack.c.h.b16 %v2011
      %v2219 = vunpack.c.l.b16 %v2012
      %v2220 = vunpack.c.h.b16 %v2012
      %v2221 = vunpack.c.l.b16 %v2013
      %v2222 = vunpack.c.h.b16 %v2013
      %v2223 = vunpack.c.l.b16 %v2014
      %v2224 = vunpack.c.h.b16 %v2014
      %v2225 = vunpack.c.l.b16 %v2015
      %v2226 = vunpack.c.h.b16 %v2015
      %v2227 = vunpack.c.l.b16 %v2016
      %v2228 = vunpack.c.h.b16 %v2016
      %v2229 = vunpack.c.l.b16 %v2017
      %v2230 = vunpack.c.h.b16 %v2017
      %v2231 = vunpack.c.l.b16 %v2018
      %v2232 = vunpack.c.h.b16 %v2018
      %v2233 = vpack.c.b16 %v2109, %v2105
      %v2234 = vpack.c.b16 %v2110, %v2106
      %v2235 = vpack.c.b16 %v2111, %v2107
      %v2236 = vpack.c.b16 %v2112, %v2108
      %v2237 = vpack.c.b16 %v2117, %v2113
      %v2238 = vpack.c.b16 %v2118, %v2114
      %v2239 = vpack.c.b16 %v2119, %v2115
      %v2240 = vpack.c.b16 %v2120, %v2116
      %v2241 = vpack.c.b16 %v2125, %v2121
      %v2242 = vpack.c.b16 %v2126, %v2122
      %v2243 = vpack.c.b16 %v2127, %v2123
      %v2244 = vpack.c.b16 %v2128, %v2124
      %v2245 = vpack.c.b16 %v2133, %v2129
      %v2246 = vpack.c.b16 %v2134, %v2130
      %v2247 = vpack.c.b16 %v2135, %v2131
      %v2248 = vpack.c.b16 %v2136, %v2132
      %v2249 = vpack.c.b16 %v2141, %v2137
      %v2250 = vpack.c.b16 %v2142, %v2138
      %v2251 = vpack.c.b16 %v2143, %v2139
      %v2252 = vpack.c.b16 %v2144, %v2140
      %v2253 = vpack.c.b16 %v2149, %v2145
      %v2254 = vpack.c.b16 %v2150, %v2146
      %v2255 = vpack.c.b16 %v2151, %v2147
      %v2256 = vpack.c.b16 %v2152, %v2148
      %v2257 = vpack.c.b16 %v2157, %v2153
      %v2258 = vpack.c.b16 %v2158, %v2154
      %v2259 = vpack.c.b16 %v2159, %v2155
      %v2260 = vpack.c.b16 %v2160, %v2156
      %v2261 = vpack.c.b16 %v2165, %v2161
      %v2262 = vpack.c.b16 %v2166, %v2162
      %v2263 = vpack.c.b16 %v2167, %v2163
      %v2264 = vpack.c.b16 %v2168, %v2164
      %v2265 = vpack.c.b16 %v2173, %v2169
      %v2266 = vpack.c.b16 %v2174, %v2170
      %v2267 = vpack.c.b16 %v2175, %v2171
      %v2268 = vpack.c.b16 %v2176, %v2172
      %v2269 = vpack.c.b16 %v2181, %v2177
      %v2270 = vpack.c.b16 %v2182, %v2178
      %v2271 = vpack.c.b16 %v2183, %v2179
      %v2272 = vpack.c.b16 %v2184, %v2180
      %v2273 = vpack.c.b16 %v2189, %v2185
      %v2274 = vpack.c.b16 %v2190, %v2186
      %v2275 = vpack.c.b16 %v2191, %v2187
      %v2276 = vpack.c.b16 %v2192, %v2188
      %v2277 = vpack.c.b16 %v2197, %v2193
      %v2278 = vpack.c.b16 %v2198, %v2194
      %v2279 = vpack.c.b16 %v2199, %v2195
      %v2280 = vpack.c.b16 %v2200, %v2196
      %v2281 = vpack.c.b16 %v2205, %v2201
      %v2282 = vpack.c.b16 %v2206, %v2202
      %v2283 = vpack.c.b16 %v2207, %v2203
      %v2284 = vpack.c.b16 %v2208, %v2204
      %v2285 = vpack.c.b16 %v2213, %v2209
      %v2286 = vpack.c.b16 %v2214, %v2210
      %v2287 = vpack.c.b16 %v2215, %v2211
      %v2288 = vpack.c.b16 %v2216, %v2212
      %v2289 = vpack.c.b16 %v2221, %v2217
      %v2290 = vpack.c.b16 %v2222, %v2218
      %v2291 = vpack.c.b16 %v2223, %v2219
      %v2292 = vpack.c.b16 %v2224, %v2220
      %v2293 = vpack.c.b16 %v2229, %v2225
      %v2294 = vpack.c.b16 %v2230, %v2226
      %v2295 = vpack.c.b16 %v2231, %v2227
      %v2296 = vpack.c.b16 %v2232, %v2228
      %2361 = vmatprep.subr.bf16.mxu0 %v2234
      %2362 = vmatpush1.bf16.msra.mxu0 %v2233
      %2363 = vmatprep.subr.bf16.mxu0 %v2238
      %2364 = vmatpush1.bf16.msra.mxu0 %v2237
      %2365 = vmatprep.subr.bf16.mxu0 %v2242
      %2366 = vmatpush1.bf16.msra.mxu0 %v2241
      %2367 = vmatprep.subr.bf16.mxu0 %v2246
      %2368 = vmatpush1.bf16.msra.mxu0 %v2245
      %2369 = vmatprep.subr.bf16.mxu0 %v2250
      %2370 = vmatpush1.bf16.msra.mxu0 %v2249
      %2371 = vmatprep.subr.bf16.mxu0 %v2254
      %2372 = vmatpush1.bf16.msra.mxu0 %v2253
      %2373 = vmatprep.subr.bf16.mxu0 %v2258
      %2374 = vmatpush1.bf16.msra.mxu0 %v2257
      %2375 = vmatprep.subr.bf16.mxu0 %v2262
      %2376 = vmatpush1.bf16.msra.mxu0 %v2261
      %2377 = vmatprep.subr.bf16.mxu0 %v2266
      %2378 = vmatpush1.bf16.msra.mxu0 %v2265
      %2379 = vmatprep.subr.bf16.mxu0 %v2270
      %2380 = vmatpush1.bf16.msra.mxu0 %v2269
      %2381 = vmatprep.subr.bf16.mxu0 %v2274
      %2382 = vmatpush1.bf16.msra.mxu0 %v2273
      %2383 = vmatprep.subr.bf16.mxu0 %v2278
      %2384 = vmatpush1.bf16.msra.mxu0 %v2277
      %2385 = vmatprep.subr.bf16.mxu0 %v2282
      %2386 = vmatpush1.bf16.msra.mxu0 %v2281
      %2387 = vmatprep.subr.bf16.mxu0 %v2286
      %2388 = vmatpush1.bf16.msra.mxu0 %v2285
      %2389 = vmatprep.subr.bf16.mxu0 %v2290
      %2390 = vmatpush1.bf16.msra.mxu0 %v2289
      %2391 = vmatprep.subr.bf16.mxu0 %v2294
      %2392 = vmatpush1.bf16.msra.mxu0 %v2293
      %2393 = vmatprep.mubr.bf16.mxu0 %v1940
      %2394 = vmatmul.mubr.bf16.gmra.mrb[0].mxu0 %v1939
      %v2395 = vpop.f32.mrb[0].mxu0
      %v2396 = vadd.f32 %v2024, %v2395
      %v2397 = vpop.f32.mrb[0].mxu0
      %v2398 = vadd.f32 %v2028, %v2397
      %v2399 = vpop.f32.mrb[0].mxu0
      %v2400 = vadd.f32 %v2024, %v2399
      %v2401 = vpop.f32.mrb[0].mxu0
      %v2402 = vadd.f32 %v2028, %v2401
      %2403 = vmatprep.mubr.bf16.mxu0 %v1942
      %2404 = vmatmul.mubr.bf16.gmra.mrb[0].mxu0 %v1941
      %v2405 = vpop.f32.mrb[0].mxu0
      %v2406 = vadd.f32 %v2024, %v2405
      %v2407 = vpop.f32.mrb[0].mxu0
      %v2408 = vadd.f32 %v2028, %v2407
      %v2409 = vpop.f32.mrb[0].mxu0
      %v2410 = vadd.f32 %v2024, %v2409
      %v2411 = vpop.f32.mrb[0].mxu0
      %v2412 = vadd.f32 %v2028, %v2411
      %2413 = vmatprep.mubr.bf16.mxu0 %v1944
      %2414 = vmatmul.mubr.bf16.gmra.mrb[0].mxu0 %v1943
      %v2415 = vpop.f32.mrb[0].mxu0
      %v2416 = vadd.f32 %v2024, %v2415
      %v2417 = vpop.f32.mrb[0].mxu0
      %v2418 = vadd.f32 %v2028, %v2417
      %v2419 = vpop.f32.mrb[0].mxu0
      %v2420 = vadd.f32 %v2024, %v2419
      %v2421 = vpop.f32.mrb[0].mxu0
      %v2422 = vadd.f32 %v2028, %v2421
      %2423 = vmatprep.mubr.bf16.mxu0 %v1946
      %2424 = vmatmul.mubr.bf16.gmra.mrb[0].mxu0 %v1945
      %v2425 = vpop.f32.mrb[0].mxu0
      %v2426 = vadd.f32 %v2024, %v2425
      %v2427 = vpop.f32.mrb[0].mxu0
      %v2428 = vadd.f32 %v2028, %v2427
      %v2429 = vpop.f32.mrb[0].mxu0
      %v2430 = vadd.f32 %v2024, %v2429
      %v2431 = vpop.f32.mrb[0].mxu0
      %v2432 = vadd.f32 %v2028, %v2431
      %2433 = vmatprep.mubr.bf16.mxu0 %v1948
      %2434 = vmatmul.mubr.bf16.gmra.mrb[0].mxu0 %v1947
      %v2435 = vpop.f32.mrb[0].mxu0
      %v2436 = vadd.f32 %v2024, %v2435
      %v2437 = vpop.f32.mrb[0].mxu0
      %v2438 = vadd.f32 %v2028, %v2437
      %v2439 = vpop.f32.mrb[0].mxu0
      %v2440 = vadd.f32 %v2024, %v2439
      %v2441 = vpop.f32.mrb[0].mxu0
      %v2442 = vadd.f32 %v2028, %v2441
      %2443 = vmatprep.mubr.bf16.mxu0 %v1950
      %2444 = vmatmul.mubr.bf16.gmra.mrb[0].mxu0 %v1949
      %v2445 = vpop.f32.mrb[0].mxu0
      %v2446 = vadd.f32 %v2024, %v2445
      %v2447 = vpop.f32.mrb[0].mxu0
      %v2448 = vadd.f32 %v2028, %v2447
      %v2449 = vpop.f32.mrb[0].mxu0
      %v2450 = vadd.f32 %v2024, %v2449
      %v2451 = vpop.f32.mrb[0].mxu0
      %v2452 = vadd.f32 %v2028, %v2451
      %2453 = vmatprep.mubr.bf16.mxu0 %v1952
      %2454 = vmatmul.mubr.bf16.gmra.mrb[0].mxu0 %v1951
      %v2455 = vpop.f32.mrb[0].mxu0
      %v2456 = vadd.f32 %v2024, %v2455
      %v2457 = vpop.f32.mrb[0].mxu0
      %v2458 = vadd.f32 %v2028, %v2457
      %v2459 = vpop.f32.mrb[0].mxu0
      %v2460 = vadd.f32 %v2024, %v2459
      %v2461 = vpop.f32.mrb[0].mxu0
      %v2462 = vadd.f32 %v2028, %v2461
      %2463 = vmatprep.mubr.bf16.mxu0 %v1954
      %2464 = vmatmul.mubr.bf16.gmra.mrb[0].mxu0 %v1953
      %v2465 = vpop.f32.mrb[0].mxu0
      %v2466 = vadd.f32 %v2024, %v2465
      %v2467 = vpop.f32.mrb[0].mxu0
      %v2468 = vadd.f32 %v2028, %v2467
      %v2469 = vpop.f32.mrb[0].mxu0
      %v2470 = vadd.f32 %v2024, %v2469
      %v2471 = vpop.f32.mrb[0].mxu0
      %v2472 = vadd.f32 %v2028, %v2471
      %2473 = vdwg.mxu0
      %2474 = vmatprep.subr.bf16.mxu0 %v2236
      %2475 = vmatpush1.bf16.msra.mxu0 %v2235
      %2476 = vmatprep.subr.bf16.mxu0 %v2240
      %2477 = vmatpush1.bf16.msra.mxu0 %v2239
      %2478 = vmatprep.subr.bf16.mxu0 %v2244
      %2479 = vmatpush1.bf16.msra.mxu0 %v2243
      %2480 = vmatprep.subr.bf16.mxu0 %v2248
      %2481 = vmatpush1.bf16.msra.mxu0 %v2247
      %2482 = vmatprep.subr.bf16.mxu0 %v2252
      %2483 = vmatpush1.bf16.msra.mxu0 %v2251
      %2484 = vmatprep.subr.bf16.mxu0 %v2256
      %2485 = vmatpush1.bf16.msra.mxu0 %v2255
      %2486 = vmatprep.subr.bf16.mxu0 %v2260
      %2487 = vmatpush1.bf16.msra.mxu0 %v2259
      %2488 = vmatprep.subr.bf16.mxu0 %v2264
      %2489 = vmatpush1.bf16.msra.mxu0 %v2263
      %2490 = vmatprep.subr.bf16.mxu0 %v2268
      %2491 = vmatpush1.bf16.msra.mxu0 %v2267
      %2492 = vmatprep.subr.bf16.mxu0 %v2272
      %2493 = vmatpush1.bf16.msra.mxu0 %v2271
      %2494 = vmatprep.subr.bf16.mxu0 %v2276
      %2495 = vmatpush1.bf16.msra.mxu0 %v2275
      %2496 = vmatprep.subr.bf16.mxu0 %v2280
      %2497 = vmatpush1.bf16.msra.mxu0 %v2279
      %2498 = vmatprep.subr.bf16.mxu0 %v2284
      %2499 = vmatpush1.bf16.msra.mxu0 %v2283
      %2500 = vmatprep.subr.bf16.mxu0 %v2288
      %2501 = vmatpush1.bf16.msra.mxu0 %v2287
      %2502 = vmatprep.subr.bf16.mxu0 %v2292
      %2503 = vmatpush1.bf16.msra.mxu0 %v2291
      %2504 = vmatprep.subr.bf16.mxu0 %v2296
      %2505 = vmatpush1.bf16.msra.mxu0 %v2295
      %2506 = vmatprep.mubr.bf16.mxu0 %v1940
      %2507 = vmatmul.mubr.bf16.gmra.mrb[0].mxu0 %v1939
      %v2508 = vpop.f32.mrb[0].mxu0
      %v2509 = vadd.f32 %v2032, %v2508
      %v2510 = vpop.f32.mrb[0].mxu0
      %v2511 = vadd.f32 %v2036, %v2510
      %v2512 = vpop.f32.mrb[0].mxu0
      %v2513 = vadd.f32 %v2032, %v2512
      %v2514 = vpop.f32.mrb[0].mxu0
      %v2515 = vadd.f32 %v2036, %v2514
      %2516 = vmatprep.mubr.bf16.mxu0 %v1942
      %2517 = vmatmul.mubr.bf16.gmra.mrb[0].mxu0 %v1941
      %v2518 = vpop.f32.mrb[0].mxu0
      %v2519 = vadd.f32 %v2032, %v2518
      %v2520 = vpop.f32.mrb[0].mxu0
      %v2521 = vadd.f32 %v2036, %v2520
      %v2522 = vpop.f32.mrb[0].mxu0
      %v2523 = vadd.f32 %v2032, %v2522
      %v2524 = vpop.f32.mrb[0].mxu0
      %v2525 = vadd.f32 %v2036, %v2524
      %2526 = vmatprep.mubr.bf16.mxu0 %v1944
      %2527 = vmatmul.mubr.bf16.gmra.mrb[0].mxu0 %v1943
      %v2528 = vpop.f32.mrb[0].mxu0
      %v2529 = vadd.f32 %v2032, %v2528
      %v2530 = vpop.f32.mrb[0].mxu0
      %v2531 = vadd.f32 %v2036, %v2530
      %v2532 = vpop.f32.mrb[0].mxu0
      %v2533 = vadd.f32 %v2032, %v2532
      %v2534 = vpop.f32.mrb[0].mxu0
      %v2535 = vadd.f32 %v2036, %v2534
      %2536 = vmatprep.mubr.bf16.mxu0 %v1946
      %2537 = vmatmul.mubr.bf16.gmra.mrb[0].mxu0 %v1945
      %v2538 = vpop.f32.mrb[0].mxu0
      %v2539 = vadd.f32 %v2032, %v2538
      %v2540 = vpop.f32.mrb[0].mxu0
      %v2541 = vadd.f32 %v2036, %v2540
      %v2542 = vpop.f32.mrb[0].mxu0
      %v2543 = vadd.f32 %v2032, %v2542
      %v2544 = vpop.f32.mrb[0].mxu0
      %v2545 = vadd.f32 %v2036, %v2544
      %2546 = vmatprep.mubr.bf16.mxu0 %v1948
      %2547 = vmatmul.mubr.bf16.gmra.mrb[0].mxu0 %v1947
      %v2548 = vpop.f32.mrb[0].mxu0
      %v2549 = vadd.f32 %v2032, %v2548
      %v2550 = vpop.f32.mrb[0].mxu0
      %v2551 = vadd.f32 %v2036, %v2550
      %v2552 = vpop.f32.mrb[0].mxu0
      %v2553 = vadd.f32 %v2032, %v2552
      %v2554 = vpop.f32.mrb[0].mxu0
      %v2555 = vadd.f32 %v2036, %v2554
      %2556 = vmatprep.mubr.bf16.mxu0 %v1950
      %2557 = vmatmul.mubr.bf16.gmra.mrb[0].mxu0 %v1949
      %v2558 = vpop.f32.mrb[0].mxu0
      %v2559 = vadd.f32 %v2032, %v2558
      %v2560 = vpop.f32.mrb[0].mxu0
      %v2561 = vadd.f32 %v2036, %v2560
      %v2562 = vpop.f32.mrb[0].mxu0
      %v2563 = vadd.f32 %v2032, %v2562
      %v2564 = vpop.f32.mrb[0].mxu0
      %v2565 = vadd.f32 %v2036, %v2564
      %2566 = vmatprep.mubr.bf16.mxu0 %v1952
      %2567 = vmatmul.mubr.bf16.gmra.mrb[0].mxu0 %v1951
      %v2568 = vpop.f32.mrb[0].mxu0
      %v2569 = vadd.f32 %v2032, %v2568
      %v2570 = vpop.f32.mrb[0].mxu0
      %v2571 = vadd.f32 %v2036, %v2570
      %v2572 = vpop.f32.mrb[0].mxu0
      %v2573 = vadd.f32 %v2032, %v2572
      %v2574 = vpop.f32.mrb[0].mxu0
      %v2575 = vadd.f32 %v2036, %v2574
      %2576 = vmatprep.mubr.bf16.mxu0 %v1954
      %2577 = vmatmul.mubr.bf16.gmra.mrb[0].mxu0 %v1953
      %v2578 = vpop.f32.mrb[0].mxu0
      %v2579 = vadd.f32 %v2032, %v2578
      %v2580 = vpop.f32.mrb[0].mxu0
      %v2581 = vadd.f32 %v2036, %v2580
      %v2582 = vpop.f32.mrb[0].mxu0
      %v2583 = vadd.f32 %v2032, %v2582
      %v2584 = vpop.f32.mrb[0].mxu0
      %v2585 = vadd.f32 %v2036, %v2584
      %2586 = vdwg.mxu0
      %v2587 = vtanh.pop %v2396
      %v2588 = vtanh.pop %v2398
      %v2589 = vtanh.pop %v2509
      %v2590 = vtanh.pop %v2511
      %v2591 = vtanh.pop %v2400
      %v2592 = vtanh.pop %v2402
      %v2593 = vtanh.pop %v2513
      %v2594 = vtanh.pop %v2515
      %v2595 = vtanh.pop %v2406
      %v2596 = vtanh.pop %v2408
      %v2597 = vtanh.pop %v2519
      %v2598 = vtanh.pop %v2521
      %v2599 = vtanh.pop %v2410
      %v2600 = vtanh.pop %v2412
      %v2601 = vtanh.pop %v2523
      %v2602 = vtanh.pop %v2525
      %v2603 = vtanh.pop %v2416
      %v2604 = vtanh.pop %v2418
      %v2605 = vtanh.pop %v2529
      %v2606 = vtanh.pop %v2531
      %v2607 = vtanh.pop %v2420
      %v2608 = vtanh.pop %v2422
      %v2609 = vtanh.pop %v2533
      %v2610 = vtanh.pop %v2535
      %v2611 = vtanh.pop %v2426
      %v2612 = vtanh.pop %v2428
      %v2613 = vtanh.pop %v2539
      %v2614 = vtanh.pop %v2541
      %v2615 = vtanh.pop %v2430
      %v2616 = vtanh.pop %v2432
      %v2617 = vtanh.pop %v2543
      %v2618 = vtanh.pop %v2545
      %v2619 = vtanh.pop %v2436
      %v2620 = vtanh.pop %v2438
      %v2621 = vtanh.pop %v2549
      %v2622 = vtanh.pop %v2551
      %v2623 = vtanh.pop %v2440
      %v2624 = vtanh.pop %v2442
      %v2625 = vtanh.pop %v2553
      %v2626 = vtanh.pop %v2555
      %v2627 = vtanh.pop %v2446
      %v2628 = vtanh.pop %v2448
      %v2629 = vtanh.pop %v2559
      %v2630 = vtanh.pop %v2561
      %v2631 = vtanh.pop %v2450
      %v2632 = vtanh.pop %v2452
      %v2633 = vtanh.pop %v2563
      %v2634 = vtanh.pop %v2565
      %v2635 = vtanh.pop %v2456
      %v2636 = vtanh.pop %v2458
      %v2637 = vtanh.pop %v2569
      %v2638 = vtanh.pop %v2571
      %v2639 = vtanh.pop %v2460
      %v2640 = vtanh.pop %v2462
      %v2641 = vtanh.pop %v2573
      %v2642 = vtanh.pop %v2575
      %v2643 = vtanh.pop %v2466
      %v2644 = vtanh.pop %v2468
      %v2645 = vtanh.pop %v2579
      %v2646 = vtanh.pop %v2581
      %v2647 = vtanh.pop %v2470
      %v2648 = vtanh.pop %v2472
      %v2649 = vtanh.pop %v2583
      %v2650 = vtanh.pop %v2585
      %v2651 = vpack.c.bf16 %v2591, %v2587
      %v2652 = vpack.c.bf16 %v2592, %v2588
      %v2653 = vpack.c.bf16 %v2593, %v2589
      %v2654 = vpack.c.bf16 %v2594, %v2590
      %v2655 = vpack.c.bf16 %v2599, %v2595
      %v2656 = vpack.c.bf16 %v2600, %v2596
      %v2657 = vpack.c.bf16 %v2601, %v2597
      %v2658 = vpack.c.bf16 %v2602, %v2598
      %v2659 = vpack.c.bf16 %v2607, %v2603
      %v2660 = vpack.c.bf16 %v2608, %v2604
      %v2661 = vpack.c.bf16 %v2609, %v2605
      %v2662 = vpack.c.bf16 %v2610, %v2606
      %v2663 = vpack.c.bf16 %v2615, %v2611
      %v2664 = vpack.c.bf16 %v2616, %v2612
      %v2665 = vpack.c.bf16 %v2617, %v2613
      %v2666 = vpack.c.bf16 %v2618, %v2614
      %v2667 = vpack.c.bf16 %v2623, %v2619
      %v2668 = vpack.c.bf16 %v2624, %v2620
      %v2669 = vpack.c.bf16 %v2625, %v2621
      %v2670 = vpack.c.bf16 %v2626, %v2622
      %v2671 = vpack.c.bf16 %v2631, %v2627
      %v2672 = vpack.c.bf16 %v2632, %v2628
      %v2673 = vpack.c.bf16 %v2633, %v2629
      %v2674 = vpack.c.bf16 %v2634, %v2630
      %v2675 = vpack.c.bf16 %v2639, %v2635
      %v2676 = vpack.c.bf16 %v2640, %v2636
      %v2677 = vpack.c.bf16 %v2641, %v2637
      %v2678 = vpack.c.bf16 %v2642, %v2638
      %v2679 = vpack.c.bf16 %v2647, %v2643
      %v2680 = vpack.c.bf16 %v2648, %v2644
      %v2681 = vpack.c.bf16 %v2649, %v2645
      %v2682 = vpack.c.bf16 %v2650, %v2646
      %v2683 = vld [vmem:[%s5] sm:$0xf]
      %v2684 = vld [vmem:[%s5 + $0x4] sm:$0xf]
      %v2685 = vld [vmem:[%s5 + $0x8] sm:$0xf]
      %v2686 = vld [vmem:[%s5 + $0xc] sm:$0xf]
      %v2687 = vld [vmem:[%s5 + $0x10] sm:$0xf]
      %v2688 = vld [vmem:[%s5 + $0x14] sm:$0xf]
      %v2689 = vld [vmem:[%s5 + $0x18] sm:$0xf]
      %v2690 = vld [vmem:[%s5 + $0x1c] sm:$0xf]
      %v2691 = vld [vmem:[%s5 + $0x20] sm:$0xf]
      %v2692 = vld [vmem:[%s5 + $0x24] sm:$0xf]
      %v2693 = vld [vmem:[%s5 + $0x28] sm:$0xf]
      %v2694 = vld [vmem:[%s5 + $0x2c] sm:$0xf]
      %v2695 = vld [vmem:[%s5 + $0x30] sm:$0xf]
      %v2696 = vld [vmem:[%s5 + $0x34] sm:$0xf]
      %v2697 = vld [vmem:[%s5 + $0x38] sm:$0xf]
      %v2698 = vld [vmem:[%s5 + $0x3c] sm:$0xf]
      %v2699 = vld [vmem:[%s5 + $0x40] sm:$0xf]
      %v2700 = vld [vmem:[%s5 + $0x44] sm:$0xf]
      %v2701 = vld [vmem:[%s5 + $0x48] sm:$0xf]
      %v2702 = vld [vmem:[%s5 + $0x4c] sm:$0xf]
      %v2703 = vld [vmem:[%s5 + $0x50] sm:$0xf]
      %v2704 = vld [vmem:[%s5 + $0x54] sm:$0xf]
      %v2705 = vld [vmem:[%s5 + $0x58] sm:$0xf]
      %v2706 = vld [vmem:[%s5 + $0x5c] sm:$0xf]
      %v2707 = vld [vmem:[%s5 + $0x60] sm:$0xf]
      %v2708 = vld [vmem:[%s5 + $0x64] sm:$0xf]
      %v2709 = vld [vmem:[%s5 + $0x68] sm:$0xf]
      %v2710 = vld [vmem:[%s5 + $0x6c] sm:$0xf]
      %v2711 = vld [vmem:[%s5 + $0x70] sm:$0xf]
      %v2712 = vld [vmem:[%s5 + $0x74] sm:$0xf]
      %v2713 = vld [vmem:[%s5 + $0x78] sm:$0xf]
      %v2714 = vld [vmem:[%s5 + $0x7c] sm:$0xf]
      %v2715 = vld [vmem:[%s5 + $0x80] sm:$0xf]
      %v2716 = vld [vmem:[%s5 + $0x84] sm:$0xf]
      %v2717 = vld [vmem:[%s5 + $0x88] sm:$0xf]
      %v2718 = vld [vmem:[%s5 + $0x8c] sm:$0xf]
      %v2719 = vld [vmem:[%s5 + $0x90] sm:$0xf]
      %v2720 = vld [vmem:[%s5 + $0x94] sm:$0xf]
      %v2721 = vld [vmem:[%s5 + $0x98] sm:$0xf]
      %v2722 = vld [vmem:[%s5 + $0x9c] sm:$0xf]
      %v2723 = vld [vmem:[%s5 + $0xa0] sm:$0xf]
      %v2724 = vld [vmem:[%s5 + $0xa4] sm:$0xf]
      %v2725 = vld [vmem:[%s5 + $0xa8] sm:$0xf]
      %v2726 = vld [vmem:[%s5 + $0xac] sm:$0xf]
      %v2727 = vld [vmem:[%s5 + $0xb0] sm:$0xf]
      %v2728 = vld [vmem:[%s5 + $0xb4] sm:$0xf]
      %v2729 = vld [vmem:[%s5 + $0xb8] sm:$0xf]
      %v2730 = vld [vmem:[%s5 + $0xbc] sm:$0xf]
      %v2731 = vld [vmem:[%s5 + $0xc0] sm:$0xf]
      %v2732 = vld [vmem:[%s5 + $0xc4] sm:$0xf]
      %v2733 = vld [vmem:[%s5 + $0xc8] sm:$0xf]
      %v2734 = vld [vmem:[%s5 + $0xcc] sm:$0xf]
      %v2735 = vld [vmem:[%s5 + $0xd0] sm:$0xf]
      %v2736 = vld [vmem:[%s5 + $0xd4] sm:$0xf]
      %v2737 = vld [vmem:[%s5 + $0xd8] sm:$0xf]
      %v2738 = vld [vmem:[%s5 + $0xdc] sm:$0xf]
      %v2739 = vld [vmem:[%s5 + $0xe0] sm:$0xf]
      %v2740 = vld [vmem:[%s5 + $0xe4] sm:$0xf]
      %v2741 = vld [vmem:[%s5 + $0xe8] sm:$0xf]
      %v2742 = vld [vmem:[%s5 + $0xec] sm:$0xf]
      %v2743 = vld [vmem:[%s5 + $0xf0] sm:$0xf]
      %v2744 = vld [vmem:[%s5 + $0xf4] sm:$0xf]
      %v2745 = vld [vmem:[%s5 + $0xf8] sm:$0xf]
      %v2746 = vld [vmem:[%s5 + $0xfc] sm:$0xf]
      %v2747 = vld [vmem:[%s6] sm:$0x1]
      %v2749 = vlaneseq
      %v2750 = vshrl.u32 %v2749, 7
      %v2751 = vsub.s32 0, %v2750
      %v2752 = vrot.slane %v2747, %v2751
      %v2818 = vunpack.c.l.b16 %v2683
      %v2819 = vunpack.c.l.b16 %v2684
      %v2820 = vunpack.c.l.b16 %v2685
      %v2821 = vunpack.c.l.b16 %v2686
      %v2822 = vunpack.c.l.b16 %v2687
      %v2823 = vunpack.c.l.b16 %v2688
      %v2824 = vunpack.c.l.b16 %v2689
      %v2825 = vunpack.c.l.b16 %v2690
      %v2826 = vunpack.c.l.b16 %v2691
      %v2827 = vunpack.c.l.b16 %v2692
      %v2828 = vunpack.c.l.b16 %v2693
      %v2829 = vunpack.c.l.b16 %v2694
      %v2830 = vunpack.c.l.b16 %v2695
      %v2831 = vunpack.c.l.b16 %v2696
      %v2832 = vunpack.c.l.b16 %v2697
      %v2833 = vunpack.c.l.b16 %v2698
      %v2834 = vunpack.c.l.b16 %v2699
      %v2835 = vunpack.c.l.b16 %v2700
      %v2836 = vunpack.c.l.b16 %v2701
      %v2837 = vunpack.c.l.b16 %v2702
      %v2838 = vunpack.c.l.b16 %v2703
      %v2839 = vunpack.c.l.b16 %v2704
      %v2840 = vunpack.c.l.b16 %v2705
      %v2841 = vunpack.c.l.b16 %v2706
      %v2842 = vunpack.c.l.b16 %v2707
      %v2843 = vunpack.c.l.b16 %v2708
      %v2844 = vunpack.c.l.b16 %v2709
      %v2845 = vunpack.c.l.b16 %v2710
      %v2846 = vunpack.c.l.b16 %v2711
      %v2847 = vunpack.c.l.b16 %v2712
      %v2848 = vunpack.c.l.b16 %v2713
      %v2849 = vunpack.c.l.b16 %v2714
      %v2850 = vunpack.c.l.b16 %v2715
      %v2851 = vunpack.c.l.b16 %v2716
      %v2852 = vunpack.c.l.b16 %v2717
      %v2853 = vunpack.c.l.b16 %v2718
      %v2854 = vunpack.c.l.b16 %v2719
      %v2855 = vunpack.c.l.b16 %v2720
      %v2856 = vunpack.c.l.b16 %v2721
      %v2857 = vunpack.c.l.b16 %v2722
      %v2858 = vunpack.c.l.b16 %v2723
      %v2859 = vunpack.c.l.b16 %v2724
      %v2860 = vunpack.c.l.b16 %v2725
      %v2861 = vunpack.c.l.b16 %v2726
      %v2862 = vunpack.c.l.b16 %v2727
      %v2863 = vunpack.c.l.b16 %v2728
      %v2864 = vunpack.c.l.b16 %v2729
      %v2865 = vunpack.c.l.b16 %v2730
      %v2866 = vunpack.c.l.b16 %v2731
      %v2867 = vunpack.c.l.b16 %v2732
      %v2868 = vunpack.c.l.b16 %v2733
      %v2869 = vunpack.c.l.b16 %v2734
      %v2870 = vunpack.c.l.b16 %v2735
      %v2871 = vunpack.c.l.b16 %v2736
      %v2872 = vunpack.c.l.b16 %v2737
      %v2873 = vunpack.c.l.b16 %v2738
      %v2874 = vunpack.c.l.b16 %v2739
      %v2875 = vunpack.c.l.b16 %v2740
      %v2876 = vunpack.c.l.b16 %v2741
      %v2877 = vunpack.c.l.b16 %v2742
      %v2878 = vunpack.c.l.b16 %v2743
      %v2879 = vunpack.c.l.b16 %v2744
      %v2880 = vunpack.c.l.b16 %v2745
      %v2881 = vunpack.c.l.b16 %v2746
      %v2882 = vpack.c.b16 %v2819, %v2818
      %v2883 = vpack.c.b16 %v2821, %v2820
      %v2884 = vpack.c.b16 %v2823, %v2822
      %v2885 = vpack.c.b16 %v2825, %v2824
      %v2886 = vpack.c.b16 %v2827, %v2826
      %v2887 = vpack.c.b16 %v2829, %v2828
      %v2888 = vpack.c.b16 %v2831, %v2830
      %v2889 = vpack.c.b16 %v2833, %v2832
      %v2890 = vpack.c.b16 %v2835, %v2834
      %v2891 = vpack.c.b16 %v2837, %v2836
      %v2892 = vpack.c.b16 %v2839, %v2838
      %v2893 = vpack.c.b16 %v2841, %v2840
      %v2894 = vpack.c.b16 %v2843, %v2842
      %v2895 = vpack.c.b16 %v2845, %v2844
      %v2896 = vpack.c.b16 %v2847, %v2846
      %v2897 = vpack.c.b16 %v2849, %v2848
      %v2898 = vpack.c.b16 %v2851, %v2850
      %v2899 = vpack.c.b16 %v2853, %v2852
      %v2900 = vpack.c.b16 %v2855, %v2854
      %v2901 = vpack.c.b16 %v2857, %v2856
      %v2902 = vpack.c.b16 %v2859, %v2858
      %v2903 = vpack.c.b16 %v2861, %v2860
      %v2904 = vpack.c.b16 %v2863, %v2862
      %v2905 = vpack.c.b16 %v2865, %v2864
      %v2906 = vpack.c.b16 %v2867, %v2866
      %v2907 = vpack.c.b16 %v2869, %v2868
      %v2908 = vpack.c.b16 %v2871, %v2870
      %v2909 = vpack.c.b16 %v2873, %v2872
      %v2910 = vpack.c.b16 %v2875, %v2874
      %v2911 = vpack.c.b16 %v2877, %v2876
      %v2912 = vpack.c.b16 %v2879, %v2878
      %v2913 = vpack.c.b16 %v2881, %v2880
      %2946 = vmatprep.subr.bf16.mxu0 0
      %2947 = vmatpush1.bf16.msra.mxu0 %v2882
      %2948 = vmatprep.subr.bf16.mxu0 0
      %2949 = vmatpush1.bf16.msra.mxu0 %v2883
      %2950 = vmatprep.subr.bf16.mxu0 0
      %2951 = vmatpush1.bf16.msra.mxu0 %v2884
      %2952 = vmatprep.subr.bf16.mxu0 0
      %2953 = vmatpush1.bf16.msra.mxu0 %v2885
      %2954 = vmatprep.subr.bf16.mxu0 0
      %2955 = vmatpush1.bf16.msra.mxu0 %v2886
      %2956 = vmatprep.subr.bf16.mxu0 0
      %2957 = vmatpush1.bf16.msra.mxu0 %v2887
      %2958 = vmatprep.subr.bf16.mxu0 0
      %2959 = vmatpush1.bf16.msra.mxu0 %v2888
      %2960 = vmatprep.subr.bf16.mxu0 0
      %2961 = vmatpush1.bf16.msra.mxu0 %v2889
      %2962 = vmatprep.subr.bf16.mxu0 0
      %2963 = vmatpush1.bf16.msra.mxu0 %v2890
      %2964 = vmatprep.subr.bf16.mxu0 0
      %2965 = vmatpush1.bf16.msra.mxu0 %v2891
      %2966 = vmatprep.subr.bf16.mxu0 0
      %2967 = vmatpush1.bf16.msra.mxu0 %v2892
      %2968 = vmatprep.subr.bf16.mxu0 0
      %2969 = vmatpush1.bf16.msra.mxu0 %v2893
      %2970 = vmatprep.subr.bf16.mxu0 0
      %2971 = vmatpush1.bf16.msra.mxu0 %v2894
      %2972 = vmatprep.subr.bf16.mxu0 0
      %2973 = vmatpush1.bf16.msra.mxu0 %v2895
      %2974 = vmatprep.subr.bf16.mxu0 0
      %2975 = vmatpush1.bf16.msra.mxu0 %v2896
      %2976 = vmatprep.subr.bf16.mxu0 0
      %2977 = vmatpush1.bf16.msra.mxu0 %v2897
      %2978 = vmatprep.mubr.bf16.mxu0 %v2652
      %2979 = vmatmul.mubr.bf16.gmra.mrb[0].mxu0 %v2651
      %v2980 = vpop.f32.mrb[0].mxu0
      %v2981 = vadd.f32 %v2752, %v2980
      %v2982 = vpop.f32.mrb[0].mxu0
      %v2983 = vpop.f32.mrb[0].mxu0
      %v2984 = vadd.f32 %v2752, %v2983
      %v2985 = vpop.f32.mrb[0].mxu0
      %2986 = vmatprep.mubr.bf16.mxu0 %v2656
      %2987 = vmatmul.mubr.bf16.gmra.mrb[0].mxu0 %v2655
      %v2988 = vpop.f32.mrb[0].mxu0
      %v2989 = vadd.f32 %v2752, %v2988
      %v2990 = vpop.f32.mrb[0].mxu0
      %v2991 = vpop.f32.mrb[0].mxu0
      %v2992 = vadd.f32 %v2752, %v2991
      %v2993 = vpop.f32.mrb[0].mxu0
      %2994 = vmatprep.mubr.bf16.mxu0 %v2660
      %2995 = vmatmul.mubr.bf16.gmra.mrb[0].mxu0 %v2659
      %v2996 = vpop.f32.mrb[0].mxu0
      %v2997 = vadd.f32 %v2752, %v2996
      %v2998 = vpop.f32.mrb[0].mxu0
      %v2999 = vpop.f32.mrb[0].mxu0
      %v3000 = vadd.f32 %v2752, %v2999
      %v3001 = vpop.f32.mrb[0].mxu0
      %3002 = vmatprep.mubr.bf16.mxu0 %v2664
      %3003 = vmatmul.mubr.bf16.gmra.mrb[0].mxu0 %v2663
      %v3004 = vpop.f32.mrb[0].mxu0
      %v3005 = vadd.f32 %v2752, %v3004
      %v3006 = vpop.f32.mrb[0].mxu0
      %v3007 = vpop.f32.mrb[0].mxu0
      %v3008 = vadd.f32 %v2752, %v3007
      %v3009 = vpop.f32.mrb[0].mxu0
      %3010 = vmatprep.mubr.bf16.mxu0 %v2668
      %3011 = vmatmul.mubr.bf16.gmra.mrb[0].mxu0 %v2667
      %v3012 = vpop.f32.mrb[0].mxu0
      %v3013 = vadd.f32 %v2752, %v3012
      %v3014 = vpop.f32.mrb[0].mxu0
      %v3015 = vpop.f32.mrb[0].mxu0
      %v3016 = vadd.f32 %v2752, %v3015
      %v3017 = vpop.f32.mrb[0].mxu0
      %3018 = vmatprep.mubr.bf16.mxu0 %v2672
      %3019 = vmatmul.mubr.bf16.gmra.mrb[0].mxu0 %v2671
      %v3020 = vpop.f32.mrb[0].mxu0
      %v3021 = vadd.f32 %v2752, %v3020
      %v3022 = vpop.f32.mrb[0].mxu0
      %v3023 = vpop.f32.mrb[0].mxu0
      %v3024 = vadd.f32 %v2752, %v3023
      %v3025 = vpop.f32.mrb[0].mxu0
      %3026 = vmatprep.mubr.bf16.mxu0 %v2676
      %3027 = vmatmul.mubr.bf16.gmra.mrb[0].mxu0 %v2675
      %v3028 = vpop.f32.mrb[0].mxu0
      %v3029 = vadd.f32 %v2752, %v3028
      %v3030 = vpop.f32.mrb[0].mxu0
      %v3031 = vpop.f32.mrb[0].mxu0
      %v3032 = vadd.f32 %v2752, %v3031
      %v3033 = vpop.f32.mrb[0].mxu0
      %3034 = vmatprep.mubr.bf16.mxu0 %v2680
      %3035 = vmatmul.mubr.bf16.gmra.mrb[0].mxu0 %v2679
      %v3036 = vpop.f32.mrb[0].mxu0
      %v3037 = vadd.f32 %v2752, %v3036
      %v3038 = vpop.f32.mrb[0].mxu0
      %v3039 = vpop.f32.mrb[0].mxu0
      %v3040 = vadd.f32 %v2752, %v3039
      %v3041 = vpop.f32.mrb[0].mxu0
      %3042 = vdwg.mxu0
      %3043 = vmatprep.subr.bf16.mxu0 0
      %3044 = vmatpush1.bf16.msra.mxu0 %v2898
      %3045 = vmatprep.subr.bf16.mxu0 0
      %3046 = vmatpush1.bf16.msra.mxu0 %v2899
      %3047 = vmatprep.subr.bf16.mxu0 0
      %3048 = vmatpush1.bf16.msra.mxu0 %v2900
      %3049 = vmatprep.subr.bf16.mxu0 0
      %3050 = vmatpush1.bf16.msra.mxu0 %v2901
      %3051 = vmatprep.subr.bf16.mxu0 0
      %3052 = vmatpush1.bf16.msra.mxu0 %v2902
      %3053 = vmatprep.subr.bf16.mxu0 0
      %3054 = vmatpush1.bf16.msra.mxu0 %v2903
      %3055 = vmatprep.subr.bf16.mxu0 0
      %3056 = vmatpush1.bf16.msra.mxu0 %v2904
      %3057 = vmatprep.subr.bf16.mxu0 0
      %3058 = vmatpush1.bf16.msra.mxu0 %v2905
      %3059 = vmatprep.subr.bf16.mxu0 0
      %3060 = vmatpush1.bf16.msra.mxu0 %v2906
      %3061 = vmatprep.subr.bf16.mxu0 0
      %3062 = vmatpush1.bf16.msra.mxu0 %v2907
      %3063 = vmatprep.subr.bf16.mxu0 0
      %3064 = vmatpush1.bf16.msra.mxu0 %v2908
      %3065 = vmatprep.subr.bf16.mxu0 0
      %3066 = vmatpush1.bf16.msra.mxu0 %v2909
      %3067 = vmatprep.subr.bf16.mxu0 0
      %3068 = vmatpush1.bf16.msra.mxu0 %v2910
      %3069 = vmatprep.subr.bf16.mxu0 0
      %3070 = vmatpush1.bf16.msra.mxu0 %v2911
      %3071 = vmatprep.subr.bf16.mxu0 0
      %3072 = vmatpush1.bf16.msra.mxu0 %v2912
      %3073 = vmatprep.subr.bf16.mxu0 0
      %3074 = vmatpush1.bf16.msra.mxu0 %v2913
      %3075 = vmatprep.mubr.bf16.mxu0 %v2654
      %3076 = vmatmul.mubr.bf16.gmra.mrb[0].mxu0 %v2653
      %v3077 = vpop.f32.mrb[0].mxu0
      %v3078 = vadd.f32 %v2981, %v3077
      %v3079 = vpop.f32.mrb[0].mxu0
      %v3080 = vpop.f32.mrb[0].mxu0
      %v3081 = vadd.f32 %v2984, %v3080
      %v3082 = vpop.f32.mrb[0].mxu0
      %3083 = vmatprep.mubr.bf16.mxu0 %v2658
      %3084 = vmatmul.mubr.bf16.gmra.mrb[0].mxu0 %v2657
      %v3085 = vpop.f32.mrb[0].mxu0
      %v3086 = vadd.f32 %v2989, %v3085
      %v3087 = vpop.f32.mrb[0].mxu0
      %v3088 = vpop.f32.mrb[0].mxu0
      %v3089 = vadd.f32 %v2992, %v3088
      %v3090 = vpop.f32.mrb[0].mxu0
      %3091 = vmatprep.mubr.bf16.mxu0 %v2662
      %3092 = vmatmul.mubr.bf16.gmra.mrb[0].mxu0 %v2661
      %v3093 = vpop.f32.mrb[0].mxu0
      %v3094 = vadd.f32 %v2997, %v3093
      %v3095 = vpop.f32.mrb[0].mxu0
      %v3096 = vpop.f32.mrb[0].mxu0
      %v3097 = vadd.f32 %v3000, %v3096
      %v3098 = vpop.f32.mrb[0].mxu0
      %3099 = vmatprep.mubr.bf16.mxu0 %v2666
      %3100 = vmatmul.mubr.bf16.gmra.mrb[0].mxu0 %v2665
      %v3101 = vpop.f32.mrb[0].mxu0
      %v3102 = vadd.f32 %v3005, %v3101
      %v3103 = vpop.f32.mrb[0].mxu0
      %v3104 = vpop.f32.mrb[0].mxu0
      %v3105 = vadd.f32 %v3008, %v3104
      %v3106 = vpop.f32.mrb[0].mxu0
      %3107 = vmatprep.mubr.bf16.mxu0 %v2670
      %3108 = vmatmul.mubr.bf16.gmra.mrb[0].mxu0 %v2669
      %v3109 = vpop.f32.mrb[0].mxu0
      %v3110 = vadd.f32 %v3013, %v3109
      %v3111 = vpop.f32.mrb[0].mxu0
      %v3112 = vpop.f32.mrb[0].mxu0
      %v3113 = vadd.f32 %v3016, %v3112
      %v3114 = vpop.f32.mrb[0].mxu0
      %3115 = vmatprep.mubr.bf16.mxu0 %v2674
      %3116 = vmatmul.mubr.bf16.gmra.mrb[0].mxu0 %v2673
      %v3117 = vpop.f32.mrb[0].mxu0
      %v3118 = vadd.f32 %v3021, %v3117
      %v3119 = vpop.f32.mrb[0].mxu0
      %v3120 = vpop.f32.mrb[0].mxu0
      %v3121 = vadd.f32 %v3024, %v3120
      %v3122 = vpop.f32.mrb[0].mxu0
      %3123 = vmatprep.mubr.bf16.mxu0 %v2678
      %3124 = vmatmul.mubr.bf16.gmra.mrb[0].mxu0 %v2677
      %v3125 = vpop.f32.mrb[0].mxu0
      %v3126 = vadd.f32 %v3029, %v3125
      %v3127 = vpop.f32.mrb[0].mxu0
      %v3128 = vpop.f32.mrb[0].mxu0
      %v3129 = vadd.f32 %v3032, %v3128
      %v3130 = vpop.f32.mrb[0].mxu0
      %3131 = vmatprep.mubr.bf16.mxu0 %v2682
      %3132 = vmatmul.mubr.bf16.gmra.mrb[0].mxu0 %v2681
      %v3133 = vpop.f32.mrb[0].mxu0
      %v3134 = vadd.f32 %v3037, %v3133
      %v3135 = vpop.f32.mrb[0].mxu0
      %v3136 = vpop.f32.mrb[0].mxu0
      %v3137 = vadd.f32 %v3040, %v3136
      %v3138 = vpop.f32.mrb[0].mxu0
      %3139 = vdwg.mxu0
      %v3140 = vmul.f32 %v3078, 0.5
      %v3141 = vmul.f32 %v3081, 0.5
      %v3142 = vmul.f32 %v3086, 0.5
      %v3143 = vmul.f32 %v3089, 0.5
      %v3144 = vmul.f32 %v3094, 0.5
      %v3145 = vmul.f32 %v3097, 0.5
      %v3146 = vmul.f32 %v3102, 0.5
      %v3147 = vmul.f32 %v3105, 0.5
      %v3148 = vmul.f32 %v3110, 0.5
      %v3149 = vmul.f32 %v3113, 0.5
      %v3150 = vmul.f32 %v3118, 0.5
      %v3151 = vmul.f32 %v3121, 0.5
      %v3152 = vmul.f32 %v3126, 0.5
      %v3153 = vmul.f32 %v3129, 0.5
      %v3154 = vmul.f32 %v3134, 0.5
      %v3155 = vmul.f32 %v3137, 0.5
      %v3156 = vmul.f32 %v3140, 1.442695
      %v3157 = vpow.pop %v3156
      %v3158 = vmul.f32 %v3141, 1.442695
      %v3159 = vpow.pop %v3158
      %v3160 = vmul.f32 %v3142, 1.442695
      %v3161 = vpow.pop %v3160
      %v3162 = vmul.f32 %v3143, 1.442695
      %v3163 = vpow.pop %v3162
      %v3164 = vmul.f32 %v3144, 1.442695
      %v3165 = vpow.pop %v3164
      %v3166 = vmul.f32 %v3145, 1.442695
      %v3167 = vpow.pop %v3166
      %v3168 = vmul.f32 %v3146, 1.442695
      %v3169 = vpow.pop %v3168
      %v3170 = vmul.f32 %v3147, 1.442695
      %v3171 = vpow.pop %v3170
      %v3172 = vmul.f32 %v3148, 1.442695
      %v3173 = vpow.pop %v3172
      %v3174 = vmul.f32 %v3149, 1.442695
      %v3175 = vpow.pop %v3174
      %v3176 = vmul.f32 %v3150, 1.442695
      %v3177 = vpow.pop %v3176
      %v3178 = vmul.f32 %v3151, 1.442695
      %v3179 = vpow.pop %v3178
      %v3180 = vmul.f32 %v3152, 1.442695
      %v3181 = vpow.pop %v3180
      %v3182 = vmul.f32 %v3153, 1.442695
      %v3183 = vpow.pop %v3182
      %v3184 = vmul.f32 %v3154, 1.442695
      %v3185 = vpow.pop %v3184
      %v3186 = vmul.f32 %v3155, 1.442695
      %v3187 = vpow.pop %v3186
      %v3188 = vld [vmem:[%s470] sm:$0xff]
      %v3189 = vld [vmem:[%s470 + $0x8] sm:$0xff]
      %v3190 = vld [vmem:[%s470 + $0x10] sm:$0xff]
      %v3191 = vld [vmem:[%s470 + $0x18] sm:$0xff]
      %v3192 = vld [vmem:[%s470 + $0x20] sm:$0xff]
      %v3193 = vld [vmem:[%s470 + $0x28] sm:$0xff]
      %v3194 = vld [vmem:[%s470 + $0x30] sm:$0xff]
      %v3195 = vld [vmem:[%s470 + $0x38] sm:$0xff]
      %v3196 = vld [vmem:[%s470 + $0x40] sm:$0xff]
      %v3197 = vld [vmem:[%s470 + $0x48] sm:$0xff]
      %v3198 = vld [vmem:[%s470 + $0x50] sm:$0xff]
      %v3199 = vld [vmem:[%s470 + $0x58] sm:$0xff]
      %v3200 = vld [vmem:[%s470 + $0x60] sm:$0xff]
      %v3201 = vld [vmem:[%s470 + $0x68] sm:$0xff]
      %v3202 = vld [vmem:[%s470 + $0x70] sm:$0xff]
      %v3203 = vld [vmem:[%s470 + $0x78] sm:$0xff]
      %3220 = vrot.lane.b32.xlu0 %v3157, 126
      %v3221 = vpop.permute.xlu0 %3220
      %3222 = vrot.lane.b32.xlu0 %v3159, 126
      %v3223 = vpop.permute.xlu0 %3222
      %3224 = vrot.lane.b32.xlu0 %v3161, 126
      %v3225 = vpop.permute.xlu0 %3224
      %3226 = vrot.lane.b32.xlu0 %v3163, 126
      %v3227 = vpop.permute.xlu0 %3226
      %3228 = vrot.lane.b32.xlu0 %v3165, 126
      %v3229 = vpop.permute.xlu0 %3228
      %3230 = vrot.lane.b32.xlu0 %v3167, 126
      %v3231 = vpop.permute.xlu0 %3230
      %3232 = vrot.lane.b32.xlu0 %v3169, 126
      %v3233 = vpop.permute.xlu0 %3232
      %3234 = vrot.lane.b32.xlu0 %v3171, 126
      %v3235 = vpop.permute.xlu0 %3234
      %3236 = vrot.lane.b32.xlu0 %v3173, 126
      %v3237 = vpop.permute.xlu0 %3236
      %3238 = vrot.lane.b32.xlu0 %v3175, 126
      %v3239 = vpop.permute.xlu0 %3238
      %3240 = vrot.lane.b32.xlu0 %v3177, 126
      %v3241 = vpop.permute.xlu0 %3240
      %3242 = vrot.lane.b32.xlu0 %v3179, 126
      %v3243 = vpop.permute.xlu0 %3242
      %3244 = vrot.lane.b32.xlu0 %v3181, 126
      %v3245 = vpop.permute.xlu0 %3244
      %3246 = vrot.lane.b32.xlu0 %v3183, 126
      %v3247 = vpop.permute.xlu0 %3246
      %3248 = vrot.lane.b32.xlu0 %v3185, 126
      %v3249 = vpop.permute.xlu0 %3248
      %3250 = vrot.lane.b32.xlu0 %v3187, 126
      %v3251 = vpop.permute.xlu0 %3250
      %v3268 = vmul.f32 %v3188, %v3221
      %v3269 = vmul.f32 %v3189, %v3223
      %v3270 = vmul.f32 %v3190, %v3225
      %v3271 = vmul.f32 %v3191, %v3227
      %v3272 = vmul.f32 %v3192, %v3229
      %v3273 = vmul.f32 %v3193, %v3231
      %v3274 = vmul.f32 %v3194, %v3233
      %v3275 = vmul.f32 %v3195, %v3235
      %v3276 = vmul.f32 %v3196, %v3237
      %v3277 = vmul.f32 %v3197, %v3239
      %v3278 = vmul.f32 %v3198, %v3241
      %v3279 = vmul.f32 %v3199, %v3243
      %v3280 = vmul.f32 %v3200, %v3245
      %v3281 = vmul.f32 %v3201, %v3247
      %v3282 = vmul.f32 %v3202, %v3249
      %v3283 = vmul.f32 %v3203, %v3251
      %v3284 = vadd.f32 %v3268, %v3078
      %v3285 = vadd.f32 %v3269, %v3081
      %v3286 = vadd.f32 %v3270, %v3086
      %v3287 = vadd.f32 %v3271, %v3089
      %v3288 = vadd.f32 %v3272, %v3094
      %v3289 = vadd.f32 %v3273, %v3097
      %v3290 = vadd.f32 %v3274, %v3102
      %v3291 = vadd.f32 %v3275, %v3105
      %v3292 = vadd.f32 %v3276, %v3110
      %v3293 = vadd.f32 %v3277, %v3113
      %v3294 = vadd.f32 %v3278, %v3118
      %v3295 = vadd.f32 %v3279, %v3121
      %v3296 = vadd.f32 %v3280, %v3126
      %v3297 = vadd.f32 %v3281, %v3129
      %v3298 = vadd.f32 %v3282, %v3134
      %v3299 = vadd.f32 %v3283, %v3137
      %v3300 = vld [vmem:[%s7] sm:$0xff]
      %v3301 = vld [vmem:[%s8] sm:$0xf]
      %v3303 = vlaneseq
      %v3304 = vshrl.u32 %v3303, 7
      %v3305 = vsub.s32 0, %v3304
      %v3306 = vrot.slane %v3301, %v3305
      %v3307 = vlaneseq
      %v3308 = vshrl.u32 %v3307, 7
      %v3309 = vsub.s32 1, %v3308
      %v3310 = vrot.slane %v3301, %v3309
      %v3311 = vlaneseq
      %v3312 = vshrl.u32 %v3311, 7
      %v3313 = vsub.s32 2, %v3312
      %v3314 = vrot.slane %v3301, %v3313
      %v3315 = vlaneseq
      %v3316 = vshrl.u32 %v3315, 7
      %v3317 = vsub.s32 3, %v3316
      %v3318 = vrot.slane %v3301, %v3317
      %v3324 = vcombine.high %v3300, %v3300
      %v3326 = vunpack.c.l.s4 1983009808
      %v3327 = vunpack.c.0.s8 %v3326
      %v3328 = vlaneseq
      %v3329 = vshrl.u32 %v3328, 7
      %v3330 = vsub.s32 %v3327, %v3329
      %v3331 = vrot.slane %v3300, %v3330
      %v3333 = vunpack.c.l.s4 1983009808
      %v3334 = vunpack.c.0.s8 %v3333
      %v3335 = vlaneseq
      %v3336 = vshrl.u32 %v3335, 7
      %v3337 = vsub.s32 %v3334, %v3336
      %v3338 = vrot.slane %v3324, %v3337
      %v3339 = vcombine.high %v3331, %v3331
      %v3340 = vcombine.high %v3338, %v3338
      %vm3341 = vcmask 15360
      %v3343 = vsel %vm3341, %v3284, 0
      %v3346 = vsel %vm3341, %v3285, 0
      %v3349 = vsel %vm3341, %v3286, 0
      %v3352 = vsel %vm3341, %v3287, 0
      %v3355 = vsel %vm3341, %v3288, 0
      %v3358 = vsel %vm3341, %v3289, 0
      %v3361 = vsel %vm3341, %v3290, 0
      %v3364 = vsel %vm3341, %v3291, 0
      %v3367 = vsel %vm3341, %v3292, 0
      %v3370 = vsel %vm3341, %v3293, 0
      %v3373 = vsel %vm3341, %v3294, 0
      %v3376 = vsel %vm3341, %v3295, 0
      %v3379 = vsel %vm3341, %v3296, 0
      %v3382 = vsel %vm3341, %v3297, 0
      %v3385 = vsel %vm3341, %v3298, 0
      %v3388 = vsel %vm3341, %v3299, 0
      %vm3390 = vcmask 1041408
      %v3391 = vsel %vm3390, %v3331, 0
      %v3393 = vsel %vm3390, %v3339, 0
      %v3395 = vsel %vm3390, %v3338, 0
      %v3397 = vsel %vm3390, %v3340, 0
      %3399 = vmatprep.subr.mxu0 %v3393
      %3400 = vmatpush1.msra.mxu0 %v3391
      %3401 = vmatprep.subr.mxu0 0.0
      %3402 = vmatpush1.msra.mxu0 0.0
      %3403 = vmatprep.subr.mxu0 0.0
      %3404 = vmatpush1.msra.mxu0 0.0
      %3405 = vmatprep.subr.mxu0 0.0
      %3406 = vmatpush1.msra.mxu0 0.0
      %3407 = vmatprep.subr.mxu0 0.0
      %3408 = vmatpush1.msra.mxu0 0.0
      %3409 = vmatprep.subr.mxu0 0.0
      %3410 = vmatpush1.msra.mxu0 0.0
      %3411 = vmatprep.subr.mxu0 0.0
      %3412 = vmatpush1.msra.mxu0 0.0
      %3413 = vmatprep.subr.mxu0 0.0
      %3414 = vmatpush1.msra.mxu0 0.0
      %3415 = vmatprep.subr.mxu0 0.0
      %3416 = vmatpush1.msra.mxu0 0.0
      %3417 = vmatprep.subr.mxu0 0.0
      %3418 = vmatpush1.msra.mxu0 0.0
      %3419 = vmatprep.subr.mxu0 0.0
      %3420 = vmatpush1.msra.mxu0 0.0
      %3421 = vmatprep.subr.mxu0 0.0
      %3422 = vmatpush1.msra.mxu0 0.0
      %3423 = vmatprep.subr.mxu0 0.0
      %3424 = vmatpush1.msra.mxu0 0.0
      %3425 = vmatprep.subr.mxu0 0.0
      %3426 = vmatpush1.msra.mxu0 0.0
      %3427 = vmatprep.subr.mxu0 0.0
      %3428 = vmatpush1.msra.mxu0 0.0
      %3429 = vmatprep.subr.mxu0 0.0
      %3430 = vmatpush1.msra.mxu0 0.0
      %3431 = vmatprep.subr.mxu0 0.0
      %3432 = vmatpush1.msra.mxu0 0.0
      %3433 = vmatprep.subr.mxu0 0.0
      %3434 = vmatpush1.msra.mxu0 0.0
      %3435 = vmatprep.subr.mxu0 0.0
      %3436 = vmatpush1.msra.mxu0 0.0
      %3437 = vmatprep.subr.mxu0 0.0
      %3438 = vmatpush1.msra.mxu0 0.0
      %3439 = vmatprep.subr.mxu0 0.0
      %3440 = vmatpush1.msra.mxu0 0.0
      %3441 = vmatprep.subr.mxu0 0.0
      %3442 = vmatpush1.msra.mxu0 0.0
      %3443 = vmatprep.subr.mxu0 0.0
      %3444 = vmatpush1.msra.mxu0 0.0
      %3445 = vmatprep.subr.mxu0 0.0
      %3446 = vmatpush1.msra.mxu0 0.0
      %3447 = vmatprep.subr.mxu0 0.0
      %3448 = vmatpush1.msra.mxu0 0.0
      %3449 = vmatprep.subr.mxu0 0.0
      %3450 = vmatpush1.msra.mxu0 0.0
      %3451 = vmatprep.subr.mxu0 0.0
      %3452 = vmatpush1.msra.mxu0 0.0
      %3453 = vmatprep.subr.mxu0 0.0
      %3454 = vmatpush1.msra.mxu0 0.0
      %3455 = vmatprep.subr.mxu0 0.0
      %3456 = vmatpush1.msra.mxu0 0.0
      %3457 = vmatprep.subr.mxu0 0.0
      %3458 = vmatpush1.msra.mxu0 0.0
      %3459 = vmatprep.subr.mxu0 0.0
      %3460 = vmatpush1.msra.mxu0 0.0
      %3461 = vmatprep.subr.mxu0 0.0
      %3462 = vmatpush1.msra.mxu0 0.0
      %3463 = vmatprep.mubr.f32.mxu0 0.0
      %3464 = vmatmul.mubr.f32.gmra.mrb[0].mxu0 %v3343
      %v3465 = vpop.f32.mrb[0].mxu0
      %v3466 = vadd.f32 %v3306, %v3465
      %v3467 = vpop.f32.mrb[0].mxu0
      %v3468 = vadd.f32 %v3310, %v3467
      %3469 = vmatprep.mubr.f32.mxu0 0.0
      %3470 = vmatmul.mubr.f32.gmra.mrb[0].mxu0 %v3346
      %v3471 = vpop.f32.mrb[0].mxu0
      %v3472 = vadd.f32 %v3306, %v3471
      %v3473 = vpop.f32.mrb[0].mxu0
      %v3474 = vadd.f32 %v3310, %v3473
      %3475 = vmatprep.mubr.f32.mxu0 0.0
      %3476 = vmatmul.mubr.f32.gmra.mrb[0].mxu0 %v3349
      %v3477 = vpop.f32.mrb[0].mxu0
      %v3478 = vadd.f32 %v3306, %v3477
      %v3479 = vpop.f32.mrb[0].mxu0
      %v3480 = vadd.f32 %v3310, %v3479
      %3481 = vmatprep.mubr.f32.mxu0 0.0
      %3482 = vmatmul.mubr.f32.gmra.mrb[0].mxu0 %v3352
      %v3483 = vpop.f32.mrb[0].mxu0
      %v3484 = vadd.f32 %v3306, %v3483
      %v3485 = vpop.f32.mrb[0].mxu0
      %v3486 = vadd.f32 %v3310, %v3485
      %3487 = vmatprep.mubr.f32.mxu0 0.0
      %3488 = vmatmul.mubr.f32.gmra.mrb[0].mxu0 %v3355
      %v3489 = vpop.f32.mrb[0].mxu0
      %v3490 = vadd.f32 %v3306, %v3489
      %v3491 = vpop.f32.mrb[0].mxu0
      %v3492 = vadd.f32 %v3310, %v3491
      %3493 = vmatprep.mubr.f32.mxu0 0.0
      %3494 = vmatmul.mubr.f32.gmra.mrb[0].mxu0 %v3358
      %v3495 = vpop.f32.mrb[0].mxu0
      %v3496 = vadd.f32 %v3306, %v3495
      %v3497 = vpop.f32.mrb[0].mxu0
      %v3498 = vadd.f32 %v3310, %v3497
      %3499 = vmatprep.mubr.f32.mxu0 0.0
      %3500 = vmatmul.mubr.f32.gmra.mrb[0].mxu0 %v3361
      %v3501 = vpop.f32.mrb[0].mxu0
      %v3502 = vadd.f32 %v3306, %v3501
      %v3503 = vpop.f32.mrb[0].mxu0
      %v3504 = vadd.f32 %v3310, %v3503
      %3505 = vmatprep.mubr.f32.mxu0 0.0
      %3506 = vmatmul.mubr.f32.gmra.mrb[0].mxu0 %v3364
      %v3507 = vpop.f32.mrb[0].mxu0
      %v3508 = vadd.f32 %v3306, %v3507
      %v3509 = vpop.f32.mrb[0].mxu0
      %v3510 = vadd.f32 %v3310, %v3509
      %3511 = vmatprep.mubr.f32.mxu0 0.0
      %3512 = vmatmul.mubr.f32.gmra.mrb[0].mxu0 %v3367
      %v3513 = vpop.f32.mrb[0].mxu0
      %v3514 = vadd.f32 %v3306, %v3513
      %v3515 = vpop.f32.mrb[0].mxu0
      %v3516 = vadd.f32 %v3310, %v3515
      %3517 = vmatprep.mubr.f32.mxu0 0.0
      %3518 = vmatmul.mubr.f32.gmra.mrb[0].mxu0 %v3370
      %v3519 = vpop.f32.mrb[0].mxu0
      %v3520 = vadd.f32 %v3306, %v3519
      %v3521 = vpop.f32.mrb[0].mxu0
      %v3522 = vadd.f32 %v3310, %v3521
      %3523 = vmatprep.mubr.f32.mxu0 0.0
      %3524 = vmatmul.mubr.f32.gmra.mrb[0].mxu0 %v3373
      %v3525 = vpop.f32.mrb[0].mxu0
      %v3526 = vadd.f32 %v3306, %v3525
      %v3527 = vpop.f32.mrb[0].mxu0
      %v3528 = vadd.f32 %v3310, %v3527
      %3529 = vmatprep.mubr.f32.mxu0 0.0
      %3530 = vmatmul.mubr.f32.gmra.mrb[0].mxu0 %v3376
      %v3531 = vpop.f32.mrb[0].mxu0
      %v3532 = vadd.f32 %v3306, %v3531
      %v3533 = vpop.f32.mrb[0].mxu0
      %v3534 = vadd.f32 %v3310, %v3533
      %3535 = vmatprep.mubr.f32.mxu0 0.0
      %3536 = vmatmul.mubr.f32.gmra.mrb[0].mxu0 %v3379
      %v3537 = vpop.f32.mrb[0].mxu0
      %v3538 = vadd.f32 %v3306, %v3537
      %v3539 = vpop.f32.mrb[0].mxu0
      %v3540 = vadd.f32 %v3310, %v3539
      %3541 = vmatprep.mubr.f32.mxu0 0.0
      %3542 = vmatmul.mubr.f32.gmra.mrb[0].mxu0 %v3382
      %v3543 = vpop.f32.mrb[0].mxu0
      %v3544 = vadd.f32 %v3306, %v3543
      %v3545 = vpop.f32.mrb[0].mxu0
      %v3546 = vadd.f32 %v3310, %v3545
      %3547 = vmatprep.mubr.f32.mxu0 0.0
      %3548 = vmatmul.mubr.f32.gmra.mrb[0].mxu0 %v3385
      %v3549 = vpop.f32.mrb[0].mxu0
      %v3550 = vadd.f32 %v3306, %v3549
      %v3551 = vpop.f32.mrb[0].mxu0
      %v3552 = vadd.f32 %v3310, %v3551
      %3553 = vmatprep.mubr.f32.mxu0 0.0
      %3554 = vmatmul.mubr.f32.gmra.mrb[0].mxu0 %v3388
      %v3555 = vpop.f32.mrb[0].mxu0
      %v3556 = vadd.f32 %v3306, %v3555
      %v3557 = vpop.f32.mrb[0].mxu0
      %v3558 = vadd.f32 %v3310, %v3557
      %3559 = vdwg.mxu0
      %3560 = vmatprep.subr.mxu0 %v3397
      %3561 = vmatpush1.msra.mxu0 %v3395
      %3562 = vmatprep.subr.mxu0 0.0
      %3563 = vmatpush1.msra.mxu0 0.0
      %3564 = vmatprep.subr.mxu0 0.0
      %3565 = vmatpush1.msra.mxu0 0.0
      %3566 = vmatprep.subr.mxu0 0.0
      %3567 = vmatpush1.msra.mxu0 0.0
      %3568 = vmatprep.subr.mxu0 0.0
      %3569 = vmatpush1.msra.mxu0 0.0
      %3570 = vmatprep.subr.mxu0 0.0
      %3571 = vmatpush1.msra.mxu0 0.0
      %3572 = vmatprep.subr.mxu0 0.0
      %3573 = vmatpush1.msra.mxu0 0.0
      %3574 = vmatprep.subr.mxu0 0.0
      %3575 = vmatpush1.msra.mxu0 0.0
      %3576 = vmatprep.subr.mxu0 0.0
      %3577 = vmatpush1.msra.mxu0 0.0
      %3578 = vmatprep.subr.mxu0 0.0
      %3579 = vmatpush1.msra.mxu0 0.0
      %3580 = vmatprep.subr.mxu0 0.0
      %3581 = vmatpush1.msra.mxu0 0.0
      %3582 = vmatprep.subr.mxu0 0.0
      %3583 = vmatpush1.msra.mxu0 0.0
      %3584 = vmatprep.subr.mxu0 0.0
      %3585 = vmatpush1.msra.mxu0 0.0
      %3586 = vmatprep.subr.mxu0 0.0
      %3587 = vmatpush1.msra.mxu0 0.0
      %3588 = vmatprep.subr.mxu0 0.0
      %3589 = vmatpush1.msra.mxu0 0.0
      %3590 = vmatprep.subr.mxu0 0.0
      %3591 = vmatpush1.msra.mxu0 0.0
      %3592 = vmatprep.subr.mxu0 0.0
      %3593 = vmatpush1.msra.mxu0 0.0
      %3594 = vmatprep.subr.mxu0 0.0
      %3595 = vmatpush1.msra.mxu0 0.0
      %3596 = vmatprep.subr.mxu0 0.0
      %3597 = vmatpush1.msra.mxu0 0.0
      %3598 = vmatprep.subr.mxu0 0.0
      %3599 = vmatpush1.msra.mxu0 0.0
      %3600 = vmatprep.subr.mxu0 0.0
      %3601 = vmatpush1.msra.mxu0 0.0
      %3602 = vmatprep.subr.mxu0 0.0
      %3603 = vmatpush1.msra.mxu0 0.0
      %3604 = vmatprep.subr.mxu0 0.0
      %3605 = vmatpush1.msra.mxu0 0.0
      %3606 = vmatprep.subr.mxu0 0.0
      %3607 = vmatpush1.msra.mxu0 0.0
      %3608 = vmatprep.subr.mxu0 0.0
      %3609 = vmatpush1.msra.mxu0 0.0
      %3610 = vmatprep.subr.mxu0 0.0
      %3611 = vmatpush1.msra.mxu0 0.0
      %3612 = vmatprep.subr.mxu0 0.0
      %3613 = vmatpush1.msra.mxu0 0.0
      %3614 = vmatprep.subr.mxu0 0.0
      %3615 = vmatpush1.msra.mxu0 0.0
      %3616 = vmatprep.subr.mxu0 0.0
      %3617 = vmatpush1.msra.mxu0 0.0
      %3618 = vmatprep.subr.mxu0 0.0
      %3619 = vmatpush1.msra.mxu0 0.0
      %3620 = vmatprep.subr.mxu0 0.0
      %3621 = vmatpush1.msra.mxu0 0.0
      %3622 = vmatprep.subr.mxu0 0.0
      %3623 = vmatpush1.msra.mxu0 0.0
      %3624 = vmatprep.mubr.f32.mxu0 0.0
      %3625 = vmatmul.mubr.f32.gmra.mrb[0].mxu0 %v3343
      %v3626 = vpop.f32.mrb[0].mxu0
      %v3627 = vadd.f32 %v3314, %v3626
      %v3628 = vpop.f32.mrb[0].mxu0
      %v3629 = vadd.f32 %v3318, %v3628
      %3630 = vmatprep.mubr.f32.mxu0 0.0
      %3631 = vmatmul.mubr.f32.gmra.mrb[0].mxu0 %v3346
      %v3632 = vpop.f32.mrb[0].mxu0
      %v3633 = vadd.f32 %v3314, %v3632
      %v3634 = vpop.f32.mrb[0].mxu0
      %v3635 = vadd.f32 %v3318, %v3634
      %3636 = vmatprep.mubr.f32.mxu0 0.0
      %3637 = vmatmul.mubr.f32.gmra.mrb[0].mxu0 %v3349
      %v3638 = vpop.f32.mrb[0].mxu0
      %v3639 = vadd.f32 %v3314, %v3638
      %v3640 = vpop.f32.mrb[0].mxu0
      %v3641 = vadd.f32 %v3318, %v3640
      %3642 = vmatprep.mubr.f32.mxu0 0.0
      %3643 = vmatmul.mubr.f32.gmra.mrb[0].mxu0 %v3352
      %v3644 = vpop.f32.mrb[0].mxu0
      %v3645 = vadd.f32 %v3314, %v3644
      %v3646 = vpop.f32.mrb[0].mxu0
      %v3647 = vadd.f32 %v3318, %v3646
      %3648 = vmatprep.mubr.f32.mxu0 0.0
      %3649 = vmatmul.mubr.f32.gmra.mrb[0].mxu0 %v3355
      %v3650 = vpop.f32.mrb[0].mxu0
      %v3651 = vadd.f32 %v3314, %v3650
      %v3652 = vpop.f32.mrb[0].mxu0
      %v3653 = vadd.f32 %v3318, %v3652
      %3654 = vmatprep.mubr.f32.mxu0 0.0
      %3655 = vmatmul.mubr.f32.gmra.mrb[0].mxu0 %v3358
      %v3656 = vpop.f32.mrb[0].mxu0
      %v3657 = vadd.f32 %v3314, %v3656
      %v3658 = vpop.f32.mrb[0].mxu0
      %v3659 = vadd.f32 %v3318, %v3658
      %3660 = vmatprep.mubr.f32.mxu0 0.0
      %3661 = vmatmul.mubr.f32.gmra.mrb[0].mxu0 %v3361
      %v3662 = vpop.f32.mrb[0].mxu0
      %v3663 = vadd.f32 %v3314, %v3662
      %v3664 = vpop.f32.mrb[0].mxu0
      %v3665 = vadd.f32 %v3318, %v3664
      %3666 = vmatprep.mubr.f32.mxu0 0.0
      %3667 = vmatmul.mubr.f32.gmra.mrb[0].mxu0 %v3364
      %v3668 = vpop.f32.mrb[0].mxu0
      %v3669 = vadd.f32 %v3314, %v3668
      %v3670 = vpop.f32.mrb[0].mxu0
      %v3671 = vadd.f32 %v3318, %v3670
      %3672 = vmatprep.mubr.f32.mxu0 0.0
      %3673 = vmatmul.mubr.f32.gmra.mrb[0].mxu0 %v3367
      %v3674 = vpop.f32.mrb[0].mxu0
      %v3675 = vadd.f32 %v3314, %v3674
      %v3676 = vpop.f32.mrb[0].mxu0
      %v3677 = vadd.f32 %v3318, %v3676
      %3678 = vmatprep.mubr.f32.mxu0 0.0
      %3679 = vmatmul.mubr.f32.gmra.mrb[0].mxu0 %v3370
      %v3680 = vpop.f32.mrb[0].mxu0
      %v3681 = vadd.f32 %v3314, %v3680
      %v3682 = vpop.f32.mrb[0].mxu0
      %v3683 = vadd.f32 %v3318, %v3682
      %3684 = vmatprep.mubr.f32.mxu0 0.0
      %3685 = vmatmul.mubr.f32.gmra.mrb[0].mxu0 %v3373
      %v3686 = vpop.f32.mrb[0].mxu0
      %v3687 = vadd.f32 %v3314, %v3686
      %v3688 = vpop.f32.mrb[0].mxu0
      %v3689 = vadd.f32 %v3318, %v3688
      %3690 = vmatprep.mubr.f32.mxu0 0.0
      %3691 = vmatmul.mubr.f32.gmra.mrb[0].mxu0 %v3376
      %v3692 = vpop.f32.mrb[0].mxu0
      %v3693 = vadd.f32 %v3314, %v3692
      %v3694 = vpop.f32.mrb[0].mxu0
      %v3695 = vadd.f32 %v3318, %v3694
      %3696 = vmatprep.mubr.f32.mxu0 0.0
      %3697 = vmatmul.mubr.f32.gmra.mrb[0].mxu0 %v3379
      %v3698 = vpop.f32.mrb[0].mxu0
      %v3699 = vadd.f32 %v3314, %v3698
      %v3700 = vpop.f32.mrb[0].mxu0
      %v3701 = vadd.f32 %v3318, %v3700
      %3702 = vmatprep.mubr.f32.mxu0 0.0
      %3703 = vmatmul.mubr.f32.gmra.mrb[0].mxu0 %v3382
      %v3704 = vpop.f32.mrb[0].mxu0
      %v3705 = vadd.f32 %v3314, %v3704
      %v3706 = vpop.f32.mrb[0].mxu0
      %v3707 = vadd.f32 %v3318, %v3706
      %3708 = vmatprep.mubr.f32.mxu0 0.0
      %3709 = vmatmul.mubr.f32.gmra.mrb[0].mxu0 %v3385
      %v3710 = vpop.f32.mrb[0].mxu0
      %v3711 = vadd.f32 %v3314, %v3710
      %v3712 = vpop.f32.mrb[0].mxu0
      %v3713 = vadd.f32 %v3318, %v3712
      %3714 = vmatprep.mubr.f32.mxu0 0.0
      %3715 = vmatmul.mubr.f32.gmra.mrb[0].mxu0 %v3388
      %v3716 = vpop.f32.mrb[0].mxu0
      %v3717 = vadd.f32 %v3314, %v3716
      %v3718 = vpop.f32.mrb[0].mxu0
      %v3719 = vadd.f32 %v3318, %v3718
      %3720 = vdwg.mxu0
      %v3721 = vmax.f32 %v3466, 0.0
      %v3722 = vmax.f32 %v3468, 0.0
      %v3723 = vmax.f32 %v3627, 0.0
      %v3724 = vmax.f32 %v3629, 0.0
      %v3725 = vmax.f32 %v3472, 0.0
      %v3726 = vmax.f32 %v3474, 0.0
      %v3727 = vmax.f32 %v3633, 0.0
      %v3728 = vmax.f32 %v3635, 0.0
      %v3729 = vmax.f32 %v3478, 0.0
      %v3730 = vmax.f32 %v3480, 0.0
      %v3731 = vmax.f32 %v3639, 0.0
      %v3732 = vmax.f32 %v3641, 0.0
      %v3733 = vmax.f32 %v3484, 0.0
      %v3734 = vmax.f32 %v3486, 0.0
      %v3735 = vmax.f32 %v3645, 0.0
      %v3736 = vmax.f32 %v3647, 0.0
      %v3737 = vmax.f32 %v3490, 0.0
      %v3738 = vmax.f32 %v3492, 0.0
      %v3739 = vmax.f32 %v3651, 0.0
      %v3740 = vmax.f32 %v3653, 0.0
      %v3741 = vmax.f32 %v3496, 0.0
      %v3742 = vmax.f32 %v3498, 0.0
      %v3743 = vmax.f32 %v3657, 0.0
      %v3744 = vmax.f32 %v3659, 0.0
      %v3745 = vmax.f32 %v3502, 0.0
      %v3746 = vmax.f32 %v3504, 0.0
      %v3747 = vmax.f32 %v3663, 0.0
      %v3748 = vmax.f32 %v3665, 0.0
      %v3749 = vmax.f32 %v3508, 0.0
      %v3750 = vmax.f32 %v3510, 0.0
      %v3751 = vmax.f32 %v3669, 0.0
      %v3752 = vmax.f32 %v3671, 0.0
      %v3753 = vmax.f32 %v3514, 0.0
      %v3754 = vmax.f32 %v3516, 0.0
      %v3755 = vmax.f32 %v3675, 0.0
      %v3756 = vmax.f32 %v3677, 0.0
      %v3757 = vmax.f32 %v3520, 0.0
      %v3758 = vmax.f32 %v3522, 0.0
      %v3759 = vmax.f32 %v3681, 0.0
      %v3760 = vmax.f32 %v3683, 0.0
      %v3761 = vmax.f32 %v3526, 0.0
      %v3762 = vmax.f32 %v3528, 0.0
      %v3763 = vmax.f32 %v3687, 0.0
      %v3764 = vmax.f32 %v3689, 0.0
      %v3765 = vmax.f32 %v3532, 0.0
      %v3766 = vmax.f32 %v3534, 0.0
      %v3767 = vmax.f32 %v3693, 0.0
      %v3768 = vmax.f32 %v3695, 0.0
      %v3769 = vmax.f32 %v3538, 0.0
      %v3770 = vmax.f32 %v3540, 0.0
      %v3771 = vmax.f32 %v3699, 0.0
      %v3772 = vmax.f32 %v3701, 0.0
      %v3773 = vmax.f32 %v3544, 0.0
      %v3774 = vmax.f32 %v3546, 0.0
      %v3775 = vmax.f32 %v3705, 0.0
      %v3776 = vmax.f32 %v3707, 0.0
      %v3777 = vmax.f32 %v3550, 0.0
      %v3778 = vmax.f32 %v3552, 0.0
      %v3779 = vmax.f32 %v3711, 0.0
      %v3780 = vmax.f32 %v3713, 0.0
      %v3781 = vmax.f32 %v3556, 0.0
      %v3782 = vmax.f32 %v3558, 0.0
      %v3783 = vmax.f32 %v3717, 0.0
      %v3784 = vmax.f32 %v3719, 0.0
      %v3785 = vpack.c.bf16 %v3725, %v3721
      %v3786 = vpack.c.bf16 %v3726, %v3722
      %v3787 = vpack.c.bf16 %v3727, %v3723
      %v3788 = vpack.c.bf16 %v3728, %v3724
      %v3789 = vpack.c.bf16 %v3733, %v3729
      %v3790 = vpack.c.bf16 %v3734, %v3730
      %v3791 = vpack.c.bf16 %v3735, %v3731
      %v3792 = vpack.c.bf16 %v3736, %v3732
      %v3793 = vpack.c.bf16 %v3741, %v3737
      %v3794 = vpack.c.bf16 %v3742, %v3738
      %v3795 = vpack.c.bf16 %v3743, %v3739
      %v3796 = vpack.c.bf16 %v3744, %v3740
      %v3797 = vpack.c.bf16 %v3749, %v3745
      %v3798 = vpack.c.bf16 %v3750, %v3746
      %v3799 = vpack.c.bf16 %v3751, %v3747
      %v3800 = vpack.c.bf16 %v3752, %v3748
      %v3801 = vpack.c.bf16 %v3757, %v3753
      %v3802 = vpack.c.bf16 %v3758, %v3754
      %v3803 = vpack.c.bf16 %v3759, %v3755
      %v3804 = vpack.c.bf16 %v3760, %v3756
      %v3805 = vpack.c.bf16 %v3765, %v3761
      %v3806 = vpack.c.bf16 %v3766, %v3762
      %v3807 = vpack.c.bf16 %v3767, %v3763
      %v3808 = vpack.c.bf16 %v3768, %v3764
      %v3809 = vpack.c.bf16 %v3773, %v3769
      %v3810 = vpack.c.bf16 %v3774, %v3770
      %v3811 = vpack.c.bf16 %v3775, %v3771
      %v3812 = vpack.c.bf16 %v3776, %v3772
      %v3813 = vpack.c.bf16 %v3781, %v3777
      %v3814 = vpack.c.bf16 %v3782, %v3778
      %v3815 = vpack.c.bf16 %v3783, %v3779
      %v3816 = vpack.c.bf16 %v3784, %v3780
      %v3817 = vld [vmem:[%s9] sm:$0xff]
      %v3818 = vld [vmem:[%s9 + $0x8] sm:$0xff]
      %v3819 = vld [vmem:[%s9 + $0x10] sm:$0xff]
      %v3820 = vld [vmem:[%s9 + $0x18] sm:$0xf]
      %v3821 = vld [vmem:[%s9 + $0x1c] sm:$0xff]
      %v3822 = vld [vmem:[%s9 + $0x24] sm:$0xff]
      %v3823 = vld [vmem:[%s9 + $0x2c] sm:$0xff]
      %v3824 = vld [vmem:[%s9 + $0x34] sm:$0xf]
      %v3825 = vld [vmem:[%s9 + $0x38] sm:$0xff]
      %v3826 = vld [vmem:[%s9 + $0x40] sm:$0xff]
      %v3827 = vld [vmem:[%s9 + $0x48] sm:$0xff]
      %v3828 = vld [vmem:[%s9 + $0x50] sm:$0xf]
      %v3829 = vld [vmem:[%s9 + $0x54] sm:$0xff]
      %v3830 = vld [vmem:[%s9 + $0x5c] sm:$0xff]
      %v3831 = vld [vmem:[%s9 + $0x64] sm:$0xff]
      %v3832 = vld [vmem:[%s9 + $0x6c] sm:$0xf]
      %v3833 = vld [vmem:[%s9 + $0x70] sm:$0xff]
      %v3834 = vld [vmem:[%s9 + $0x78] sm:$0xff]
      %v3835 = vld [vmem:[%s9 + $0x80] sm:$0xff]
      %v3836 = vld [vmem:[%s9 + $0x88] sm:$0xf]
      %v3837 = vld [vmem:[%s9 + $0x8c] sm:$0xff]
      %v3838 = vld [vmem:[%s9 + $0x94] sm:$0xff]
      %v3839 = vld [vmem:[%s9 + $0x9c] sm:$0xff]
      %v3840 = vld [vmem:[%s9 + $0xa4] sm:$0xf]
      %v3841 = vld [vmem:[%s9 + $0xa8] sm:$0xff]
      %v3842 = vld [vmem:[%s9 + $0xb0] sm:$0xff]
      %v3843 = vld [vmem:[%s9 + $0xb8] sm:$0xff]
      %v3844 = vld [vmem:[%s9 + $0xc0] sm:$0xf]
      %v3845 = vld [vmem:[%s9 + $0xc4] sm:$0xff]
      %v3846 = vld [vmem:[%s9 + $0xcc] sm:$0xff]
      %v3847 = vld [vmem:[%s9 + $0xd4] sm:$0xff]
      %v3848 = vld [vmem:[%s9 + $0xdc] sm:$0xf]
      %v3849 = vld [vmem:[%s9 + $0xe0] sm:$0xff]
      %v3850 = vld [vmem:[%s9 + $0xe8] sm:$0xff]
      %v3851 = vld [vmem:[%s9 + $0xf0] sm:$0xff]
      %v3852 = vld [vmem:[%s9 + $0xf8] sm:$0xf]
      %v3853 = vld [vmem:[%s9 + $0xfc] sm:$0xff]
      %v3854 = vld [vmem:[%s9 + $0x104] sm:$0xff]
      %v3855 = vld [vmem:[%s9 + $0x10c] sm:$0xff]
      %v3856 = vld [vmem:[%s9 + $0x114] sm:$0xf]
      %v3857 = vld [vmem:[%s9 + $0x118] sm:$0xff]
      %v3858 = vld [vmem:[%s9 + $0x120] sm:$0xff]
      %v3859 = vld [vmem:[%s9 + $0x128] sm:$0xff]
      %v3860 = vld [vmem:[%s9 + $0x130] sm:$0xf]
      %v3861 = vld [vmem:[%s9 + $0x134] sm:$0xff]
      %v3862 = vld [vmem:[%s9 + $0x13c] sm:$0xff]
      %v3863 = vld [vmem:[%s9 + $0x144] sm:$0xff]
      %v3864 = vld [vmem:[%s9 + $0x14c] sm:$0xf]
      %v3865 = vld [vmem:[%s9 + $0x150] sm:$0xff]
      %v3866 = vld [vmem:[%s9 + $0x158] sm:$0xff]
      %v3867 = vld [vmem:[%s9 + $0x160] sm:$0xff]
      %v3868 = vld [vmem:[%s9 + $0x168] sm:$0xf]
      %v3869 = vld [vmem:[%s9 + $0x16c] sm:$0xff]
      %v3870 = vld [vmem:[%s9 + $0x174] sm:$0xff]
      %v3871 = vld [vmem:[%s9 + $0x17c] sm:$0xff]
      %v3872 = vld [vmem:[%s9 + $0x184] sm:$0xf]
      %v3873 = vld [vmem:[%s9 + $0x188] sm:$0xff]
      %v3874 = vld [vmem:[%s9 + $0x190] sm:$0xff]
      %v3875 = vld [vmem:[%s9 + $0x198] sm:$0xff]
      %v3876 = vld [vmem:[%s9 + $0x1a0] sm:$0xf]
      %v3877 = vld [vmem:[%s9 + $0x1a4] sm:$0xff]
      %v3878 = vld [vmem:[%s9 + $0x1ac] sm:$0xff]
      %v3879 = vld [vmem:[%s9 + $0x1b4] sm:$0xff]
      %v3880 = vld [vmem:[%s9 + $0x1bc] sm:$0xf]
      %v3881 = vld [vmem:[%s9 + $0x1c0] sm:$0xff]
      %v3882 = vld [vmem:[%s9 + $0x1c8] sm:$0xff]
      %v3883 = vld [vmem:[%s9 + $0x1d0] sm:$0xff]
      %v3884 = vld [vmem:[%s9 + $0x1d8] sm:$0xf]
      %v3885 = vld [vmem:[%s9 + $0x1dc] sm:$0xff]
      %v3886 = vld [vmem:[%s9 + $0x1e4] sm:$0xff]
      %v3887 = vld [vmem:[%s9 + $0x1ec] sm:$0xff]
      %v3888 = vld [vmem:[%s9 + $0x1f4] sm:$0xf]
      %v3889 = vld [vmem:[%s9 + $0x1f8] sm:$0xff]
      %v3890 = vld [vmem:[%s9 + $0x200] sm:$0xff]
      %v3891 = vld [vmem:[%s9 + $0x208] sm:$0xff]
      %v3892 = vld [vmem:[%s9 + $0x210] sm:$0xf]
      %v3893 = vld [vmem:[%s9 + $0x214] sm:$0xff]
      %v3894 = vld [vmem:[%s9 + $0x21c] sm:$0xff]
      %v3895 = vld [vmem:[%s9 + $0x224] sm:$0xff]
      %v3896 = vld [vmem:[%s9 + $0x22c] sm:$0xf]
      %v3897 = vld [vmem:[%s9 + $0x230] sm:$0xff]
      %v3898 = vld [vmem:[%s9 + $0x238] sm:$0xff]
      %v3899 = vld [vmem:[%s9 + $0x240] sm:$0xff]
      %v3900 = vld [vmem:[%s9 + $0x248] sm:$0xf]
      %v3901 = vld [vmem:[%s9 + $0x24c] sm:$0xff]
      %v3902 = vld [vmem:[%s9 + $0x254] sm:$0xff]
      %v3903 = vld [vmem:[%s9 + $0x25c] sm:$0xff]
      %v3904 = vld [vmem:[%s9 + $0x264] sm:$0xf]
      %v3905 = vld [vmem:[%s9 + $0x268] sm:$0xff]
      %v3906 = vld [vmem:[%s9 + $0x270] sm:$0xff]
      %v3907 = vld [vmem:[%s9 + $0x278] sm:$0xff]
      %v3908 = vld [vmem:[%s9 + $0x280] sm:$0xf]
      %v3909 = vld [vmem:[%s9 + $0x284] sm:$0xff]
      %v3910 = vld [vmem:[%s9 + $0x28c] sm:$0xff]
      %v3911 = vld [vmem:[%s9 + $0x294] sm:$0xff]
      %v3912 = vld [vmem:[%s9 + $0x29c] sm:$0xf]
      %v3913 = vld [vmem:[%s9 + $0x2a0] sm:$0xff]
      %v3914 = vld [vmem:[%s9 + $0x2a8] sm:$0xff]
      %v3915 = vld [vmem:[%s9 + $0x2b0] sm:$0xff]
      %v3916 = vld [vmem:[%s9 + $0x2b8] sm:$0xf]
      %v3917 = vld [vmem:[%s9 + $0x2bc] sm:$0xff]
      %v3918 = vld [vmem:[%s9 + $0x2c4] sm:$0xff]
      %v3919 = vld [vmem:[%s9 + $0x2cc] sm:$0xff]
      %v3920 = vld [vmem:[%s9 + $0x2d4] sm:$0xf]
      %v3921 = vld [vmem:[%s9 + $0x2d8] sm:$0xff]
      %v3922 = vld [vmem:[%s9 + $0x2e0] sm:$0xff]
      %v3923 = vld [vmem:[%s9 + $0x2e8] sm:$0xff]
      %v3924 = vld [vmem:[%s9 + $0x2f0] sm:$0xf]
      %v3925 = vld [vmem:[%s9 + $0x2f4] sm:$0xff]
      %v3926 = vld [vmem:[%s9 + $0x2fc] sm:$0xff]
      %v3927 = vld [vmem:[%s9 + $0x304] sm:$0xff]
      %v3928 = vld [vmem:[%s9 + $0x30c] sm:$0xf]
      %v3929 = vld [vmem:[%s9 + $0x310] sm:$0xff]
      %v3930 = vld [vmem:[%s9 + $0x318] sm:$0xff]
      %v3931 = vld [vmem:[%s9 + $0x320] sm:$0xff]
      %v3932 = vld [vmem:[%s9 + $0x328] sm:$0xf]
      %v3933 = vld [vmem:[%s9 + $0x32c] sm:$0xff]
      %v3934 = vld [vmem:[%s9 + $0x334] sm:$0xff]
      %v3935 = vld [vmem:[%s9 + $0x33c] sm:$0xff]
      %v3936 = vld [vmem:[%s9 + $0x344] sm:$0xf]
      %v3937 = vld [vmem:[%s9 + $0x348] sm:$0xff]
      %v3938 = vld [vmem:[%s9 + $0x350] sm:$0xff]
      %v3939 = vld [vmem:[%s9 + $0x358] sm:$0xff]
      %v3940 = vld [vmem:[%s9 + $0x360] sm:$0xf]
      %v3941 = vld [vmem:[%s9 + $0x364] sm:$0xff]
      %v3942 = vld [vmem:[%s9 + $0x36c] sm:$0xff]
      %v3943 = vld [vmem:[%s9 + $0x374] sm:$0xff]
      %v3944 = vld [vmem:[%s9 + $0x37c] sm:$0xf]
      %v3945 = vld [vmem:[%s9 + $0x380] sm:$0xff]
      %v3946 = vld [vmem:[%s9 + $0x388] sm:$0xff]
      %v3947 = vld [vmem:[%s9 + $0x390] sm:$0xff]
      %v3948 = vld [vmem:[%s9 + $0x398] sm:$0xf]
      %v3949 = vld [vmem:[%s9 + $0x39c] sm:$0xff]
      %v3950 = vld [vmem:[%s9 + $0x3a4] sm:$0xff]
      %v3951 = vld [vmem:[%s9 + $0x3ac] sm:$0xff]
      %v3952 = vld [vmem:[%s9 + $0x3b4] sm:$0xf]
      %v3953 = vld [vmem:[%s9 + $0x3b8] sm:$0xff]
      %v3954 = vld [vmem:[%s9 + $0x3c0] sm:$0xff]
      %v3955 = vld [vmem:[%s9 + $0x3c8] sm:$0xff]
      %v3956 = vld [vmem:[%s9 + $0x3d0] sm:$0xf]
      %v3957 = vld [vmem:[%s9 + $0x3d4] sm:$0xff]
      %v3958 = vld [vmem:[%s9 + $0x3dc] sm:$0xff]
      %v3959 = vld [vmem:[%s9 + $0x3e4] sm:$0xff]
      %v3960 = vld [vmem:[%s9 + $0x3ec] sm:$0xf]
      %v3961 = vld [vmem:[%s9 + $0x3f0] sm:$0xff]
      %v3962 = vld [vmem:[%s9 + $0x3f8] sm:$0xff]
      %v3963 = vld [vmem:[%s9 + $0x400] sm:$0xff]
      %v3964 = vld [vmem:[%s9 + $0x408] sm:$0xf]
      %v3965 = vld [vmem:[%s9 + $0x40c] sm:$0xff]
      %v3966 = vld [vmem:[%s9 + $0x414] sm:$0xff]
      %v3967 = vld [vmem:[%s9 + $0x41c] sm:$0xff]
      %v3968 = vld [vmem:[%s9 + $0x424] sm:$0xf]
      %v3969 = vld [vmem:[%s9 + $0x428] sm:$0xff]
      %v3970 = vld [vmem:[%s9 + $0x430] sm:$0xff]
      %v3971 = vld [vmem:[%s9 + $0x438] sm:$0xff]
      %v3972 = vld [vmem:[%s9 + $0x440] sm:$0xf]
      %v3973 = vld [vmem:[%s9 + $0x444] sm:$0xff]
      %v3974 = vld [vmem:[%s9 + $0x44c] sm:$0xff]
      %v3975 = vld [vmem:[%s9 + $0x454] sm:$0xff]
      %v3976 = vld [vmem:[%s9 + $0x45c] sm:$0xf]
      %v3977 = vld [vmem:[%s9 + $0x460] sm:$0xff]
      %v3978 = vld [vmem:[%s9 + $0x468] sm:$0xff]
      %v3979 = vld [vmem:[%s9 + $0x470] sm:$0xff]
      %v3980 = vld [vmem:[%s9 + $0x478] sm:$0xf]
      %v3981 = vld [vmem:[%s9 + $0x47c] sm:$0xff]
      %v3982 = vld [vmem:[%s9 + $0x484] sm:$0xff]
      %v3983 = vld [vmem:[%s9 + $0x48c] sm:$0xff]
      %v3984 = vld [vmem:[%s9 + $0x494] sm:$0xf]
      %v3985 = vld [vmem:[%s9 + $0x498] sm:$0xff]
      %v3986 = vld [vmem:[%s9 + $0x4a0] sm:$0xff]
      %v3987 = vld [vmem:[%s9 + $0x4a8] sm:$0xff]
      %v3988 = vld [vmem:[%s9 + $0x4b0] sm:$0xf]
      %v3989 = vld [vmem:[%s9 + $0x4b4] sm:$0xff]
      %v3990 = vld [vmem:[%s9 + $0x4bc] sm:$0xff]
      %v3991 = vld [vmem:[%s9 + $0x4c4] sm:$0xff]
      %v3992 = vld [vmem:[%s9 + $0x4cc] sm:$0xf]
      %v3993 = vld [vmem:[%s9 + $0x4d0] sm:$0xff]
      %v3994 = vld [vmem:[%s9 + $0x4d8] sm:$0xff]
      %v3995 = vld [vmem:[%s9 + $0x4e0] sm:$0xff]
      %v3996 = vld [vmem:[%s9 + $0x4e8] sm:$0xf]
      %v3997 = vld [vmem:[%s9 + $0x4ec] sm:$0xff]
      %v3998 = vld [vmem:[%s9 + $0x4f4] sm:$0xff]
      %v3999 = vld [vmem:[%s9 + $0x4fc] sm:$0xff]
      %v4000 = vld [vmem:[%s9 + $0x504] sm:$0xf]
      %v4001 = vld [vmem:[%s9 + $0x508] sm:$0xff]
      %v4002 = vld [vmem:[%s9 + $0x510] sm:$0xff]
      %v4003 = vld [vmem:[%s9 + $0x518] sm:$0xff]
      %v4004 = vld [vmem:[%s9 + $0x520] sm:$0xf]
      %v4005 = vld [vmem:[%s9 + $0x524] sm:$0xff]
      %v4006 = vld [vmem:[%s9 + $0x52c] sm:$0xff]
      %v4007 = vld [vmem:[%s9 + $0x534] sm:$0xff]
      %v4008 = vld [vmem:[%s9 + $0x53c] sm:$0xf]
      %v4009 = vld [vmem:[%s9 + $0x540] sm:$0xff]
      %v4010 = vld [vmem:[%s9 + $0x548] sm:$0xff]
      %v4011 = vld [vmem:[%s9 + $0x550] sm:$0xff]
      %v4012 = vld [vmem:[%s9 + $0x558] sm:$0xf]
      %v4013 = vld [vmem:[%s9 + $0x55c] sm:$0xff]
      %v4014 = vld [vmem:[%s9 + $0x564] sm:$0xff]
      %v4015 = vld [vmem:[%s9 + $0x56c] sm:$0xff]
      %v4016 = vld [vmem:[%s9 + $0x574] sm:$0xf]
      %v4017 = vld [vmem:[%s9 + $0x578] sm:$0xff]
      %v4018 = vld [vmem:[%s9 + $0x580] sm:$0xff]
      %v4019 = vld [vmem:[%s9 + $0x588] sm:$0xff]
      %v4020 = vld [vmem:[%s9 + $0x590] sm:$0xf]
      %v4021 = vld [vmem:[%s9 + $0x594] sm:$0xff]
      %v4022 = vld [vmem:[%s9 + $0x59c] sm:$0xff]
      %v4023 = vld [vmem:[%s9 + $0x5a4] sm:$0xff]
      %v4024 = vld [vmem:[%s9 + $0x5ac] sm:$0xf]
      %v4025 = vld [vmem:[%s9 + $0x5b0] sm:$0xff]
      %v4026 = vld [vmem:[%s9 + $0x5b8] sm:$0xff]
      %v4027 = vld [vmem:[%s9 + $0x5c0] sm:$0xff]
      %v4028 = vld [vmem:[%s9 + $0x5c8] sm:$0xf]
      %v4029 = vld [vmem:[%s9 + $0x5cc] sm:$0xff]
      %v4030 = vld [vmem:[%s9 + $0x5d4] sm:$0xff]
      %v4031 = vld [vmem:[%s9 + $0x5dc] sm:$0xff]
      %v4032 = vld [vmem:[%s9 + $0x5e4] sm:$0xf]
      %v4033 = vld [vmem:[%s9 + $0x5e8] sm:$0xff]
      %v4034 = vld [vmem:[%s9 + $0x5f0] sm:$0xff]
      %v4035 = vld [vmem:[%s9 + $0x5f8] sm:$0xff]
      %v4036 = vld [vmem:[%s9 + $0x600] sm:$0xf]
      %v4037 = vld [vmem:[%s9 + $0x604] sm:$0xff]
      %v4038 = vld [vmem:[%s9 + $0x60c] sm:$0xff]
      %v4039 = vld [vmem:[%s9 + $0x614] sm:$0xff]
      %v4040 = vld [vmem:[%s9 + $0x61c] sm:$0xf]
      %v4041 = vld [vmem:[%s9 + $0x620] sm:$0xff]
      %v4042 = vld [vmem:[%s9 + $0x628] sm:$0xff]
      %v4043 = vld [vmem:[%s9 + $0x630] sm:$0xff]
      %v4044 = vld [vmem:[%s9 + $0x638] sm:$0xf]
      %v4045 = vld [vmem:[%s9 + $0x63c] sm:$0xff]
      %v4046 = vld [vmem:[%s9 + $0x644] sm:$0xff]
      %v4047 = vld [vmem:[%s9 + $0x64c] sm:$0xff]
      %v4048 = vld [vmem:[%s9 + $0x654] sm:$0xf]
      %v4049 = vld [vmem:[%s9 + $0x658] sm:$0xff]
      %v4050 = vld [vmem:[%s9 + $0x660] sm:$0xff]
      %v4051 = vld [vmem:[%s9 + $0x668] sm:$0xff]
      %v4052 = vld [vmem:[%s9 + $0x670] sm:$0xf]
      %v4053 = vld [vmem:[%s9 + $0x674] sm:$0xff]
      %v4054 = vld [vmem:[%s9 + $0x67c] sm:$0xff]
      %v4055 = vld [vmem:[%s9 + $0x684] sm:$0xff]
      %v4056 = vld [vmem:[%s9 + $0x68c] sm:$0xf]
      %v4057 = vld [vmem:[%s9 + $0x690] sm:$0xff]
      %v4058 = vld [vmem:[%s9 + $0x698] sm:$0xff]
      %v4059 = vld [vmem:[%s9 + $0x6a0] sm:$0xff]
      %v4060 = vld [vmem:[%s9 + $0x6a8] sm:$0xf]
      %v4061 = vld [vmem:[%s9 + $0x6ac] sm:$0xff]
      %v4062 = vld [vmem:[%s9 + $0x6b4] sm:$0xff]
      %v4063 = vld [vmem:[%s9 + $0x6bc] sm:$0xff]
      %v4064 = vld [vmem:[%s9 + $0x6c4] sm:$0xf]
      %v4065 = vld [vmem:[%s9 + $0x6c8] sm:$0xff]
      %v4066 = vld [vmem:[%s9 + $0x6d0] sm:$0xff]
      %v4067 = vld [vmem:[%s9 + $0x6d8] sm:$0xff]
      %v4068 = vld [vmem:[%s9 + $0x6e0] sm:$0xf]
      %v4069 = vld [vmem:[%s9 + $0x6e4] sm:$0xff]
      %v4070 = vld [vmem:[%s9 + $0x6ec] sm:$0xff]
      %v4071 = vld [vmem:[%s9 + $0x6f4] sm:$0xff]
      %v4072 = vld [vmem:[%s9 + $0x6fc] sm:$0xf]
      %v4073 = vld [vmem:[%s10] sm:$0x7f]
      %v4075 = vlaneseq
      %v4076 = vshrl.u32 %v4075, 7
      %v4077 = vsub.s32 0, %v4076
      %v4078 = vrot.slane %v4073, %v4077
      %v4079 = vlaneseq
      %v4080 = vshrl.u32 %v4079, 7
      %v4081 = vsub.s32 1, %v4080
      %v4082 = vrot.slane %v4073, %v4081
      %v4083 = vlaneseq
      %v4084 = vshrl.u32 %v4083, 7
      %v4085 = vsub.s32 2, %v4084
      %v4086 = vrot.slane %v4073, %v4085
      %v4087 = vlaneseq
      %v4088 = vshrl.u32 %v4087, 7
      %v4089 = vsub.s32 3, %v4088
      %v4090 = vrot.slane %v4073, %v4089
      %v4091 = vlaneseq
      %v4092 = vshrl.u32 %v4091, 7
      %v4093 = vsub.s32 4, %v4092
      %v4094 = vrot.slane %v4073, %v4093
      %v4095 = vlaneseq
      %v4096 = vshrl.u32 %v4095, 7
      %v4097 = vsub.s32 5, %v4096
      %v4098 = vrot.slane %v4073, %v4097
      %v4099 = vlaneseq
      %v4100 = vshrl.u32 %v4099, 7
      %v4101 = vsub.s32 6, %v4100
      %v4102 = vrot.slane %v4073, %v4101
      %v4366 = vunpack.c.l.b16 %v3817
      %v4367 = vunpack.c.h.b16 %v3817
      %v4368 = vunpack.c.l.b16 %v3818
      %v4369 = vunpack.c.h.b16 %v3818
      %v4370 = vunpack.c.l.b16 %v3819
      %v4371 = vunpack.c.h.b16 %v3819
      %v4372 = vunpack.c.l.b16 %v3820
      %v4373 = vunpack.c.l.b16 %v3821
      %v4374 = vunpack.c.h.b16 %v3821
      %v4375 = vunpack.c.l.b16 %v3822
      %v4376 = vunpack.c.h.b16 %v3822
      %v4377 = vunpack.c.l.b16 %v3823
      %v4378 = vunpack.c.h.b16 %v3823
      %v4379 = vunpack.c.l.b16 %v3824
      %v4380 = vunpack.c.l.b16 %v3825
      %v4381 = vunpack.c.h.b16 %v3825
      %v4382 = vunpack.c.l.b16 %v3826
      %v4383 = vunpack.c.h.b16 %v3826
      %v4384 = vunpack.c.l.b16 %v3827
      %v4385 = vunpack.c.h.b16 %v3827
      %v4386 = vunpack.c.l.b16 %v3828
      %v4387 = vunpack.c.l.b16 %v3829
      %v4388 = vunpack.c.h.b16 %v3829
      %v4389 = vunpack.c.l.b16 %v3830
      %v4390 = vunpack.c.h.b16 %v3830
      %v4391 = vunpack.c.l.b16 %v3831
      %v4392 = vunpack.c.h.b16 %v3831
      %v4393 = vunpack.c.l.b16 %v3832
      %v4394 = vunpack.c.l.b16 %v3833
      %v4395 = vunpack.c.h.b16 %v3833
      %v4396 = vunpack.c.l.b16 %v3834
      %v4397 = vunpack.c.h.b16 %v3834
      %v4398 = vunpack.c.l.b16 %v3835
      %v4399 = vunpack.c.h.b16 %v3835
      %v4400 = vunpack.c.l.b16 %v3836
      %v4401 = vunpack.c.l.b16 %v3837
      %v4402 = vunpack.c.h.b16 %v3837
      %v4403 = vunpack.c.l.b16 %v3838
      %v4404 = vunpack.c.h.b16 %v3838
      %v4405 = vunpack.c.l.b16 %v3839
      %v4406 = vunpack.c.h.b16 %v3839
      %v4407 = vunpack.c.l.b16 %v3840
      %v4408 = vunpack.c.l.b16 %v3841
      %v4409 = vunpack.c.h.b16 %v3841
      %v4410 = vunpack.c.l.b16 %v3842
      %v4411 = vunpack.c.h.b16 %v3842
      %v4412 = vunpack.c.l.b16 %v3843
      %v4413 = vunpack.c.h.b16 %v3843
      %v4414 = vunpack.c.l.b16 %v3844
      %v4415 = vunpack.c.l.b16 %v3845
      %v4416 = vunpack.c.h.b16 %v3845
      %v4417 = vunpack.c.l.b16 %v3846
      %v4418 = vunpack.c.h.b16 %v3846
      %v4419 = vunpack.c.l.b16 %v3847
      %v4420 = vunpack.c.h.b16 %v3847
      %v4421 = vunpack.c.l.b16 %v3848
      %v4422 = vunpack.c.l.b16 %v3849
      %v4423 = vunpack.c.h.b16 %v3849
      %v4424 = vunpack.c.l.b16 %v3850
      %v4425 = vunpack.c.h.b16 %v3850
      %v4426 = vunpack.c.l.b16 %v3851
      %v4427 = vunpack.c.h.b16 %v3851
      %v4428 = vunpack.c.l.b16 %v3852
      %v4429 = vunpack.c.l.b16 %v3853
      %v4430 = vunpack.c.h.b16 %v3853
      %v4431 = vunpack.c.l.b16 %v3854
      %v4432 = vunpack.c.h.b16 %v3854
      %v4433 = vunpack.c.l.b16 %v3855
      %v4434 = vunpack.c.h.b16 %v3855
      %v4435 = vunpack.c.l.b16 %v3856
      %v4436 = vunpack.c.l.b16 %v3857
      %v4437 = vunpack.c.h.b16 %v3857
      %v4438 = vunpack.c.l.b16 %v3858
      %v4439 = vunpack.c.h.b16 %v3858
      %v4440 = vunpack.c.l.b16 %v3859
      %v4441 = vunpack.c.h.b16 %v3859
      %v4442 = vunpack.c.l.b16 %v3860
      %v4443 = vunpack.c.l.b16 %v3861
      %v4444 = vunpack.c.h.b16 %v3861
      %v4445 = vunpack.c.l.b16 %v3862
      %v4446 = vunpack.c.h.b16 %v3862
      %v4447 = vunpack.c.l.b16 %v3863
      %v4448 = vunpack.c.h.b16 %v3863
      %v4449 = vunpack.c.l.b16 %v3864
      %v4450 = vunpack.c.l.b16 %v3865
      %v4451 = vunpack.c.h.b16 %v3865
      %v4452 = vunpack.c.l.b16 %v3866
      %v4453 = vunpack.c.h.b16 %v3866
      %v4454 = vunpack.c.l.b16 %v3867
      %v4455 = vunpack.c.h.b16 %v3867
      %v4456 = vunpack.c.l.b16 %v3868
      %v4457 = vunpack.c.l.b16 %v3869
      %v4458 = vunpack.c.h.b16 %v3869
      %v4459 = vunpack.c.l.b16 %v3870
      %v4460 = vunpack.c.h.b16 %v3870
      %v4461 = vunpack.c.l.b16 %v3871
      %v4462 = vunpack.c.h.b16 %v3871
      %v4463 = vunpack.c.l.b16 %v3872
      %v4464 = vunpack.c.l.b16 %v3873
      %v4465 = vunpack.c.h.b16 %v3873
      %v4466 = vunpack.c.l.b16 %v3874
      %v4467 = vunpack.c.h.b16 %v3874
      %v4468 = vunpack.c.l.b16 %v3875
      %v4469 = vunpack.c.h.b16 %v3875
      %v4470 = vunpack.c.l.b16 %v3876
      %v4471 = vunpack.c.l.b16 %v3877
      %v4472 = vunpack.c.h.b16 %v3877
      %v4473 = vunpack.c.l.b16 %v3878
      %v4474 = vunpack.c.h.b16 %v3878
      %v4475 = vunpack.c.l.b16 %v3879
      %v4476 = vunpack.c.h.b16 %v3879
      %v4477 = vunpack.c.l.b16 %v3880
      %v4478 = vunpack.c.l.b16 %v3881
      %v4479 = vunpack.c.h.b16 %v3881
      %v4480 = vunpack.c.l.b16 %v3882
      %v4481 = vunpack.c.h.b16 %v3882
      %v4482 = vunpack.c.l.b16 %v3883
      %v4483 = vunpack.c.h.b16 %v3883
      %v4484 = vunpack.c.l.b16 %v3884
      %v4485 = vunpack.c.l.b16 %v3885
      %v4486 = vunpack.c.h.b16 %v3885
      %v4487 = vunpack.c.l.b16 %v3886
      %v4488 = vunpack.c.h.b16 %v3886
      %v4489 = vunpack.c.l.b16 %v3887
      %v4490 = vunpack.c.h.b16 %v3887
      %v4491 = vunpack.c.l.b16 %v3888
      %v4492 = vunpack.c.l.b16 %v3889
      %v4493 = vunpack.c.h.b16 %v3889
      %v4494 = vunpack.c.l.b16 %v3890
      %v4495 = vunpack.c.h.b16 %v3890
      %v4496 = vunpack.c.l.b16 %v3891
      %v4497 = vunpack.c.h.b16 %v3891
      %v4498 = vunpack.c.l.b16 %v3892
      %v4499 = vunpack.c.l.b16 %v3893
      %v4500 = vunpack.c.h.b16 %v3893
      %v4501 = vunpack.c.l.b16 %v3894
      %v4502 = vunpack.c.h.b16 %v3894
      %v4503 = vunpack.c.l.b16 %v3895
      %v4504 = vunpack.c.h.b16 %v3895
      %v4505 = vunpack.c.l.b16 %v3896
      %v4506 = vunpack.c.l.b16 %v3897
      %v4507 = vunpack.c.h.b16 %v3897
      %v4508 = vunpack.c.l.b16 %v3898
      %v4509 = vunpack.c.h.b16 %v3898
      %v4510 = vunpack.c.l.b16 %v3899
      %v4511 = vunpack.c.h.b16 %v3899
      %v4512 = vunpack.c.l.b16 %v3900
      %v4513 = vunpack.c.l.b16 %v3901
      %v4514 = vunpack.c.h.b16 %v3901
      %v4515 = vunpack.c.l.b16 %v3902
      %v4516 = vunpack.c.h.b16 %v3902
      %v4517 = vunpack.c.l.b16 %v3903
      %v4518 = vunpack.c.h.b16 %v3903
      %v4519 = vunpack.c.l.b16 %v3904
      %v4520 = vunpack.c.l.b16 %v3905
      %v4521 = vunpack.c.h.b16 %v3905
      %v4522 = vunpack.c.l.b16 %v3906
      %v4523 = vunpack.c.h.b16 %v3906
      %v4524 = vunpack.c.l.b16 %v3907
      %v4525 = vunpack.c.h.b16 %v3907
      %v4526 = vunpack.c.l.b16 %v3908
      %v4527 = vunpack.c.l.b16 %v3909
      %v4528 = vunpack.c.h.b16 %v3909
      %v4529 = vunpack.c.l.b16 %v3910
      %v4530 = vunpack.c.h.b16 %v3910
      %v4531 = vunpack.c.l.b16 %v3911
      %v4532 = vunpack.c.h.b16 %v3911
      %v4533 = vunpack.c.l.b16 %v3912
      %v4534 = vunpack.c.l.b16 %v3913
      %v4535 = vunpack.c.h.b16 %v3913
      %v4536 = vunpack.c.l.b16 %v3914
      %v4537 = vunpack.c.h.b16 %v3914
      %v4538 = vunpack.c.l.b16 %v3915
      %v4539 = vunpack.c.h.b16 %v3915
      %v4540 = vunpack.c.l.b16 %v3916
      %v4541 = vunpack.c.l.b16 %v3917
      %v4542 = vunpack.c.h.b16 %v3917
      %v4543 = vunpack.c.l.b16 %v3918
      %v4544 = vunpack.c.h.b16 %v3918
      %v4545 = vunpack.c.l.b16 %v3919
      %v4546 = vunpack.c.h.b16 %v3919
      %v4547 = vunpack.c.l.b16 %v3920
      %v4548 = vunpack.c.l.b16 %v3921
      %v4549 = vunpack.c.h.b16 %v3921
      %v4550 = vunpack.c.l.b16 %v3922
      %v4551 = vunpack.c.h.b16 %v3922
      %v4552 = vunpack.c.l.b16 %v3923
      %v4553 = vunpack.c.h.b16 %v3923
      %v4554 = vunpack.c.l.b16 %v3924
      %v4555 = vunpack.c.l.b16 %v3925
      %v4556 = vunpack.c.h.b16 %v3925
      %v4557 = vunpack.c.l.b16 %v3926
      %v4558 = vunpack.c.h.b16 %v3926
      %v4559 = vunpack.c.l.b16 %v3927
      %v4560 = vunpack.c.h.b16 %v3927
      %v4561 = vunpack.c.l.b16 %v3928
      %v4562 = vunpack.c.l.b16 %v3929
      %v4563 = vunpack.c.h.b16 %v3929
      %v4564 = vunpack.c.l.b16 %v3930
      %v4565 = vunpack.c.h.b16 %v3930
      %v4566 = vunpack.c.l.b16 %v3931
      %v4567 = vunpack.c.h.b16 %v3931
      %v4568 = vunpack.c.l.b16 %v3932
      %v4569 = vunpack.c.l.b16 %v3933
      %v4570 = vunpack.c.h.b16 %v3933
      %v4571 = vunpack.c.l.b16 %v3934
      %v4572 = vunpack.c.h.b16 %v3934
      %v4573 = vunpack.c.l.b16 %v3935
      %v4574 = vunpack.c.h.b16 %v3935
      %v4575 = vunpack.c.l.b16 %v3936
      %v4576 = vunpack.c.l.b16 %v3937
      %v4577 = vunpack.c.h.b16 %v3937
      %v4578 = vunpack.c.l.b16 %v3938
      %v4579 = vunpack.c.h.b16 %v3938
      %v4580 = vunpack.c.l.b16 %v3939
      %v4581 = vunpack.c.h.b16 %v3939
      %v4582 = vunpack.c.l.b16 %v3940
      %v4583 = vunpack.c.l.b16 %v3941
      %v4584 = vunpack.c.h.b16 %v3941
      %v4585 = vunpack.c.l.b16 %v3942
      %v4586 = vunpack.c.h.b16 %v3942
      %v4587 = vunpack.c.l.b16 %v3943
      %v4588 = vunpack.c.h.b16 %v3943
      %v4589 = vunpack.c.l.b16 %v3944
      %v4590 = vunpack.c.l.b16 %v3945
      %v4591 = vunpack.c.h.b16 %v3945
      %v4592 = vunpack.c.l.b16 %v3946
      %v4593 = vunpack.c.h.b16 %v3946
      %v4594 = vunpack.c.l.b16 %v3947
      %v4595 = vunpack.c.h.b16 %v3947
      %v4596 = vunpack.c.l.b16 %v3948
      %v4597 = vunpack.c.l.b16 %v3949
      %v4598 = vunpack.c.h.b16 %v3949
      %v4599 = vunpack.c.l.b16 %v3950
      %v4600 = vunpack.c.h.b16 %v3950
      %v4601 = vunpack.c.l.b16 %v3951
      %v4602 = vunpack.c.h.b16 %v3951
      %v4603 = vunpack.c.l.b16 %v3952
      %v4604 = vunpack.c.l.b16 %v3953
      %v4605 = vunpack.c.h.b16 %v3953
      %v4606 = vunpack.c.l.b16 %v3954
      %v4607 = vunpack.c.h.b16 %v3954
      %v4608 = vunpack.c.l.b16 %v3955
      %v4609 = vunpack.c.h.b16 %v3955
      %v4610 = vunpack.c.l.b16 %v3956
      %v4611 = vunpack.c.l.b16 %v3957
      %v4612 = vunpack.c.h.b16 %v3957
      %v4613 = vunpack.c.l.b16 %v3958
      %v4614 = vunpack.c.h.b16 %v3958
      %v4615 = vunpack.c.l.b16 %v3959
      %v4616 = vunpack.c.h.b16 %v3959
      %v4617 = vunpack.c.l.b16 %v3960
      %v4618 = vunpack.c.l.b16 %v3961
      %v4619 = vunpack.c.h.b16 %v3961
      %v4620 = vunpack.c.l.b16 %v3962
      %v4621 = vunpack.c.h.b16 %v3962
      %v4622 = vunpack.c.l.b16 %v3963
      %v4623 = vunpack.c.h.b16 %v3963
      %v4624 = vunpack.c.l.b16 %v3964
      %v4625 = vunpack.c.l.b16 %v3965
      %v4626 = vunpack.c.h.b16 %v3965
      %v4627 = vunpack.c.l.b16 %v3966
      %v4628 = vunpack.c.h.b16 %v3966
      %v4629 = vunpack.c.l.b16 %v3967
      %v4630 = vunpack.c.h.b16 %v3967
      %v4631 = vunpack.c.l.b16 %v3968
      %v4632 = vunpack.c.l.b16 %v3969
      %v4633 = vunpack.c.h.b16 %v3969
      %v4634 = vunpack.c.l.b16 %v3970
      %v4635 = vunpack.c.h.b16 %v3970
      %v4636 = vunpack.c.l.b16 %v3971
      %v4637 = vunpack.c.h.b16 %v3971
      %v4638 = vunpack.c.l.b16 %v3972
      %v4639 = vunpack.c.l.b16 %v3973
      %v4640 = vunpack.c.h.b16 %v3973
      %v4641 = vunpack.c.l.b16 %v3974
      %v4642 = vunpack.c.h.b16 %v3974
      %v4643 = vunpack.c.l.b16 %v3975
      %v4644 = vunpack.c.h.b16 %v3975
      %v4645 = vunpack.c.l.b16 %v3976
      %v4646 = vunpack.c.l.b16 %v3977
      %v4647 = vunpack.c.h.b16 %v3977
      %v4648 = vunpack.c.l.b16 %v3978
      %v4649 = vunpack.c.h.b16 %v3978
      %v4650 = vunpack.c.l.b16 %v3979
      %v4651 = vunpack.c.h.b16 %v3979
      %v4652 = vunpack.c.l.b16 %v3980
      %v4653 = vunpack.c.l.b16 %v3981
      %v4654 = vunpack.c.h.b16 %v3981
      %v4655 = vunpack.c.l.b16 %v3982
      %v4656 = vunpack.c.h.b16 %v3982
      %v4657 = vunpack.c.l.b16 %v3983
      %v4658 = vunpack.c.h.b16 %v3983
      %v4659 = vunpack.c.l.b16 %v3984
      %v4660 = vunpack.c.l.b16 %v3985
      %v4661 = vunpack.c.h.b16 %v3985
      %v4662 = vunpack.c.l.b16 %v3986
      %v4663 = vunpack.c.h.b16 %v3986
      %v4664 = vunpack.c.l.b16 %v3987
      %v4665 = vunpack.c.h.b16 %v3987
      %v4666 = vunpack.c.l.b16 %v3988
      %v4667 = vunpack.c.l.b16 %v3989
      %v4668 = vunpack.c.h.b16 %v3989
      %v4669 = vunpack.c.l.b16 %v3990
      %v4670 = vunpack.c.h.b16 %v3990
      %v4671 = vunpack.c.l.b16 %v3991
      %v4672 = vunpack.c.h.b16 %v3991
      %v4673 = vunpack.c.l.b16 %v3992
      %v4674 = vunpack.c.l.b16 %v3993
      %v4675 = vunpack.c.h.b16 %v3993
      %v4676 = vunpack.c.l.b16 %v3994
      %v4677 = vunpack.c.h.b16 %v3994
      %v4678 = vunpack.c.l.b16 %v3995
      %v4679 = vunpack.c.h.b16 %v3995
      %v4680 = vunpack.c.l.b16 %v3996
      %v4681 = vunpack.c.l.b16 %v3997
      %v4682 = vunpack.c.h.b16 %v3997
      %v4683 = vunpack.c.l.b16 %v3998
      %v4684 = vunpack.c.h.b16 %v3998
      %v4685 = vunpack.c.l.b16 %v3999
      %v4686 = vunpack.c.h.b16 %v3999
      %v4687 = vunpack.c.l.b16 %v4000
      %v4688 = vunpack.c.l.b16 %v4001
      %v4689 = vunpack.c.h.b16 %v4001
      %v4690 = vunpack.c.l.b16 %v4002
      %v4691 = vunpack.c.h.b16 %v4002
      %v4692 = vunpack.c.l.b16 %v4003
      %v4693 = vunpack.c.h.b16 %v4003
      %v4694 = vunpack.c.l.b16 %v4004
      %v4695 = vunpack.c.l.b16 %v4005
      %v4696 = vunpack.c.h.b16 %v4005
      %v4697 = vunpack.c.l.b16 %v4006
      %v4698 = vunpack.c.h.b16 %v4006
      %v4699 = vunpack.c.l.b16 %v4007
      %v4700 = vunpack.c.h.b16 %v4007
      %v4701 = vunpack.c.l.b16 %v4008
      %v4702 = vunpack.c.l.b16 %v4009
      %v4703 = vunpack.c.h.b16 %v4009
      %v4704 = vunpack.c.l.b16 %v4010
      %v4705 = vunpack.c.h.b16 %v4010
      %v4706 = vunpack.c.l.b16 %v4011
      %v4707 = vunpack.c.h.b16 %v4011
      %v4708 = vunpack.c.l.b16 %v4012
      %v4709 = vunpack.c.l.b16 %v4013
      %v4710 = vunpack.c.h.b16 %v4013
      %v4711 = vunpack.c.l.b16 %v4014
      %v4712 = vunpack.c.h.b16 %v4014
      %v4713 = vunpack.c.l.b16 %v4015
      %v4714 = vunpack.c.h.b16 %v4015
      %v4715 = vunpack.c.l.b16 %v4016
      %v4716 = vunpack.c.l.b16 %v4017
      %v4717 = vunpack.c.h.b16 %v4017
      %v4718 = vunpack.c.l.b16 %v4018
      %v4719 = vunpack.c.h.b16 %v4018
      %v4720 = vunpack.c.l.b16 %v4019
      %v4721 = vunpack.c.h.b16 %v4019
      %v4722 = vunpack.c.l.b16 %v4020
      %v4723 = vunpack.c.l.b16 %v4021
      %v4724 = vunpack.c.h.b16 %v4021
      %v4725 = vunpack.c.l.b16 %v4022
      %v4726 = vunpack.c.h.b16 %v4022
      %v4727 = vunpack.c.l.b16 %v4023
      %v4728 = vunpack.c.h.b16 %v4023
      %v4729 = vunpack.c.l.b16 %v4024
      %v4730 = vunpack.c.l.b16 %v4025
      %v4731 = vunpack.c.h.b16 %v4025
      %v4732 = vunpack.c.l.b16 %v4026
      %v4733 = vunpack.c.h.b16 %v4026
      %v4734 = vunpack.c.l.b16 %v4027
      %v4735 = vunpack.c.h.b16 %v4027
      %v4736 = vunpack.c.l.b16 %v4028
      %v4737 = vunpack.c.l.b16 %v4029
      %v4738 = vunpack.c.h.b16 %v4029
      %v4739 = vunpack.c.l.b16 %v4030
      %v4740 = vunpack.c.h.b16 %v4030
      %v4741 = vunpack.c.l.b16 %v4031
      %v4742 = vunpack.c.h.b16 %v4031
      %v4743 = vunpack.c.l.b16 %v4032
      %v4744 = vunpack.c.l.b16 %v4033
      %v4745 = vunpack.c.h.b16 %v4033
      %v4746 = vunpack.c.l.b16 %v4034
      %v4747 = vunpack.c.h.b16 %v4034
      %v4748 = vunpack.c.l.b16 %v4035
      %v4749 = vunpack.c.h.b16 %v4035
      %v4750 = vunpack.c.l.b16 %v4036
      %v4751 = vunpack.c.l.b16 %v4037
      %v4752 = vunpack.c.h.b16 %v4037
      %v4753 = vunpack.c.l.b16 %v4038
      %v4754 = vunpack.c.h.b16 %v4038
      %v4755 = vunpack.c.l.b16 %v4039
      %v4756 = vunpack.c.h.b16 %v4039
      %v4757 = vunpack.c.l.b16 %v4040
      %v4758 = vunpack.c.l.b16 %v4041
      %v4759 = vunpack.c.h.b16 %v4041
      %v4760 = vunpack.c.l.b16 %v4042
      %v4761 = vunpack.c.h.b16 %v4042
      %v4762 = vunpack.c.l.b16 %v4043
      %v4763 = vunpack.c.h.b16 %v4043
      %v4764 = vunpack.c.l.b16 %v4044
      %v4765 = vunpack.c.l.b16 %v4045
      %v4766 = vunpack.c.h.b16 %v4045
      %v4767 = vunpack.c.l.b16 %v4046
      %v4768 = vunpack.c.h.b16 %v4046
      %v4769 = vunpack.c.l.b16 %v4047
      %v4770 = vunpack.c.h.b16 %v4047
      %v4771 = vunpack.c.l.b16 %v4048
      %v4772 = vunpack.c.l.b16 %v4049
      %v4773 = vunpack.c.h.b16 %v4049
      %v4774 = vunpack.c.l.b16 %v4050
      %v4775 = vunpack.c.h.b16 %v4050
      %v4776 = vunpack.c.l.b16 %v4051
      %v4777 = vunpack.c.h.b16 %v4051
      %v4778 = vunpack.c.l.b16 %v4052
      %v4779 = vunpack.c.l.b16 %v4053
      %v4780 = vunpack.c.h.b16 %v4053
      %v4781 = vunpack.c.l.b16 %v4054
      %v4782 = vunpack.c.h.b16 %v4054
      %v4783 = vunpack.c.l.b16 %v4055
      %v4784 = vunpack.c.h.b16 %v4055
      %v4785 = vunpack.c.l.b16 %v4056
      %v4786 = vunpack.c.l.b16 %v4057
      %v4787 = vunpack.c.h.b16 %v4057
      %v4788 = vunpack.c.l.b16 %v4058
      %v4789 = vunpack.c.h.b16 %v4058
      %v4790 = vunpack.c.l.b16 %v4059
      %v4791 = vunpack.c.h.b16 %v4059
      %v4792 = vunpack.c.l.b16 %v4060
      %v4793 = vunpack.c.l.b16 %v4061
      %v4794 = vunpack.c.h.b16 %v4061
      %v4795 = vunpack.c.l.b16 %v4062
      %v4796 = vunpack.c.h.b16 %v4062
      %v4797 = vunpack.c.l.b16 %v4063
      %v4798 = vunpack.c.h.b16 %v4063
      %v4799 = vunpack.c.l.b16 %v4064
      %v4800 = vunpack.c.l.b16 %v4065
      %v4801 = vunpack.c.h.b16 %v4065
      %v4802 = vunpack.c.l.b16 %v4066
      %v4803 = vunpack.c.h.b16 %v4066
      %v4804 = vunpack.c.l.b16 %v4067
      %v4805 = vunpack.c.h.b16 %v4067
      %v4806 = vunpack.c.l.b16 %v4068
      %v4807 = vunpack.c.l.b16 %v4069
      %v4808 = vunpack.c.h.b16 %v4069
      %v4809 = vunpack.c.l.b16 %v4070
      %v4810 = vunpack.c.h.b16 %v4070
      %v4811 = vunpack.c.l.b16 %v4071
      %v4812 = vunpack.c.h.b16 %v4071
      %v4813 = vunpack.c.l.b16 %v4072
      %v4814 = vpack.c.b16 %v4373, %v4366
      %v4815 = vpack.c.b16 %v4374, %v4367
      %v4816 = vpack.c.b16 %v4375, %v4368
      %v4817 = vpack.c.b16 %v4376, %v4369
      %v4818 = vpack.c.b16 %v4377, %v4370
      %v4819 = vpack.c.b16 %v4378, %v4371
      %v4820 = vpack.c.b16 %v4379, %v4372
      %v4821 = vpack.c.b16 %v4387, %v4380
      %v4822 = vpack.c.b16 %v4388, %v4381
      %v4823 = vpack.c.b16 %v4389, %v4382
      %v4824 = vpack.c.b16 %v4390, %v4383
      %v4825 = vpack.c.b16 %v4391, %v4384
      %v4826 = vpack.c.b16 %v4392, %v4385
      %v4827 = vpack.c.b16 %v4393, %v4386
      %v4828 = vpack.c.b16 %v4401, %v4394
      %v4829 = vpack.c.b16 %v4402, %v4395
      %v4830 = vpack.c.b16 %v4403, %v4396
      %v4831 = vpack.c.b16 %v4404, %v4397
      %v4832 = vpack.c.b16 %v4405, %v4398
      %v4833 = vpack.c.b16 %v4406, %v4399
      %v4834 = vpack.c.b16 %v4407, %v4400
      %v4835 = vpack.c.b16 %v4415, %v4408
      %v4836 = vpack.c.b16 %v4416, %v4409
      %v4837 = vpack.c.b16 %v4417, %v4410
      %v4838 = vpack.c.b16 %v4418, %v4411
      %v4839 = vpack.c.b16 %v4419, %v4412
      %v4840 = vpack.c.b16 %v4420, %v4413
      %v4841 = vpack.c.b16 %v4421, %v4414
      %v4842 = vpack.c.b16 %v4429, %v4422
      %v4843 = vpack.c.b16 %v4430, %v4423
      %v4844 = vpack.c.b16 %v4431, %v4424
      %v4845 = vpack.c.b16 %v4432, %v4425
      %v4846 = vpack.c.b16 %v4433, %v4426
      %v4847 = vpack.c.b16 %v4434, %v4427
      %v4848 = vpack.c.b16 %v4435, %v4428
      %v4849 = vpack.c.b16 %v4443, %v4436
      %v4850 = vpack.c.b16 %v4444, %v4437
      %v4851 = vpack.c.b16 %v4445, %v4438
      %v4852 = vpack.c.b16 %v4446, %v4439
      %v4853 = vpack.c.b16 %v4447, %v4440
      %v4854 = vpack.c.b16 %v4448, %v4441
      %v4855 = vpack.c.b16 %v4449, %v4442
      %v4856 = vpack.c.b16 %v4457, %v4450
      %v4857 = vpack.c.b16 %v4458, %v4451
      %v4858 = vpack.c.b16 %v4459, %v4452
      %v4859 = vpack.c.b16 %v4460, %v4453
      %v4860 = vpack.c.b16 %v4461, %v4454
      %v4861 = vpack.c.b16 %v4462, %v4455
      %v4862 = vpack.c.b16 %v4463, %v4456
      %v4863 = vpack.c.b16 %v4471, %v4464
      %v4864 = vpack.c.b16 %v4472, %v4465
      %v4865 = vpack.c.b16 %v4473, %v4466
      %v4866 = vpack.c.b16 %v4474, %v4467
      %v4867 = vpack.c.b16 %v4475, %v4468
      %v4868 = vpack.c.b16 %v4476, %v4469
      %v4869 = vpack.c.b16 %v4477, %v4470
      %v4870 = vpack.c.b16 %v4485, %v4478
      %v4871 = vpack.c.b16 %v4486, %v4479
      %v4872 = vpack.c.b16 %v4487, %v4480
      %v4873 = vpack.c.b16 %v4488, %v4481
      %v4874 = vpack.c.b16 %v4489, %v4482
      %v4875 = vpack.c.b16 %v4490, %v4483
      %v4876 = vpack.c.b16 %v4491, %v4484
      %v4877 = vpack.c.b16 %v4499, %v4492
      %v4878 = vpack.c.b16 %v4500, %v4493
      %v4879 = vpack.c.b16 %v4501, %v4494
      %v4880 = vpack.c.b16 %v4502, %v4495
      %v4881 = vpack.c.b16 %v4503, %v4496
      %v4882 = vpack.c.b16 %v4504, %v4497
      %v4883 = vpack.c.b16 %v4505, %v4498
      %v4884 = vpack.c.b16 %v4513, %v4506
      %v4885 = vpack.c.b16 %v4514, %v4507
      %v4886 = vpack.c.b16 %v4515, %v4508
      %v4887 = vpack.c.b16 %v4516, %v4509
      %v4888 = vpack.c.b16 %v4517, %v4510
      %v4889 = vpack.c.b16 %v4518, %v4511
      %v4890 = vpack.c.b16 %v4519, %v4512
      %v4891 = vpack.c.b16 %v4527, %v4520
      %v4892 = vpack.c.b16 %v4528, %v4521
      %v4893 = vpack.c.b16 %v4529, %v4522
      %v4894 = vpack.c.b16 %v4530, %v4523
      %v4895 = vpack.c.b16 %v4531, %v4524
      %v4896 = vpack.c.b16 %v4532, %v4525
      %v4897 = vpack.c.b16 %v4533, %v4526
      %v4898 = vpack.c.b16 %v4541, %v4534
      %v4899 = vpack.c.b16 %v4542, %v4535
      %v4900 = vpack.c.b16 %v4543, %v4536
      %v4901 = vpack.c.b16 %v4544, %v4537
      %v4902 = vpack.c.b16 %v4545, %v4538
      %v4903 = vpack.c.b16 %v4546, %v4539
      %v4904 = vpack.c.b16 %v4547, %v4540
      %v4905 = vpack.c.b16 %v4555, %v4548
      %v4906 = vpack.c.b16 %v4556, %v4549
      %v4907 = vpack.c.b16 %v4557, %v4550
      %v4908 = vpack.c.b16 %v4558, %v4551
      %v4909 = vpack.c.b16 %v4559, %v4552
      %v4910 = vpack.c.b16 %v4560, %v4553
      %v4911 = vpack.c.b16 %v4561, %v4554
      %v4912 = vpack.c.b16 %v4569, %v4562
      %v4913 = vpack.c.b16 %v4570, %v4563
      %v4914 = vpack.c.b16 %v4571, %v4564
      %v4915 = vpack.c.b16 %v4572, %v4565
      %v4916 = vpack.c.b16 %v4573, %v4566
      %v4917 = vpack.c.b16 %v4574, %v4567
      %v4918 = vpack.c.b16 %v4575, %v4568
      %v4919 = vpack.c.b16 %v4583, %v4576
      %v4920 = vpack.c.b16 %v4584, %v4577
      %v4921 = vpack.c.b16 %v4585, %v4578
      %v4922 = vpack.c.b16 %v4586, %v4579
      %v4923 = vpack.c.b16 %v4587, %v4580
      %v4924 = vpack.c.b16 %v4588, %v4581
      %v4925 = vpack.c.b16 %v4589, %v4582
      %v4926 = vpack.c.b16 %v4597, %v4590
      %v4927 = vpack.c.b16 %v4598, %v4591
      %v4928 = vpack.c.b16 %v4599, %v4592
      %v4929 = vpack.c.b16 %v4600, %v4593
      %v4930 = vpack.c.b16 %v4601, %v4594
      %v4931 = vpack.c.b16 %v4602, %v4595
      %v4932 = vpack.c.b16 %v4603, %v4596
      %v4933 = vpack.c.b16 %v4611, %v4604
      %v4934 = vpack.c.b16 %v4612, %v4605
      %v4935 = vpack.c.b16 %v4613, %v4606
      %v4936 = vpack.c.b16 %v4614, %v4607
      %v4937 = vpack.c.b16 %v4615, %v4608
      %v4938 = vpack.c.b16 %v4616, %v4609
      %v4939 = vpack.c.b16 %v4617, %v4610
      %v4940 = vpack.c.b16 %v4625, %v4618
      %v4941 = vpack.c.b16 %v4626, %v4619
      %v4942 = vpack.c.b16 %v4627, %v4620
      %v4943 = vpack.c.b16 %v4628, %v4621
      %v4944 = vpack.c.b16 %v4629, %v4622
      %v4945 = vpack.c.b16 %v4630, %v4623
      %v4946 = vpack.c.b16 %v4631, %v4624
      %v4947 = vpack.c.b16 %v4639, %v4632
      %v4948 = vpack.c.b16 %v4640, %v4633
      %v4949 = vpack.c.b16 %v4641, %v4634
      %v4950 = vpack.c.b16 %v4642, %v4635
      %v4951 = vpack.c.b16 %v4643, %v4636
      %v4952 = vpack.c.b16 %v4644, %v4637
      %v4953 = vpack.c.b16 %v4645, %v4638
      %v4954 = vpack.c.b16 %v4653, %v4646
      %v4955 = vpack.c.b16 %v4654, %v4647
      %v4956 = vpack.c.b16 %v4655, %v4648
      %v4957 = vpack.c.b16 %v4656, %v4649
      %v4958 = vpack.c.b16 %v4657, %v4650
      %v4959 = vpack.c.b16 %v4658, %v4651
      %v4960 = vpack.c.b16 %v4659, %v4652
      %v4961 = vpack.c.b16 %v4667, %v4660
      %v4962 = vpack.c.b16 %v4668, %v4661
      %v4963 = vpack.c.b16 %v4669, %v4662
      %v4964 = vpack.c.b16 %v4670, %v4663
      %v4965 = vpack.c.b16 %v4671, %v4664
      %v4966 = vpack.c.b16 %v4672, %v4665
      %v4967 = vpack.c.b16 %v4673, %v4666
      %v4968 = vpack.c.b16 %v4681, %v4674
      %v4969 = vpack.c.b16 %v4682, %v4675
      %v4970 = vpack.c.b16 %v4683, %v4676
      %v4971 = vpack.c.b16 %v4684, %v4677
      %v4972 = vpack.c.b16 %v4685, %v4678
      %v4973 = vpack.c.b16 %v4686, %v4679
      %v4974 = vpack.c.b16 %v4687, %v4680
      %v4975 = vpack.c.b16 %v4695, %v4688
      %v4976 = vpack.c.b16 %v4696, %v4689
      %v4977 = vpack.c.b16 %v4697, %v4690
      %v4978 = vpack.c.b16 %v4698, %v4691
      %v4979 = vpack.c.b16 %v4699, %v4692
      %v4980 = vpack.c.b16 %v4700, %v4693
      %v4981 = vpack.c.b16 %v4701, %v4694
      %v4982 = vpack.c.b16 %v4709, %v4702
      %v4983 = vpack.c.b16 %v4710, %v4703
      %v4984 = vpack.c.b16 %v4711, %v4704
      %v4985 = vpack.c.b16 %v4712, %v4705
      %v4986 = vpack.c.b16 %v4713, %v4706
      %v4987 = vpack.c.b16 %v4714, %v4707
      %v4988 = vpack.c.b16 %v4715, %v4708
      %v4989 = vpack.c.b16 %v4723, %v4716
      %v4990 = vpack.c.b16 %v4724, %v4717
      %v4991 = vpack.c.b16 %v4725, %v4718
      %v4992 = vpack.c.b16 %v4726, %v4719
      %v4993 = vpack.c.b16 %v4727, %v4720
      %v4994 = vpack.c.b16 %v4728, %v4721
      %v4995 = vpack.c.b16 %v4729, %v4722
      %v4996 = vpack.c.b16 %v4737, %v4730
      %v4997 = vpack.c.b16 %v4738, %v4731
      %v4998 = vpack.c.b16 %v4739, %v4732
      %v4999 = vpack.c.b16 %v4740, %v4733
      %v5000 = vpack.c.b16 %v4741, %v4734
      %v5001 = vpack.c.b16 %v4742, %v4735
      %v5002 = vpack.c.b16 %v4743, %v4736
      %v5003 = vpack.c.b16 %v4751, %v4744
      %v5004 = vpack.c.b16 %v4752, %v4745
      %v5005 = vpack.c.b16 %v4753, %v4746
      %v5006 = vpack.c.b16 %v4754, %v4747
      %v5007 = vpack.c.b16 %v4755, %v4748
      %v5008 = vpack.c.b16 %v4756, %v4749
      %v5009 = vpack.c.b16 %v4757, %v4750
      %v5010 = vpack.c.b16 %v4765, %v4758
      %v5011 = vpack.c.b16 %v4766, %v4759
      %v5012 = vpack.c.b16 %v4767, %v4760
      %v5013 = vpack.c.b16 %v4768, %v4761
      %v5014 = vpack.c.b16 %v4769, %v4762
      %v5015 = vpack.c.b16 %v4770, %v4763
      %v5016 = vpack.c.b16 %v4771, %v4764
      %v5017 = vpack.c.b16 %v4779, %v4772
      %v5018 = vpack.c.b16 %v4780, %v4773
      %v5019 = vpack.c.b16 %v4781, %v4774
      %v5020 = vpack.c.b16 %v4782, %v4775
      %v5021 = vpack.c.b16 %v4783, %v4776
      %v5022 = vpack.c.b16 %v4784, %v4777
      %v5023 = vpack.c.b16 %v4785, %v4778
      %v5024 = vpack.c.b16 %v4793, %v4786
      %v5025 = vpack.c.b16 %v4794, %v4787
      %v5026 = vpack.c.b16 %v4795, %v4788
      %v5027 = vpack.c.b16 %v4796, %v4789
      %v5028 = vpack.c.b16 %v4797, %v4790
      %v5029 = vpack.c.b16 %v4798, %v4791
      %v5030 = vpack.c.b16 %v4799, %v4792
      %v5031 = vpack.c.b16 %v4807, %v4800
      %v5032 = vpack.c.b16 %v4808, %v4801
      %v5033 = vpack.c.b16 %v4809, %v4802
      %v5034 = vpack.c.b16 %v4810, %v4803
      %v5035 = vpack.c.b16 %v4811, %v4804
      %v5036 = vpack.c.b16 %v4812, %v4805
      %v5037 = vpack.c.b16 %v4813, %v4806
      %5262 = vmatprep.subr.bf16.mxu0 %v4815
      %5263 = vmatpush1.bf16.msra.mxu0 %v4814
      %5264 = vmatprep.subr.bf16.mxu0 %v4822
      %5265 = vmatpush1.bf16.msra.mxu0 %v4821
      %5266 = vmatprep.subr.bf16.mxu0 %v4829
      %5267 = vmatpush1.bf16.msra.mxu0 %v4828
      %5268 = vmatprep.subr.bf16.mxu0 %v4836
      %5269 = vmatpush1.bf16.msra.mxu0 %v4835
      %5270 = vmatprep.subr.bf16.mxu0 %v4843
      %5271 = vmatpush1.bf16.msra.mxu0 %v4842
      %5272 = vmatprep.subr.bf16.mxu0 %v4850
      %5273 = vmatpush1.bf16.msra.mxu0 %v4849
      %5274 = vmatprep.subr.bf16.mxu0 %v4857
      %5275 = vmatpush1.bf16.msra.mxu0 %v4856
      %5276 = vmatprep.subr.bf16.mxu0 %v4864
      %5277 = vmatpush1.bf16.msra.mxu0 %v4863
      %5278 = vmatprep.subr.bf16.mxu0 %v4871
      %5279 = vmatpush1.bf16.msra.mxu0 %v4870
      %5280 = vmatprep.subr.bf16.mxu0 %v4878
      %5281 = vmatpush1.bf16.msra.mxu0 %v4877
      %5282 = vmatprep.subr.bf16.mxu0 %v4885
      %5283 = vmatpush1.bf16.msra.mxu0 %v4884
      %5284 = vmatprep.subr.bf16.mxu0 %v4892
      %5285 = vmatpush1.bf16.msra.mxu0 %v4891
      %5286 = vmatprep.subr.bf16.mxu0 %v4899
      %5287 = vmatpush1.bf16.msra.mxu0 %v4898
      %5288 = vmatprep.subr.bf16.mxu0 %v4906
      %5289 = vmatpush1.bf16.msra.mxu0 %v4905
      %5290 = vmatprep.subr.bf16.mxu0 %v4913
      %5291 = vmatpush1.bf16.msra.mxu0 %v4912
      %5292 = vmatprep.subr.bf16.mxu0 %v4920
      %5293 = vmatpush1.bf16.msra.mxu0 %v4919
      %5294 = vmatprep.mubr.bf16.mxu0 %v3786
      %5295 = vmatmul.mubr.bf16.gmra.mrb[0].mxu0 %v3785
      %v5296 = vpop.f32.mrb[0].mxu0
      %v5297 = vadd.f32 %v4078, %v5296
      %v5298 = vpop.f32.mrb[0].mxu0
      %v5299 = vadd.f32 %v4082, %v5298
      %v5300 = vpop.f32.mrb[0].mxu0
      %v5301 = vadd.f32 %v4078, %v5300
      %v5302 = vpop.f32.mrb[0].mxu0
      %v5303 = vadd.f32 %v4082, %v5302
      %5304 = vmatprep.mubr.bf16.mxu0 %v3790
      %5305 = vmatmul.mubr.bf16.gmra.mrb[0].mxu0 %v3789
      %v5306 = vpop.f32.mrb[0].mxu0
      %v5307 = vadd.f32 %v4078, %v5306
      %v5308 = vpop.f32.mrb[0].mxu0
      %v5309 = vadd.f32 %v4082, %v5308
      %v5310 = vpop.f32.mrb[0].mxu0
      %v5311 = vadd.f32 %v4078, %v5310
      %v5312 = vpop.f32.mrb[0].mxu0
      %v5313 = vadd.f32 %v4082, %v5312
      %5314 = vmatprep.mubr.bf16.mxu0 %v3794
      %5315 = vmatmul.mubr.bf16.gmra.mrb[0].mxu0 %v3793
      %v5316 = vpop.f32.mrb[0].mxu0
      %v5317 = vadd.f32 %v4078, %v5316
      %v5318 = vpop.f32.mrb[0].mxu0
      %v5319 = vadd.f32 %v4082, %v5318
      %v5320 = vpop.f32.mrb[0].mxu0
      %v5321 = vadd.f32 %v4078, %v5320
      %v5322 = vpop.f32.mrb[0].mxu0
      %v5323 = vadd.f32 %v4082, %v5322
      %5324 = vmatprep.mubr.bf16.mxu0 %v3798
      %5325 = vmatmul.mubr.bf16.gmra.mrb[0].mxu0 %v3797
      %v5326 = vpop.f32.mrb[0].mxu0
      %v5327 = vadd.f32 %v4078, %v5326
      %v5328 = vpop.f32.mrb[0].mxu0
      %v5329 = vadd.f32 %v4082, %v5328
      %v5330 = vpop.f32.mrb[0].mxu0
      %v5331 = vadd.f32 %v4078, %v5330
      %v5332 = vpop.f32.mrb[0].mxu0
      %v5333 = vadd.f32 %v4082, %v5332
      %5334 = vmatprep.mubr.bf16.mxu0 %v3802
      %5335 = vmatmul.mubr.bf16.gmra.mrb[0].mxu0 %v3801
      %v5336 = vpop.f32.mrb[0].mxu0
      %v5337 = vadd.f32 %v4078, %v5336
      %v5338 = vpop.f32.mrb[0].mxu0
      %v5339 = vadd.f32 %v4082, %v5338
      %v5340 = vpop.f32.mrb[0].mxu0
      %v5341 = vadd.f32 %v4078, %v5340
      %v5342 = vpop.f32.mrb[0].mxu0
      %v5343 = vadd.f32 %v4082, %v5342
      %5344 = vmatprep.mubr.bf16.mxu0 %v3806
      %5345 = vmatmul.mubr.bf16.gmra.mrb[0].mxu0 %v3805
      %v5346 = vpop.f32.mrb[0].mxu0
      %v5347 = vadd.f32 %v4078, %v5346
      %v5348 = vpop.f32.mrb[0].mxu0
      %v5349 = vadd.f32 %v4082, %v5348
      %v5350 = vpop.f32.mrb[0].mxu0
      %v5351 = vadd.f32 %v4078, %v5350
      %v5352 = vpop.f32.mrb[0].mxu0
      %v5353 = vadd.f32 %v4082, %v5352
      %5354 = vmatprep.mubr.bf16.mxu0 %v3810
      %5355 = vmatmul.mubr.bf16.gmra.mrb[0].mxu0 %v3809
      %v5356 = vpop.f32.mrb[0].mxu0
      %v5357 = vadd.f32 %v4078, %v5356
      %v5358 = vpop.f32.mrb[0].mxu0
      %v5359 = vadd.f32 %v4082, %v5358
      %v5360 = vpop.f32.mrb[0].mxu0
      %v5361 = vadd.f32 %v4078, %v5360
      %v5362 = vpop.f32.mrb[0].mxu0
      %v5363 = vadd.f32 %v4082, %v5362
      %5364 = vmatprep.mubr.bf16.mxu0 %v3814
      %5365 = vmatmul.mubr.bf16.gmra.mrb[0].mxu0 %v3813
      %v5366 = vpop.f32.mrb[0].mxu0
      %v5367 = vadd.f32 %v4078, %v5366
      %v5368 = vpop.f32.mrb[0].mxu0
      %v5369 = vadd.f32 %v4082, %v5368
      %v5370 = vpop.f32.mrb[0].mxu0
      %v5371 = vadd.f32 %v4078, %v5370
      %v5372 = vpop.f32.mrb[0].mxu0
      %v5373 = vadd.f32 %v4082, %v5372
      %5374 = vdwg.mxu0
      %5375 = vmatprep.subr.bf16.mxu0 %v4927
      %5376 = vmatpush1.bf16.msra.mxu0 %v4926
      %5377 = vmatprep.subr.bf16.mxu0 %v4934
      %5378 = vmatpush1.bf16.msra.mxu0 %v4933
      %5379 = vmatprep.subr.bf16.mxu0 %v4941
      %5380 = vmatpush1.bf16.msra.mxu0 %v4940
      %5381 = vmatprep.subr.bf16.mxu0 %v4948
      %5382 = vmatpush1.bf16.msra.mxu0 %v4947
      %5383 = vmatprep.subr.bf16.mxu0 %v4955
      %5384 = vmatpush1.bf16.msra.mxu0 %v4954
      %5385 = vmatprep.subr.bf16.mxu0 %v4962
      %5386 = vmatpush1.bf16.msra.mxu0 %v4961
      %5387 = vmatprep.subr.bf16.mxu0 %v4969
      %5388 = vmatpush1.bf16.msra.mxu0 %v4968
      %5389 = vmatprep.subr.bf16.mxu0 %v4976
      %5390 = vmatpush1.bf16.msra.mxu0 %v4975
      %5391 = vmatprep.subr.bf16.mxu0 %v4983
      %5392 = vmatpush1.bf16.msra.mxu0 %v4982
      %5393 = vmatprep.subr.bf16.mxu0 %v4990
      %5394 = vmatpush1.bf16.msra.mxu0 %v4989
      %5395 = vmatprep.subr.bf16.mxu0 %v4997
      %5396 = vmatpush1.bf16.msra.mxu0 %v4996
      %5397 = vmatprep.subr.bf16.mxu0 %v5004
      %5398 = vmatpush1.bf16.msra.mxu0 %v5003
      %5399 = vmatprep.subr.bf16.mxu0 %v5011
      %5400 = vmatpush1.bf16.msra.mxu0 %v5010
      %5401 = vmatprep.subr.bf16.mxu0 %v5018
      %5402 = vmatpush1.bf16.msra.mxu0 %v5017
      %5403 = vmatprep.subr.bf16.mxu0 %v5025
      %5404 = vmatpush1.bf16.msra.mxu0 %v5024
      %5405 = vmatprep.subr.bf16.mxu0 %v5032
      %5406 = vmatpush1.bf16.msra.mxu0 %v5031
      %5407 = vmatprep.mubr.bf16.mxu0 %v3788
      %5408 = vmatmul.mubr.bf16.gmra.mrb[0].mxu0 %v3787
      %v5409 = vpop.f32.mrb[0].mxu0
      %v5410 = vadd.f32 %v5297, %v5409
      %v5411 = vpop.f32.mrb[0].mxu0
      %v5412 = vadd.f32 %v5299, %v5411
      %v5413 = vpop.f32.mrb[0].mxu0
      %v5414 = vadd.f32 %v5301, %v5413
      %v5415 = vpop.f32.mrb[0].mxu0
      %v5416 = vadd.f32 %v5303, %v5415
      %5417 = vmatprep.mubr.bf16.mxu0 %v3792
      %5418 = vmatmul.mubr.bf16.gmra.mrb[0].mxu0 %v3791
      %v5419 = vpop.f32.mrb[0].mxu0
      %v5420 = vadd.f32 %v5307, %v5419
      %v5421 = vpop.f32.mrb[0].mxu0
      %v5422 = vadd.f32 %v5309, %v5421
      %v5423 = vpop.f32.mrb[0].mxu0
      %v5424 = vadd.f32 %v5311, %v5423
      %v5425 = vpop.f32.mrb[0].mxu0
      %v5426 = vadd.f32 %v5313, %v5425
      %5427 = vmatprep.mubr.bf16.mxu0 %v3796
      %5428 = vmatmul.mubr.bf16.gmra.mrb[0].mxu0 %v3795
      %v5429 = vpop.f32.mrb[0].mxu0
      %v5430 = vadd.f32 %v5317, %v5429
      %v5431 = vpop.f32.mrb[0].mxu0
      %v5432 = vadd.f32 %v5319, %v5431
      %v5433 = vpop.f32.mrb[0].mxu0
      %v5434 = vadd.f32 %v5321, %v5433
      %v5435 = vpop.f32.mrb[0].mxu0
      %v5436 = vadd.f32 %v5323, %v5435
      %5437 = vmatprep.mubr.bf16.mxu0 %v3800
      %5438 = vmatmul.mubr.bf16.gmra.mrb[0].mxu0 %v3799
      %v5439 = vpop.f32.mrb[0].mxu0
      %v5440 = vadd.f32 %v5327, %v5439
      %v5441 = vpop.f32.mrb[0].mxu0
      %v5442 = vadd.f32 %v5329, %v5441
      %v5443 = vpop.f32.mrb[0].mxu0
      %v5444 = vadd.f32 %v5331, %v5443
      %v5445 = vpop.f32.mrb[0].mxu0
      %v5446 = vadd.f32 %v5333, %v5445
      %5447 = vmatprep.mubr.bf16.mxu0 %v3804
      %5448 = vmatmul.mubr.bf16.gmra.mrb[0].mxu0 %v3803
      %v5449 = vpop.f32.mrb[0].mxu0
      %v5450 = vadd.f32 %v5337, %v5449
      %v5451 = vpop.f32.mrb[0].mxu0
      %v5452 = vadd.f32 %v5339, %v5451
      %v5453 = vpop.f32.mrb[0].mxu0
      %v5454 = vadd.f32 %v5341, %v5453
      %v5455 = vpop.f32.mrb[0].mxu0
      %v5456 = vadd.f32 %v5343, %v5455
      %5457 = vmatprep.mubr.bf16.mxu0 %v3808
      %5458 = vmatmul.mubr.bf16.gmra.mrb[0].mxu0 %v3807
      %v5459 = vpop.f32.mrb[0].mxu0
      %v5460 = vadd.f32 %v5347, %v5459
      %v5461 = vpop.f32.mrb[0].mxu0
      %v5462 = vadd.f32 %v5349, %v5461
      %v5463 = vpop.f32.mrb[0].mxu0
      %v5464 = vadd.f32 %v5351, %v5463
      %v5465 = vpop.f32.mrb[0].mxu0
      %v5466 = vadd.f32 %v5353, %v5465
      %5467 = vmatprep.mubr.bf16.mxu0 %v3812
      %5468 = vmatmul.mubr.bf16.gmra.mrb[0].mxu0 %v3811
      %v5469 = vpop.f32.mrb[0].mxu0
      %v5470 = vadd.f32 %v5357, %v5469
      %v5471 = vpop.f32.mrb[0].mxu0
      %v5472 = vadd.f32 %v5359, %v5471
      %v5473 = vpop.f32.mrb[0].mxu0
      %v5474 = vadd.f32 %v5361, %v5473
      %v5475 = vpop.f32.mrb[0].mxu0
      %v5476 = vadd.f32 %v5363, %v5475
      %5477 = vmatprep.mubr.bf16.mxu0 %v3816
      %5478 = vmatmul.mubr.bf16.gmra.mrb[0].mxu0 %v3815
      %v5479 = vpop.f32.mrb[0].mxu0
      %v5480 = vadd.f32 %v5367, %v5479
      %v5481 = vpop.f32.mrb[0].mxu0
      %v5482 = vadd.f32 %v5369, %v5481
      %v5483 = vpop.f32.mrb[0].mxu0
      %v5484 = vadd.f32 %v5371, %v5483
      %v5485 = vpop.f32.mrb[0].mxu0
      %v5486 = vadd.f32 %v5373, %v5485
      %5487 = vdwg.mxu0
      %5488 = vmatprep.subr.bf16.mxu0 %v4817
      %5489 = vmatpush1.bf16.msra.mxu0 %v4816
      %5490 = vmatprep.subr.bf16.mxu0 %v4824
      %5491 = vmatpush1.bf16.msra.mxu0 %v4823
      %5492 = vmatprep.subr.bf16.mxu0 %v4831
      %5493 = vmatpush1.bf16.msra.mxu0 %v4830
      %5494 = vmatprep.subr.bf16.mxu0 %v4838
      %5495 = vmatpush1.bf16.msra.mxu0 %v4837
      %5496 = vmatprep.subr.bf16.mxu0 %v4845
      %5497 = vmatpush1.bf16.msra.mxu0 %v4844
      %5498 = vmatprep.subr.bf16.mxu0 %v4852
      %5499 = vmatpush1.bf16.msra.mxu0 %v4851
      %5500 = vmatprep.subr.bf16.mxu0 %v4859
      %5501 = vmatpush1.bf16.msra.mxu0 %v4858
      %5502 = vmatprep.subr.bf16.mxu0 %v4866
      %5503 = vmatpush1.bf16.msra.mxu0 %v4865
      %5504 = vmatprep.subr.bf16.mxu0 %v4873
      %5505 = vmatpush1.bf16.msra.mxu0 %v4872
      %5506 = vmatprep.subr.bf16.mxu0 %v4880
      %5507 = vmatpush1.bf16.msra.mxu0 %v4879
      %5508 = vmatprep.subr.bf16.mxu0 %v4887
      %5509 = vmatpush1.bf16.msra.mxu0 %v4886
      %5510 = vmatprep.subr.bf16.mxu0 %v4894
      %5511 = vmatpush1.bf16.msra.mxu0 %v4893
      %5512 = vmatprep.subr.bf16.mxu0 %v4901
      %5513 = vmatpush1.bf16.msra.mxu0 %v4900
      %5514 = vmatprep.subr.bf16.mxu0 %v4908
      %5515 = vmatpush1.bf16.msra.mxu0 %v4907
      %5516 = vmatprep.subr.bf16.mxu0 %v4915
      %5517 = vmatpush1.bf16.msra.mxu0 %v4914
      %5518 = vmatprep.subr.bf16.mxu0 %v4922
      %5519 = vmatpush1.bf16.msra.mxu0 %v4921
      %5520 = vmatprep.mubr.bf16.mxu0 %v3786
      %5521 = vmatmul.mubr.bf16.gmra.mrb[0].mxu0 %v3785
      %v5522 = vpop.f32.mrb[0].mxu0
      %v5523 = vadd.f32 %v4086, %v5522
      %v5524 = vpop.f32.mrb[0].mxu0
      %v5525 = vadd.f32 %v4090, %v5524
      %v5526 = vpop.f32.mrb[0].mxu0
      %v5527 = vadd.f32 %v4086, %v5526
      %v5528 = vpop.f32.mrb[0].mxu0
      %v5529 = vadd.f32 %v4090, %v5528
      %5530 = vmatprep.mubr.bf16.mxu0 %v3790
      %5531 = vmatmul.mubr.bf16.gmra.mrb[0].mxu0 %v3789
      %v5532 = vpop.f32.mrb[0].mxu0
      %v5533 = vadd.f32 %v4086, %v5532
      %v5534 = vpop.f32.mrb[0].mxu0
      %v5535 = vadd.f32 %v4090, %v5534
      %v5536 = vpop.f32.mrb[0].mxu0
      %v5537 = vadd.f32 %v4086, %v5536
      %v5538 = vpop.f32.mrb[0].mxu0
      %v5539 = vadd.f32 %v4090, %v5538
      %5540 = vmatprep.mubr.bf16.mxu0 %v3794
      %5541 = vmatmul.mubr.bf16.gmra.mrb[0].mxu0 %v3793
      %v5542 = vpop.f32.mrb[0].mxu0
      %v5543 = vadd.f32 %v4086, %v5542
      %v5544 = vpop.f32.mrb[0].mxu0
      %v5545 = vadd.f32 %v4090, %v5544
      %v5546 = vpop.f32.mrb[0].mxu0
      %v5547 = vadd.f32 %v4086, %v5546
      %v5548 = vpop.f32.mrb[0].mxu0
      %v5549 = vadd.f32 %v4090, %v5548
      %5550 = vmatprep.mubr.bf16.mxu0 %v3798
      %5551 = vmatmul.mubr.bf16.gmra.mrb[0].mxu0 %v3797
      %v5552 = vpop.f32.mrb[0].mxu0
      %v5553 = vadd.f32 %v4086, %v5552
      %v5554 = vpop.f32.mrb[0].mxu0
      %v5555 = vadd.f32 %v4090, %v5554
      %v5556 = vpop.f32.mrb[0].mxu0
      %v5557 = vadd.f32 %v4086, %v5556
      %v5558 = vpop.f32.mrb[0].mxu0
      %v5559 = vadd.f32 %v4090, %v5558
      %5560 = vmatprep.mubr.bf16.mxu0 %v3802
      %5561 = vmatmul.mubr.bf16.gmra.mrb[0].mxu0 %v3801
      %v5562 = vpop.f32.mrb[0].mxu0
      %v5563 = vadd.f32 %v4086, %v5562
      %v5564 = vpop.f32.mrb[0].mxu0
      %v5565 = vadd.f32 %v4090, %v5564
      %v5566 = vpop.f32.mrb[0].mxu0
      %v5567 = vadd.f32 %v4086, %v5566
      %v5568 = vpop.f32.mrb[0].mxu0
      %v5569 = vadd.f32 %v4090, %v5568
      %5570 = vmatprep.mubr.bf16.mxu0 %v3806
      %5571 = vmatmul.mubr.bf16.gmra.mrb[0].mxu0 %v3805
      %v5572 = vpop.f32.mrb[0].mxu0
      %v5573 = vadd.f32 %v4086, %v5572
      %v5574 = vpop.f32.mrb[0].mxu0
      %v5575 = vadd.f32 %v4090, %v5574
      %v5576 = vpop.f32.mrb[0].mxu0
      %v5577 = vadd.f32 %v4086, %v5576
      %v5578 = vpop.f32.mrb[0].mxu0
      %v5579 = vadd.f32 %v4090, %v5578
      %5580 = vmatprep.mubr.bf16.mxu0 %v3810
      %5581 = vmatmul.mubr.bf16.gmra.mrb[0].mxu0 %v3809
      %v5582 = vpop.f32.mrb[0].mxu0
      %v5583 = vadd.f32 %v4086, %v5582
      %v5584 = vpop.f32.mrb[0].mxu0
      %v5585 = vadd.f32 %v4090, %v5584
      %v5586 = vpop.f32.mrb[0].mxu0
      %v5587 = vadd.f32 %v4086, %v5586
      %v5588 = vpop.f32.mrb[0].mxu0
      %v5589 = vadd.f32 %v4090, %v5588
      %5590 = vmatprep.mubr.bf16.mxu0 %v3814
      %5591 = vmatmul.mubr.bf16.gmra.mrb[0].mxu0 %v3813
      %v5592 = vpop.f32.mrb[0].mxu0
      %v5593 = vadd.f32 %v4086, %v5592
      %v5594 = vpop.f32.mrb[0].mxu0
      %v5595 = vadd.f32 %v4090, %v5594
      %v5596 = vpop.f32.mrb[0].mxu0
      %v5597 = vadd.f32 %v4086, %v5596
      %v5598 = vpop.f32.mrb[0].mxu0
      %v5599 = vadd.f32 %v4090, %v5598
      %5600 = vdwg.mxu0
      %5601 = vmatprep.subr.bf16.mxu0 %v4929
      %5602 = vmatpush1.bf16.msra.mxu0 %v4928
      %5603 = vmatprep.subr.bf16.mxu0 %v4936
      %5604 = vmatpush1.bf16.msra.mxu0 %v4935
      %5605 = vmatprep.subr.bf16.mxu0 %v4943
      %5606 = vmatpush1.bf16.msra.mxu0 %v4942
      %5607 = vmatprep.subr.bf16.mxu0 %v4950
      %5608 = vmatpush1.bf16.msra.mxu0 %v4949
      %5609 = vmatprep.subr.bf16.mxu0 %v4957
      %5610 = vmatpush1.bf16.msra.mxu0 %v4956
      %5611 = vmatprep.subr.bf16.mxu0 %v4964
      %5612 = vmatpush1.bf16.msra.mxu0 %v4963
      %5613 = vmatprep.subr.bf16.mxu0 %v4971
      %5614 = vmatpush1.bf16.msra.mxu0 %v4970
      %5615 = vmatprep.subr.bf16.mxu0 %v4978
      %5616 = vmatpush1.bf16.msra.mxu0 %v4977
      %5617 = vmatprep.subr.bf16.mxu0 %v4985
      %5618 = vmatpush1.bf16.msra.mxu0 %v4984
      %5619 = vmatprep.subr.bf16.mxu0 %v4992
      %5620 = vmatpush1.bf16.msra.mxu0 %v4991
      %5621 = vmatprep.subr.bf16.mxu0 %v4999
      %5622 = vmatpush1.bf16.msra.mxu0 %v4998
      %5623 = vmatprep.subr.bf16.mxu0 %v5006
      %5624 = vmatpush1.bf16.msra.mxu0 %v5005
      %5625 = vmatprep.subr.bf16.mxu0 %v5013
      %5626 = vmatpush1.bf16.msra.mxu0 %v5012
      %5627 = vmatprep.subr.bf16.mxu0 %v5020
      %5628 = vmatpush1.bf16.msra.mxu0 %v5019
      %5629 = vmatprep.subr.bf16.mxu0 %v5027
      %5630 = vmatpush1.bf16.msra.mxu0 %v5026
      %5631 = vmatprep.subr.bf16.mxu0 %v5034
      %5632 = vmatpush1.bf16.msra.mxu0 %v5033
      %5633 = vmatprep.mubr.bf16.mxu0 %v3788
      %5634 = vmatmul.mubr.bf16.gmra.mrb[0].mxu0 %v3787
      %v5635 = vpop.f32.mrb[0].mxu0
      %v5636 = vadd.f32 %v5523, %v5635
      %v5637 = vpop.f32.mrb[0].mxu0
      %v5638 = vadd.f32 %v5525, %v5637
      %v5639 = vpop.f32.mrb[0].mxu0
      %v5640 = vadd.f32 %v5527, %v5639
      %v5641 = vpop.f32.mrb[0].mxu0
      %v5642 = vadd.f32 %v5529, %v5641
      %5643 = vmatprep.mubr.bf16.mxu0 %v3792
      %5644 = vmatmul.mubr.bf16.gmra.mrb[0].mxu0 %v3791
      %v5645 = vpop.f32.mrb[0].mxu0
      %v5646 = vadd.f32 %v5533, %v5645
      %v5647 = vpop.f32.mrb[0].mxu0
      %v5648 = vadd.f32 %v5535, %v5647
      %v5649 = vpop.f32.mrb[0].mxu0
      %v5650 = vadd.f32 %v5537, %v5649
      %v5651 = vpop.f32.mrb[0].mxu0
      %v5652 = vadd.f32 %v5539, %v5651
      %5653 = vmatprep.mubr.bf16.mxu0 %v3796
      %5654 = vmatmul.mubr.bf16.gmra.mrb[0].mxu0 %v3795
      %v5655 = vpop.f32.mrb[0].mxu0
      %v5656 = vadd.f32 %v5543, %v5655
      %v5657 = vpop.f32.mrb[0].mxu0
      %v5658 = vadd.f32 %v5545, %v5657
      %v5659 = vpop.f32.mrb[0].mxu0
      %v5660 = vadd.f32 %v5547, %v5659
      %v5661 = vpop.f32.mrb[0].mxu0
      %v5662 = vadd.f32 %v5549, %v5661
      %5663 = vmatprep.mubr.bf16.mxu0 %v3800
      %5664 = vmatmul.mubr.bf16.gmra.mrb[0].mxu0 %v3799
      %v5665 = vpop.f32.mrb[0].mxu0
      %v5666 = vadd.f32 %v5553, %v5665
      %v5667 = vpop.f32.mrb[0].mxu0
      %v5668 = vadd.f32 %v5555, %v5667
      %v5669 = vpop.f32.mrb[0].mxu0
      %v5670 = vadd.f32 %v5557, %v5669
      %v5671 = vpop.f32.mrb[0].mxu0
      %v5672 = vadd.f32 %v5559, %v5671
      %5673 = vmatprep.mubr.bf16.mxu0 %v3804
      %5674 = vmatmul.mubr.bf16.gmra.mrb[0].mxu0 %v3803
      %v5675 = vpop.f32.mrb[0].mxu0
      %v5676 = vadd.f32 %v5563, %v5675
      %v5677 = vpop.f32.mrb[0].mxu0
      %v5678 = vadd.f32 %v5565, %v5677
      %v5679 = vpop.f32.mrb[0].mxu0
      %v5680 = vadd.f32 %v5567, %v5679
      %v5681 = vpop.f32.mrb[0].mxu0
      %v5682 = vadd.f32 %v5569, %v5681
      %5683 = vmatprep.mubr.bf16.mxu0 %v3808
      %5684 = vmatmul.mubr.bf16.gmra.mrb[0].mxu0 %v3807
      %v5685 = vpop.f32.mrb[0].mxu0
      %v5686 = vadd.f32 %v5573, %v5685
      %v5687 = vpop.f32.mrb[0].mxu0
      %v5688 = vadd.f32 %v5575, %v5687
      %v5689 = vpop.f32.mrb[0].mxu0
      %v5690 = vadd.f32 %v5577, %v5689
      %v5691 = vpop.f32.mrb[0].mxu0
      %v5692 = vadd.f32 %v5579, %v5691
      %5693 = vmatprep.mubr.bf16.mxu0 %v3812
      %5694 = vmatmul.mubr.bf16.gmra.mrb[0].mxu0 %v3811
      %v5695 = vpop.f32.mrb[0].mxu0
      %v5696 = vadd.f32 %v5583, %v5695
      %v5697 = vpop.f32.mrb[0].mxu0
      %v5698 = vadd.f32 %v5585, %v5697
      %v5699 = vpop.f32.mrb[0].mxu0
      %v5700 = vadd.f32 %v5587, %v5699
      %v5701 = vpop.f32.mrb[0].mxu0
      %v5702 = vadd.f32 %v5589, %v5701
      %5703 = vmatprep.mubr.bf16.mxu0 %v3816
      %5704 = vmatmul.mubr.bf16.gmra.mrb[0].mxu0 %v3815
      %v5705 = vpop.f32.mrb[0].mxu0
      %v5706 = vadd.f32 %v5593, %v5705
      %v5707 = vpop.f32.mrb[0].mxu0
      %v5708 = vadd.f32 %v5595, %v5707
      %v5709 = vpop.f32.mrb[0].mxu0
      %v5710 = vadd.f32 %v5597, %v5709
      %v5711 = vpop.f32.mrb[0].mxu0
      %v5712 = vadd.f32 %v5599, %v5711
      %5713 = vdwg.mxu0
      %5714 = vmatprep.subr.bf16.mxu0 %v4819
      %5715 = vmatpush1.bf16.msra.mxu0 %v4818
      %5716 = vmatprep.subr.bf16.mxu0 %v4826
      %5717 = vmatpush1.bf16.msra.mxu0 %v4825
      %5718 = vmatprep.subr.bf16.mxu0 %v4833
      %5719 = vmatpush1.bf16.msra.mxu0 %v4832
      %5720 = vmatprep.subr.bf16.mxu0 %v4840
      %5721 = vmatpush1.bf16.msra.mxu0 %v4839
      %5722 = vmatprep.subr.bf16.mxu0 %v4847
      %5723 = vmatpush1.bf16.msra.mxu0 %v4846
      %5724 = vmatprep.subr.bf16.mxu0 %v4854
      %5725 = vmatpush1.bf16.msra.mxu0 %v4853
      %5726 = vmatprep.subr.bf16.mxu0 %v4861
      %5727 = vmatpush1.bf16.msra.mxu0 %v4860
      %5728 = vmatprep.subr.bf16.mxu0 %v4868
      %5729 = vmatpush1.bf16.msra.mxu0 %v4867
      %5730 = vmatprep.subr.bf16.mxu0 %v4875
      %5731 = vmatpush1.bf16.msra.mxu0 %v4874
      %5732 = vmatprep.subr.bf16.mxu0 %v4882
      %5733 = vmatpush1.bf16.msra.mxu0 %v4881
      %5734 = vmatprep.subr.bf16.mxu0 %v4889
      %5735 = vmatpush1.bf16.msra.mxu0 %v4888
      %5736 = vmatprep.subr.bf16.mxu0 %v4896
      %5737 = vmatpush1.bf16.msra.mxu0 %v4895
      %5738 = vmatprep.subr.bf16.mxu0 %v4903
      %5739 = vmatpush1.bf16.msra.mxu0 %v4902
      %5740 = vmatprep.subr.bf16.mxu0 %v4910
      %5741 = vmatpush1.bf16.msra.mxu0 %v4909
      %5742 = vmatprep.subr.bf16.mxu0 %v4917
      %5743 = vmatpush1.bf16.msra.mxu0 %v4916
      %5744 = vmatprep.subr.bf16.mxu0 %v4924
      %5745 = vmatpush1.bf16.msra.mxu0 %v4923
      %5746 = vmatprep.mubr.bf16.mxu0 %v3786
      %5747 = vmatmul.mubr.bf16.gmra.mrb[0].mxu0 %v3785
      %v5748 = vpop.f32.mrb[0].mxu0
      %v5749 = vadd.f32 %v4094, %v5748
      %v5750 = vpop.f32.mrb[0].mxu0
      %v5751 = vadd.f32 %v4098, %v5750
      %v5752 = vpop.f32.mrb[0].mxu0
      %v5753 = vadd.f32 %v4094, %v5752
      %v5754 = vpop.f32.mrb[0].mxu0
      %v5755 = vadd.f32 %v4098, %v5754
      %5756 = vmatprep.mubr.bf16.mxu0 %v3790
      %5757 = vmatmul.mubr.bf16.gmra.mrb[0].mxu0 %v3789
      %v5758 = vpop.f32.mrb[0].mxu0
      %v5759 = vadd.f32 %v4094, %v5758
      %v5760 = vpop.f32.mrb[0].mxu0
      %v5761 = vadd.f32 %v4098, %v5760
      %v5762 = vpop.f32.mrb[0].mxu0
      %v5763 = vadd.f32 %v4094, %v5762
      %v5764 = vpop.f32.mrb[0].mxu0
      %v5765 = vadd.f32 %v4098, %v5764
      %5766 = vmatprep.mubr.bf16.mxu0 %v3794
      %5767 = vmatmul.mubr.bf16.gmra.mrb[0].mxu0 %v3793
      %v5768 = vpop.f32.mrb[0].mxu0
      %v5769 = vadd.f32 %v4094, %v5768
      %v5770 = vpop.f32.mrb[0].mxu0
      %v5771 = vadd.f32 %v4098, %v5770
      %v5772 = vpop.f32.mrb[0].mxu0
      %v5773 = vadd.f32 %v4094, %v5772
      %v5774 = vpop.f32.mrb[0].mxu0
      %v5775 = vadd.f32 %v4098, %v5774
      %5776 = vmatprep.mubr.bf16.mxu0 %v3798
      %5777 = vmatmul.mubr.bf16.gmra.mrb[0].mxu0 %v3797
      %v5778 = vpop.f32.mrb[0].mxu0
      %v5779 = vadd.f32 %v4094, %v5778
      %v5780 = vpop.f32.mrb[0].mxu0
      %v5781 = vadd.f32 %v4098, %v5780
      %v5782 = vpop.f32.mrb[0].mxu0
      %v5783 = vadd.f32 %v4094, %v5782
      %v5784 = vpop.f32.mrb[0].mxu0
      %v5785 = vadd.f32 %v4098, %v5784
      %5786 = vmatprep.mubr.bf16.mxu0 %v3802
      %5787 = vmatmul.mubr.bf16.gmra.mrb[0].mxu0 %v3801
      %v5788 = vpop.f32.mrb[0].mxu0
      %v5789 = vadd.f32 %v4094, %v5788
      %v5790 = vpop.f32.mrb[0].mxu0
      %v5791 = vadd.f32 %v4098, %v5790
      %v5792 = vpop.f32.mrb[0].mxu0
      %v5793 = vadd.f32 %v4094, %v5792
      %v5794 = vpop.f32.mrb[0].mxu0
      %v5795 = vadd.f32 %v4098, %v5794
      %5796 = vmatprep.mubr.bf16.mxu0 %v3806
      %5797 = vmatmul.mubr.bf16.gmra.mrb[0].mxu0 %v3805
      %v5798 = vpop.f32.mrb[0].mxu0
      %v5799 = vadd.f32 %v4094, %v5798
      %v5800 = vpop.f32.mrb[0].mxu0
      %v5801 = vadd.f32 %v4098, %v5800
      %v5802 = vpop.f32.mrb[0].mxu0
      %v5803 = vadd.f32 %v4094, %v5802
      %v5804 = vpop.f32.mrb[0].mxu0
      %v5805 = vadd.f32 %v4098, %v5804
      %5806 = vmatprep.mubr.bf16.mxu0 %v3810
      %5807 = vmatmul.mubr.bf16.gmra.mrb[0].mxu0 %v3809
      %v5808 = vpop.f32.mrb[0].mxu0
      %v5809 = vadd.f32 %v4094, %v5808
      %v5810 = vpop.f32.mrb[0].mxu0
      %v5811 = vadd.f32 %v4098, %v5810
      %v5812 = vpop.f32.mrb[0].mxu0
      %v5813 = vadd.f32 %v4094, %v5812
      %v5814 = vpop.f32.mrb[0].mxu0
      %v5815 = vadd.f32 %v4098, %v5814
      %5816 = vmatprep.mubr.bf16.mxu0 %v3814
      %5817 = vmatmul.mubr.bf16.gmra.mrb[0].mxu0 %v3813
      %v5818 = vpop.f32.mrb[0].mxu0
      %v5819 = vadd.f32 %v4094, %v5818
      %v5820 = vpop.f32.mrb[0].mxu0
      %v5821 = vadd.f32 %v4098, %v5820
      %v5822 = vpop.f32.mrb[0].mxu0
      %v5823 = vadd.f32 %v4094, %v5822
      %v5824 = vpop.f32.mrb[0].mxu0
      %v5825 = vadd.f32 %v4098, %v5824
      %5826 = vdwg.mxu0
      %5827 = vmatprep.subr.bf16.mxu0 %v4931
      %5828 = vmatpush1.bf16.msra.mxu0 %v4930
      %5829 = vmatprep.subr.bf16.mxu0 %v4938
      %5830 = vmatpush1.bf16.msra.mxu0 %v4937
      %5831 = vmatprep.subr.bf16.mxu0 %v4945
      %5832 = vmatpush1.bf16.msra.mxu0 %v4944
      %5833 = vmatprep.subr.bf16.mxu0 %v4952
      %5834 = vmatpush1.bf16.msra.mxu0 %v4951
      %5835 = vmatprep.subr.bf16.mxu0 %v4959
      %5836 = vmatpush1.bf16.msra.mxu0 %v4958
      %5837 = vmatprep.subr.bf16.mxu0 %v4966
      %5838 = vmatpush1.bf16.msra.mxu0 %v4965
      %5839 = vmatprep.subr.bf16.mxu0 %v4973
      %5840 = vmatpush1.bf16.msra.mxu0 %v4972
      %5841 = vmatprep.subr.bf16.mxu0 %v4980
      %5842 = vmatpush1.bf16.msra.mxu0 %v4979
      %5843 = vmatprep.subr.bf16.mxu0 %v4987
      %5844 = vmatpush1.bf16.msra.mxu0 %v4986
      %5845 = vmatprep.subr.bf16.mxu0 %v4994
      %5846 = vmatpush1.bf16.msra.mxu0 %v4993
      %5847 = vmatprep.subr.bf16.mxu0 %v5001
      %5848 = vmatpush1.bf16.msra.mxu0 %v5000
      %5849 = vmatprep.subr.bf16.mxu0 %v5008
      %5850 = vmatpush1.bf16.msra.mxu0 %v5007
      %5851 = vmatprep.subr.bf16.mxu0 %v5015
      %5852 = vmatpush1.bf16.msra.mxu0 %v5014
      %5853 = vmatprep.subr.bf16.mxu0 %v5022
      %5854 = vmatpush1.bf16.msra.mxu0 %v5021
      %5855 = vmatprep.subr.bf16.mxu0 %v5029
      %5856 = vmatpush1.bf16.msra.mxu0 %v5028
      %5857 = vmatprep.subr.bf16.mxu0 %v5036
      %5858 = vmatpush1.bf16.msra.mxu0 %v5035
      %5859 = vmatprep.mubr.bf16.mxu0 %v3788
      %5860 = vmatmul.mubr.bf16.gmra.mrb[0].mxu0 %v3787
      %v5861 = vpop.f32.mrb[0].mxu0
      %v5862 = vadd.f32 %v5749, %v5861
      %v5863 = vpop.f32.mrb[0].mxu0
      %v5864 = vadd.f32 %v5751, %v5863
      %v5865 = vpop.f32.mrb[0].mxu0
      %v5866 = vadd.f32 %v5753, %v5865
      %v5867 = vpop.f32.mrb[0].mxu0
      %v5868 = vadd.f32 %v5755, %v5867
      %5869 = vmatprep.mubr.bf16.mxu0 %v3792
      %5870 = vmatmul.mubr.bf16.gmra.mrb[0].mxu0 %v3791
      %v5871 = vpop.f32.mrb[0].mxu0
      %v5872 = vadd.f32 %v5759, %v5871
      %v5873 = vpop.f32.mrb[0].mxu0
      %v5874 = vadd.f32 %v5761, %v5873
      %v5875 = vpop.f32.mrb[0].mxu0
      %v5876 = vadd.f32 %v5763, %v5875
      %v5877 = vpop.f32.mrb[0].mxu0
      %v5878 = vadd.f32 %v5765, %v5877
      %5879 = vmatprep.mubr.bf16.mxu0 %v3796
      %5880 = vmatmul.mubr.bf16.gmra.mrb[0].mxu0 %v3795
      %v5881 = vpop.f32.mrb[0].mxu0
      %v5882 = vadd.f32 %v5769, %v5881
      %v5883 = vpop.f32.mrb[0].mxu0
      %v5884 = vadd.f32 %v5771, %v5883
      %v5885 = vpop.f32.mrb[0].mxu0
      %v5886 = vadd.f32 %v5773, %v5885
      %v5887 = vpop.f32.mrb[0].mxu0
      %v5888 = vadd.f32 %v5775, %v5887
      %5889 = vmatprep.mubr.bf16.mxu0 %v3800
      %5890 = vmatmul.mubr.bf16.gmra.mrb[0].mxu0 %v3799
      %v5891 = vpop.f32.mrb[0].mxu0
      %v5892 = vadd.f32 %v5779, %v5891
      %v5893 = vpop.f32.mrb[0].mxu0
      %v5894 = vadd.f32 %v5781, %v5893
      %v5895 = vpop.f32.mrb[0].mxu0
      %v5896 = vadd.f32 %v5783, %v5895
      %v5897 = vpop.f32.mrb[0].mxu0
      %v5898 = vadd.f32 %v5785, %v5897
      %5899 = vmatprep.mubr.bf16.mxu0 %v3804
      %5900 = vmatmul.mubr.bf16.gmra.mrb[0].mxu0 %v3803
      %v5901 = vpop.f32.mrb[0].mxu0
      %v5902 = vadd.f32 %v5789, %v5901
      %v5903 = vpop.f32.mrb[0].mxu0
      %v5904 = vadd.f32 %v5791, %v5903
      %v5905 = vpop.f32.mrb[0].mxu0
      %v5906 = vadd.f32 %v5793, %v5905
      %v5907 = vpop.f32.mrb[0].mxu0
      %v5908 = vadd.f32 %v5795, %v5907
      %5909 = vmatprep.mubr.bf16.mxu0 %v3808
      %5910 = vmatmul.mubr.bf16.gmra.mrb[0].mxu0 %v3807
      %v5911 = vpop.f32.mrb[0].mxu0
      %v5912 = vadd.f32 %v5799, %v5911
      %v5913 = vpop.f32.mrb[0].mxu0
      %v5914 = vadd.f32 %v5801, %v5913
      %v5915 = vpop.f32.mrb[0].mxu0
      %v5916 = vadd.f32 %v5803, %v5915
      %v5917 = vpop.f32.mrb[0].mxu0
      %v5918 = vadd.f32 %v5805, %v5917
      %5919 = vmatprep.mubr.bf16.mxu0 %v3812
      %5920 = vmatmul.mubr.bf16.gmra.mrb[0].mxu0 %v3811
      %v5921 = vpop.f32.mrb[0].mxu0
      %v5922 = vadd.f32 %v5809, %v5921
      %v5923 = vpop.f32.mrb[0].mxu0
      %v5924 = vadd.f32 %v5811, %v5923
      %v5925 = vpop.f32.mrb[0].mxu0
      %v5926 = vadd.f32 %v5813, %v5925
      %v5927 = vpop.f32.mrb[0].mxu0
      %v5928 = vadd.f32 %v5815, %v5927
      %5929 = vmatprep.mubr.bf16.mxu0 %v3816
      %5930 = vmatmul.mubr.bf16.gmra.mrb[0].mxu0 %v3815
      %v5931 = vpop.f32.mrb[0].mxu0
      %v5932 = vadd.f32 %v5819, %v5931
      %v5933 = vpop.f32.mrb[0].mxu0
      %v5934 = vadd.f32 %v5821, %v5933
      %v5935 = vpop.f32.mrb[0].mxu0
      %v5936 = vadd.f32 %v5823, %v5935
      %v5937 = vpop.f32.mrb[0].mxu0
      %v5938 = vadd.f32 %v5825, %v5937
      %5939 = vdwg.mxu0
      %5940 = vmatprep.subr.bf16.mxu0 0
      %5941 = vmatpush1.bf16.msra.mxu0 %v4820
      %5942 = vmatprep.subr.bf16.mxu0 0
      %5943 = vmatpush1.bf16.msra.mxu0 %v4827
      %5944 = vmatprep.subr.bf16.mxu0 0
      %5945 = vmatpush1.bf16.msra.mxu0 %v4834
      %5946 = vmatprep.subr.bf16.mxu0 0
      %5947 = vmatpush1.bf16.msra.mxu0 %v4841
      %5948 = vmatprep.subr.bf16.mxu0 0
      %5949 = vmatpush1.bf16.msra.mxu0 %v4848
      %5950 = vmatprep.subr.bf16.mxu0 0
      %5951 = vmatpush1.bf16.msra.mxu0 %v4855
      %5952 = vmatprep.subr.bf16.mxu0 0
      %5953 = vmatpush1.bf16.msra.mxu0 %v4862
      %5954 = vmatprep.subr.bf16.mxu0 0
      %5955 = vmatpush1.bf16.msra.mxu0 %v4869
      %5956 = vmatprep.subr.bf16.mxu0 0
      %5957 = vmatpush1.bf16.msra.mxu0 %v4876
      %5958 = vmatprep.subr.bf16.mxu0 0
      %5959 = vmatpush1.bf16.msra.mxu0 %v4883
      %5960 = vmatprep.subr.bf16.mxu0 0
      %5961 = vmatpush1.bf16.msra.mxu0 %v4890
      %5962 = vmatprep.subr.bf16.mxu0 0
      %5963 = vmatpush1.bf16.msra.mxu0 %v4897
      %5964 = vmatprep.subr.bf16.mxu0 0
      %5965 = vmatpush1.bf16.msra.mxu0 %v4904
      %5966 = vmatprep.subr.bf16.mxu0 0
      %5967 = vmatpush1.bf16.msra.mxu0 %v4911
      %5968 = vmatprep.subr.bf16.mxu0 0
      %5969 = vmatpush1.bf16.msra.mxu0 %v4918
      %5970 = vmatprep.subr.bf16.mxu0 0
      %5971 = vmatpush1.bf16.msra.mxu0 %v4925
      %5972 = vmatprep.mubr.bf16.mxu0 %v3786
      %5973 = vmatmul.mubr.bf16.gmra.mrb[0].mxu0 %v3785
      %v5974 = vpop.f32.mrb[0].mxu0
      %v5975 = vadd.f32 %v4102, %v5974
      %v5976 = vpop.f32.mrb[0].mxu0
      %v5977 = vpop.f32.mrb[0].mxu0
      %v5978 = vadd.f32 %v4102, %v5977
      %v5979 = vpop.f32.mrb[0].mxu0
      %5980 = vmatprep.mubr.bf16.mxu0 %v3790
      %5981 = vmatmul.mubr.bf16.gmra.mrb[0].mxu0 %v3789
      %v5982 = vpop.f32.mrb[0].mxu0
      %v5983 = vadd.f32 %v4102, %v5982
      %v5984 = vpop.f32.mrb[0].mxu0
      %v5985 = vpop.f32.mrb[0].mxu0
      %v5986 = vadd.f32 %v4102, %v5985
      %v5987 = vpop.f32.mrb[0].mxu0
      %5988 = vmatprep.mubr.bf16.mxu0 %v3794
      %5989 = vmatmul.mubr.bf16.gmra.mrb[0].mxu0 %v3793
      %v5990 = vpop.f32.mrb[0].mxu0
      %v5991 = vadd.f32 %v4102, %v5990
      %v5992 = vpop.f32.mrb[0].mxu0
      %v5993 = vpop.f32.mrb[0].mxu0
      %v5994 = vadd.f32 %v4102, %v5993
      %v5995 = vpop.f32.mrb[0].mxu0
      %5996 = vmatprep.mubr.bf16.mxu0 %v3798
      %5997 = vmatmul.mubr.bf16.gmra.mrb[0].mxu0 %v3797
      %v5998 = vpop.f32.mrb[0].mxu0
      %v5999 = vadd.f32 %v4102, %v5998
      %v6000 = vpop.f32.mrb[0].mxu0
      %v6001 = vpop.f32.mrb[0].mxu0
      %v6002 = vadd.f32 %v4102, %v6001
      %v6003 = vpop.f32.mrb[0].mxu0
      %6004 = vmatprep.mubr.bf16.mxu0 %v3802
      %6005 = vmatmul.mubr.bf16.gmra.mrb[0].mxu0 %v3801
      %v6006 = vpop.f32.mrb[0].mxu0
      %v6007 = vadd.f32 %v4102, %v6006
      %v6008 = vpop.f32.mrb[0].mxu0
      %v6009 = vpop.f32.mrb[0].mxu0
      %v6010 = vadd.f32 %v4102, %v6009
      %v6011 = vpop.f32.mrb[0].mxu0
      %6012 = vmatprep.mubr.bf16.mxu0 %v3806
      %6013 = vmatmul.mubr.bf16.gmra.mrb[0].mxu0 %v3805
      %v6014 = vpop.f32.mrb[0].mxu0
      %v6015 = vadd.f32 %v4102, %v6014
      %v6016 = vpop.f32.mrb[0].mxu0
      %v6017 = vpop.f32.mrb[0].mxu0
      %v6018 = vadd.f32 %v4102, %v6017
      %v6019 = vpop.f32.mrb[0].mxu0
      %6020 = vmatprep.mubr.bf16.mxu0 %v3810
      %6021 = vmatmul.mubr.bf16.gmra.mrb[0].mxu0 %v3809
      %v6022 = vpop.f32.mrb[0].mxu0
      %v6023 = vadd.f32 %v4102, %v6022
      %v6024 = vpop.f32.mrb[0].mxu0
      %v6025 = vpop.f32.mrb[0].mxu0
      %v6026 = vadd.f32 %v4102, %v6025
      %v6027 = vpop.f32.mrb[0].mxu0
      %6028 = vmatprep.mubr.bf16.mxu0 %v3814
      %6029 = vmatmul.mubr.bf16.gmra.mrb[0].mxu0 %v3813
      %v6030 = vpop.f32.mrb[0].mxu0
      %v6031 = vadd.f32 %v4102, %v6030
      %v6032 = vpop.f32.mrb[0].mxu0
      %v6033 = vpop.f32.mrb[0].mxu0
      %v6034 = vadd.f32 %v4102, %v6033
      %v6035 = vpop.f32.mrb[0].mxu0
      %6036 = vdwg.mxu0
      %6037 = vmatprep.subr.bf16.mxu0 0
      %6038 = vmatpush1.bf16.msra.mxu0 %v4932
      %6039 = vmatprep.subr.bf16.mxu0 0
      %6040 = vmatpush1.bf16.msra.mxu0 %v4939
      %6041 = vmatprep.subr.bf16.mxu0 0
      %6042 = vmatpush1.bf16.msra.mxu0 %v4946
      %6043 = vmatprep.subr.bf16.mxu0 0
      %6044 = vmatpush1.bf16.msra.mxu0 %v4953
      %6045 = vmatprep.subr.bf16.mxu0 0
      %6046 = vmatpush1.bf16.msra.mxu0 %v4960
      %6047 = vmatprep.subr.bf16.mxu0 0
      %6048 = vmatpush1.bf16.msra.mxu0 %v4967
      %6049 = vmatprep.subr.bf16.mxu0 0
      %6050 = vmatpush1.bf16.msra.mxu0 %v4974
      %6051 = vmatprep.subr.bf16.mxu0 0
      %6052 = vmatpush1.bf16.msra.mxu0 %v4981
      %6053 = vmatprep.subr.bf16.mxu0 0
      %6054 = vmatpush1.bf16.msra.mxu0 %v4988
      %6055 = vmatprep.subr.bf16.mxu0 0
      %6056 = vmatpush1.bf16.msra.mxu0 %v4995
      %6057 = vmatprep.subr.bf16.mxu0 0
      %6058 = vmatpush1.bf16.msra.mxu0 %v5002
      %6059 = vmatprep.subr.bf16.mxu0 0
      %6060 = vmatpush1.bf16.msra.mxu0 %v5009
      %6061 = vmatprep.subr.bf16.mxu0 0
      %6062 = vmatpush1.bf16.msra.mxu0 %v5016
      %6063 = vmatprep.subr.bf16.mxu0 0
      %6064 = vmatpush1.bf16.msra.mxu0 %v5023
      %6065 = vmatprep.subr.bf16.mxu0 0
      %6066 = vmatpush1.bf16.msra.mxu0 %v5030
      %6067 = vmatprep.subr.bf16.mxu0 0
      %6068 = vmatpush1.bf16.msra.mxu0 %v5037
      %6069 = vmatprep.mubr.bf16.mxu0 %v3788
      %6070 = vmatmul.mubr.bf16.gmra.mrb[0].mxu0 %v3787
      %v6071 = vpop.f32.mrb[0].mxu0
      %v6072 = vadd.f32 %v5975, %v6071
      %v6073 = vpop.f32.mrb[0].mxu0
      %v6074 = vpop.f32.mrb[0].mxu0
      %v6075 = vadd.f32 %v5978, %v6074
      %v6076 = vpop.f32.mrb[0].mxu0
      %6077 = vmatprep.mubr.bf16.mxu0 %v3792
      %6078 = vmatmul.mubr.bf16.gmra.mrb[0].mxu0 %v3791
      %v6079 = vpop.f32.mrb[0].mxu0
      %v6080 = vadd.f32 %v5983, %v6079
      %v6081 = vpop.f32.mrb[0].mxu0
      %v6082 = vpop.f32.mrb[0].mxu0
      %v6083 = vadd.f32 %v5986, %v6082
      %v6084 = vpop.f32.mrb[0].mxu0
      %6085 = vmatprep.mubr.bf16.mxu0 %v3796
      %6086 = vmatmul.mubr.bf16.gmra.mrb[0].mxu0 %v3795
      %v6087 = vpop.f32.mrb[0].mxu0
      %v6088 = vadd.f32 %v5991, %v6087
      %v6089 = vpop.f32.mrb[0].mxu0
      %v6090 = vpop.f32.mrb[0].mxu0
      %v6091 = vadd.f32 %v5994, %v6090
      %v6092 = vpop.f32.mrb[0].mxu0
      %6093 = vmatprep.mubr.bf16.mxu0 %v3800
      %6094 = vmatmul.mubr.bf16.gmra.mrb[0].mxu0 %v3799
      %v6095 = vpop.f32.mrb[0].mxu0
      %v6096 = vadd.f32 %v5999, %v6095
      %v6097 = vpop.f32.mrb[0].mxu0
      %v6098 = vpop.f32.mrb[0].mxu0
      %v6099 = vadd.f32 %v6002, %v6098
      %v6100 = vpop.f32.mrb[0].mxu0
      %6101 = vmatprep.mubr.bf16.mxu0 %v3804
      %6102 = vmatmul.mubr.bf16.gmra.mrb[0].mxu0 %v3803
      %v6103 = vpop.f32.mrb[0].mxu0
      %v6104 = vadd.f32 %v6007, %v6103
      %v6105 = vpop.f32.mrb[0].mxu0
      %v6106 = vpop.f32.mrb[0].mxu0
      %v6107 = vadd.f32 %v6010, %v6106
      %v6108 = vpop.f32.mrb[0].mxu0
      %6109 = vmatprep.mubr.bf16.mxu0 %v3808
      %6110 = vmatmul.mubr.bf16.gmra.mrb[0].mxu0 %v3807
      %v6111 = vpop.f32.mrb[0].mxu0
      %v6112 = vadd.f32 %v6015, %v6111
      %v6113 = vpop.f32.mrb[0].mxu0
      %v6114 = vpop.f32.mrb[0].mxu0
      %v6115 = vadd.f32 %v6018, %v6114
      %v6116 = vpop.f32.mrb[0].mxu0
      %6117 = vmatprep.mubr.bf16.mxu0 %v3812
      %6118 = vmatmul.mubr.bf16.gmra.mrb[0].mxu0 %v3811
      %v6119 = vpop.f32.mrb[0].mxu0
      %v6120 = vadd.f32 %v6023, %v6119
      %v6121 = vpop.f32.mrb[0].mxu0
      %v6122 = vpop.f32.mrb[0].mxu0
      %v6123 = vadd.f32 %v6026, %v6122
      %v6124 = vpop.f32.mrb[0].mxu0
      %6125 = vmatprep.mubr.bf16.mxu0 %v3816
      %6126 = vmatmul.mubr.bf16.gmra.mrb[0].mxu0 %v3815
      %v6127 = vpop.f32.mrb[0].mxu0
      %v6128 = vadd.f32 %v6031, %v6127
      %v6129 = vpop.f32.mrb[0].mxu0
      %v6130 = vpop.f32.mrb[0].mxu0
      %v6131 = vadd.f32 %v6034, %v6130
      %v6132 = vpop.f32.mrb[0].mxu0
      %6133 = vdwg.mxu0
      %v6134 = vtanh.pop %v5410
      %v6135 = vtanh.pop %v5412
      %v6136 = vtanh.pop %v5636
      %v6137 = vtanh.pop %v5638
      %v6138 = vtanh.pop %v5862
      %v6139 = vtanh.pop %v5864
      %v6140 = vtanh.pop %v6072
      %v6141 = vtanh.pop %v5414
      %v6142 = vtanh.pop %v5416
      %v6143 = vtanh.pop %v5640
      %v6144 = vtanh.pop %v5642
      %v6145 = vtanh.pop %v5866
      %v6146 = vtanh.pop %v5868
      %v6147 = vtanh.pop %v6075
      %v6148 = vtanh.pop %v5420
      %v6149 = vtanh.pop %v5422
      %v6150 = vtanh.pop %v5646
      %v6151 = vtanh.pop %v5648
      %v6152 = vtanh.pop %v5872
      %v6153 = vtanh.pop %v5874
      %v6154 = vtanh.pop %v6080
      %v6155 = vtanh.pop %v5424
      %v6156 = vtanh.pop %v5426
      %v6157 = vtanh.pop %v5650
      %v6158 = vtanh.pop %v5652
      %v6159 = vtanh.pop %v5876
      %v6160 = vtanh.pop %v5878
      %v6161 = vtanh.pop %v6083
      %v6162 = vtanh.pop %v5430
      %v6163 = vtanh.pop %v5432
      %v6164 = vtanh.pop %v5656
      %v6165 = vtanh.pop %v5658
      %v6166 = vtanh.pop %v5882
      %v6167 = vtanh.pop %v5884
      %v6168 = vtanh.pop %v6088
      %v6169 = vtanh.pop %v5434
      %v6170 = vtanh.pop %v5436
      %v6171 = vtanh.pop %v5660
      %v6172 = vtanh.pop %v5662
      %v6173 = vtanh.pop %v5886
      %v6174 = vtanh.pop %v5888
      %v6175 = vtanh.pop %v6091
      %v6176 = vtanh.pop %v5440
      %v6177 = vtanh.pop %v5442
      %v6178 = vtanh.pop %v5666
      %v6179 = vtanh.pop %v5668
      %v6180 = vtanh.pop %v5892
      %v6181 = vtanh.pop %v5894
      %v6182 = vtanh.pop %v6096
      %v6183 = vtanh.pop %v5444
      %v6184 = vtanh.pop %v5446
      %v6185 = vtanh.pop %v5670
      %v6186 = vtanh.pop %v5672
      %v6187 = vtanh.pop %v5896
      %v6188 = vtanh.pop %v5898
      %v6189 = vtanh.pop %v6099
      %v6190 = vtanh.pop %v5450
      %v6191 = vtanh.pop %v5452
      %v6192 = vtanh.pop %v5676
      %v6193 = vtanh.pop %v5678
      %v6194 = vtanh.pop %v5902
      %v6195 = vtanh.pop %v5904
      %v6196 = vtanh.pop %v6104
      %v6197 = vtanh.pop %v5454
      %v6198 = vtanh.pop %v5456
      %v6199 = vtanh.pop %v5680
      %v6200 = vtanh.pop %v5682
      %v6201 = vtanh.pop %v5906
      %v6202 = vtanh.pop %v5908
      %v6203 = vtanh.pop %v6107
      %v6204 = vtanh.pop %v5460
      %v6205 = vtanh.pop %v5462
      %v6206 = vtanh.pop %v5686
      %v6207 = vtanh.pop %v5688
      %v6208 = vtanh.pop %v5912
      %v6209 = vtanh.pop %v5914
      %v6210 = vtanh.pop %v6112
      %v6211 = vtanh.pop %v5464
      %v6212 = vtanh.pop %v5466
      %v6213 = vtanh.pop %v5690
      %v6214 = vtanh.pop %v5692
      %v6215 = vtanh.pop %v5916
      %v6216 = vtanh.pop %v5918
      %v6217 = vtanh.pop %v6115
      %v6218 = vtanh.pop %v5470
      %v6219 = vtanh.pop %v5472
      %v6220 = vtanh.pop %v5696
      %v6221 = vtanh.pop %v5698
      %v6222 = vtanh.pop %v5922
      %v6223 = vtanh.pop %v5924
      %v6224 = vtanh.pop %v6120
      %v6225 = vtanh.pop %v5474
      %v6226 = vtanh.pop %v5476
      %v6227 = vtanh.pop %v5700
      %v6228 = vtanh.pop %v5702
      %v6229 = vtanh.pop %v5926
      %v6230 = vtanh.pop %v5928
      %v6231 = vtanh.pop %v6123
      %v6232 = vtanh.pop %v5480
      %v6233 = vtanh.pop %v5482
      %v6234 = vtanh.pop %v5706
      %v6235 = vtanh.pop %v5708
      %v6236 = vtanh.pop %v5932
      %v6237 = vtanh.pop %v5934
      %v6238 = vtanh.pop %v6128
      %v6239 = vtanh.pop %v5484
      %v6240 = vtanh.pop %v5486
      %v6241 = vtanh.pop %v5710
      %v6242 = vtanh.pop %v5712
      %v6243 = vtanh.pop %v5936
      %v6244 = vtanh.pop %v5938
      %v6245 = vtanh.pop %v6131
      %v6246 = vpack.c.bf16 %v6141, %v6134
      %v6247 = vpack.c.bf16 %v6142, %v6135
      %v6248 = vpack.c.bf16 %v6143, %v6136
      %v6249 = vpack.c.bf16 %v6144, %v6137
      %v6250 = vpack.c.bf16 %v6145, %v6138
      %v6251 = vpack.c.bf16 %v6146, %v6139
      %v6252 = vpack.c.bf16 %v6147, %v6140
      %v6253 = vpack.c.bf16 %v6155, %v6148
      %v6254 = vpack.c.bf16 %v6156, %v6149
      %v6255 = vpack.c.bf16 %v6157, %v6150
      %v6256 = vpack.c.bf16 %v6158, %v6151
      %v6257 = vpack.c.bf16 %v6159, %v6152
      %v6258 = vpack.c.bf16 %v6160, %v6153
      %v6259 = vpack.c.bf16 %v6161, %v6154
      %v6260 = vpack.c.bf16 %v6169, %v6162
      %v6261 = vpack.c.bf16 %v6170, %v6163
      %v6262 = vpack.c.bf16 %v6171, %v6164
      %v6263 = vpack.c.bf16 %v6172, %v6165
      %v6264 = vpack.c.bf16 %v6173, %v6166
      %v6265 = vpack.c.bf16 %v6174, %v6167
      %v6266 = vpack.c.bf16 %v6175, %v6168
      %v6267 = vpack.c.bf16 %v6183, %v6176
      %v6268 = vpack.c.bf16 %v6184, %v6177
      %v6269 = vpack.c.bf16 %v6185, %v6178
      %v6270 = vpack.c.bf16 %v6186, %v6179
      %v6271 = vpack.c.bf16 %v6187, %v6180
      %v6272 = vpack.c.bf16 %v6188, %v6181
      %v6273 = vpack.c.bf16 %v6189, %v6182
      %v6274 = vpack.c.bf16 %v6197, %v6190
      %v6275 = vpack.c.bf16 %v6198, %v6191
      %v6276 = vpack.c.bf16 %v6199, %v6192
      %v6277 = vpack.c.bf16 %v6200, %v6193
      %v6278 = vpack.c.bf16 %v6201, %v6194
      %v6279 = vpack.c.bf16 %v6202, %v6195
      %v6280 = vpack.c.bf16 %v6203, %v6196
      %v6281 = vpack.c.bf16 %v6211, %v6204
      %v6282 = vpack.c.bf16 %v6212, %v6205
      %v6283 = vpack.c.bf16 %v6213, %v6206
      %v6284 = vpack.c.bf16 %v6214, %v6207
      %v6285 = vpack.c.bf16 %v6215, %v6208
      %v6286 = vpack.c.bf16 %v6216, %v6209
      %v6287 = vpack.c.bf16 %v6217, %v6210
      %v6288 = vpack.c.bf16 %v6225, %v6218
      %v6289 = vpack.c.bf16 %v6226, %v6219
      %v6290 = vpack.c.bf16 %v6227, %v6220
      %v6291 = vpack.c.bf16 %v6228, %v6221
      %v6292 = vpack.c.bf16 %v6229, %v6222
      %v6293 = vpack.c.bf16 %v6230, %v6223
      %v6294 = vpack.c.bf16 %v6231, %v6224
      %v6295 = vpack.c.bf16 %v6239, %v6232
      %v6296 = vpack.c.bf16 %v6240, %v6233
      %v6297 = vpack.c.bf16 %v6241, %v6234
      %v6298 = vpack.c.bf16 %v6242, %v6235
      %v6299 = vpack.c.bf16 %v6243, %v6236
      %v6300 = vpack.c.bf16 %v6244, %v6237
      %v6301 = vpack.c.bf16 %v6245, %v6238
      %v6358 = vunpack.c.l.b16 %v6246
      %v6359 = vunpack.c.l.b16 %v6247
      %v6360 = vunpack.c.l.b16 %v6248
      %v6361 = vunpack.c.l.b16 %v6249
      %v6362 = vunpack.c.l.b16 %v6250
      %v6363 = vunpack.c.l.b16 %v6251
      %v6364 = vunpack.c.l.b16 %v6252
      %v6365 = vunpack.c.h.b16 %v6246
      %v6366 = vunpack.c.h.b16 %v6247
      %v6367 = vunpack.c.h.b16 %v6248
      %v6368 = vunpack.c.h.b16 %v6249
      %v6369 = vunpack.c.h.b16 %v6250
      %v6370 = vunpack.c.h.b16 %v6251
      %v6371 = vunpack.c.h.b16 %v6252
      %v6372 = vunpack.c.l.b16 %v6253
      %v6373 = vunpack.c.l.b16 %v6254
      %v6374 = vunpack.c.l.b16 %v6255
      %v6375 = vunpack.c.l.b16 %v6256
      %v6376 = vunpack.c.l.b16 %v6257
      %v6377 = vunpack.c.l.b16 %v6258
      %v6378 = vunpack.c.l.b16 %v6259
      %v6379 = vunpack.c.h.b16 %v6253
      %v6380 = vunpack.c.h.b16 %v6254
      %v6381 = vunpack.c.h.b16 %v6255
      %v6382 = vunpack.c.h.b16 %v6256
      %v6383 = vunpack.c.h.b16 %v6257
      %v6384 = vunpack.c.h.b16 %v6258
      %v6385 = vunpack.c.h.b16 %v6259
      %v6386 = vunpack.c.l.b16 %v6260
      %v6387 = vunpack.c.l.b16 %v6261
      %v6388 = vunpack.c.l.b16 %v6262
      %v6389 = vunpack.c.l.b16 %v6263
      %v6390 = vunpack.c.l.b16 %v6264
      %v6391 = vunpack.c.l.b16 %v6265
      %v6392 = vunpack.c.l.b16 %v6266
      %v6393 = vunpack.c.h.b16 %v6260
      %v6394 = vunpack.c.h.b16 %v6261
      %v6395 = vunpack.c.h.b16 %v6262
      %v6396 = vunpack.c.h.b16 %v6263
      %v6397 = vunpack.c.h.b16 %v6264
      %v6398 = vunpack.c.h.b16 %v6265
      %v6399 = vunpack.c.h.b16 %v6266
      %v6400 = vunpack.c.l.b16 %v6267
      %v6401 = vunpack.c.l.b16 %v6268
      %v6402 = vunpack.c.l.b16 %v6269
      %v6403 = vunpack.c.l.b16 %v6270
      %v6404 = vunpack.c.l.b16 %v6271
      %v6405 = vunpack.c.l.b16 %v6272
      %v6406 = vunpack.c.l.b16 %v6273
      %v6407 = vunpack.c.h.b16 %v6267
      %v6408 = vunpack.c.h.b16 %v6268
      %v6409 = vunpack.c.h.b16 %v6269
      %v6410 = vunpack.c.h.b16 %v6270
      %v6411 = vunpack.c.h.b16 %v6271
      %v6412 = vunpack.c.h.b16 %v6272
      %v6413 = vunpack.c.h.b16 %v6273
      %v6414 = vunpack.c.l.b16 %v6274
      %v6415 = vunpack.c.l.b16 %v6275
      %v6416 = vunpack.c.l.b16 %v6276
      %v6417 = vunpack.c.l.b16 %v6277
      %v6418 = vunpack.c.l.b16 %v6278
      %v6419 = vunpack.c.l.b16 %v6279
      %v6420 = vunpack.c.l.b16 %v6280
      %v6421 = vunpack.c.h.b16 %v6274
      %v6422 = vunpack.c.h.b16 %v6275
      %v6423 = vunpack.c.h.b16 %v6276
      %v6424 = vunpack.c.h.b16 %v6277
      %v6425 = vunpack.c.h.b16 %v6278
      %v6426 = vunpack.c.h.b16 %v6279
      %v6427 = vunpack.c.h.b16 %v6280
      %v6428 = vunpack.c.l.b16 %v6281
      %v6429 = vunpack.c.l.b16 %v6282
      %v6430 = vunpack.c.l.b16 %v6283
      %v6431 = vunpack.c.l.b16 %v6284
      %v6432 = vunpack.c.l.b16 %v6285
      %v6433 = vunpack.c.l.b16 %v6286
      %v6434 = vunpack.c.l.b16 %v6287
      %v6435 = vunpack.c.h.b16 %v6281
      %v6436 = vunpack.c.h.b16 %v6282
      %v6437 = vunpack.c.h.b16 %v6283
      %v6438 = vunpack.c.h.b16 %v6284
      %v6439 = vunpack.c.h.b16 %v6285
      %v6440 = vunpack.c.h.b16 %v6286
      %v6441 = vunpack.c.h.b16 %v6287
      %v6442 = vunpack.c.l.b16 %v6288
      %v6443 = vunpack.c.l.b16 %v6289
      %v6444 = vunpack.c.l.b16 %v6290
      %v6445 = vunpack.c.l.b16 %v6291
      %v6446 = vunpack.c.l.b16 %v6292
      %v6447 = vunpack.c.l.b16 %v6293
      %v6448 = vunpack.c.l.b16 %v6294
      %v6449 = vunpack.c.h.b16 %v6288
      %v6450 = vunpack.c.h.b16 %v6289
      %v6451 = vunpack.c.h.b16 %v6290
      %v6452 = vunpack.c.h.b16 %v6291
      %v6453 = vunpack.c.h.b16 %v6292
      %v6454 = vunpack.c.h.b16 %v6293
      %v6455 = vunpack.c.h.b16 %v6294
      %v6456 = vunpack.c.l.b16 %v6295
      %v6457 = vunpack.c.l.b16 %v6296
      %v6458 = vunpack.c.l.b16 %v6297
      %v6459 = vunpack.c.l.b16 %v6298
      %v6460 = vunpack.c.l.b16 %v6299
      %v6461 = vunpack.c.l.b16 %v6300
      %v6462 = vunpack.c.l.b16 %v6301
      %v6463 = vunpack.c.h.b16 %v6295
      %v6464 = vunpack.c.h.b16 %v6296
      %v6465 = vunpack.c.h.b16 %v6297
      %v6466 = vunpack.c.h.b16 %v6298
      %v6467 = vunpack.c.h.b16 %v6299
      %v6468 = vunpack.c.h.b16 %v6300
      %v6469 = vunpack.c.h.b16 %v6301
      %v6470 = vpack.c.b16 %v6359, %v6358
      %v6471 = vpack.c.b16 %v6361, %v6360
      %v6472 = vpack.c.b16 %v6363, %v6362
      %v6473 = vpack.c.b16 %v6364, %v6364
      %v6474 = vpack.c.b16 %v6366, %v6365
      %v6475 = vpack.c.b16 %v6368, %v6367
      %v6476 = vpack.c.b16 %v6370, %v6369
      %v6477 = vpack.c.b16 %v6371, %v6371
      %v6478 = vpack.c.b16 %v6373, %v6372
      %v6479 = vpack.c.b16 %v6375, %v6374
      %v6480 = vpack.c.b16 %v6377, %v6376
      %v6481 = vpack.c.b16 %v6378, %v6378
      %v6482 = vpack.c.b16 %v6380, %v6379
      %v6483 = vpack.c.b16 %v6382, %v6381
      %v6484 = vpack.c.b16 %v6384, %v6383
      %v6485 = vpack.c.b16 %v6385, %v6385
      %v6486 = vpack.c.b16 %v6387, %v6386
      %v6487 = vpack.c.b16 %v6389, %v6388
      %v6488 = vpack.c.b16 %v6391, %v6390
      %v6489 = vpack.c.b16 %v6392, %v6392
      %v6490 = vpack.c.b16 %v6394, %v6393
      %v6491 = vpack.c.b16 %v6396, %v6395
      %v6492 = vpack.c.b16 %v6398, %v6397
      %v6493 = vpack.c.b16 %v6399, %v6399
      %v6494 = vpack.c.b16 %v6401, %v6400
      %v6495 = vpack.c.b16 %v6403, %v6402
      %v6496 = vpack.c.b16 %v6405, %v6404
      %v6497 = vpack.c.b16 %v6406, %v6406
      %v6498 = vpack.c.b16 %v6408, %v6407
      %v6499 = vpack.c.b16 %v6410, %v6409
      %v6500 = vpack.c.b16 %v6412, %v6411
      %v6501 = vpack.c.b16 %v6413, %v6413
      %v6502 = vpack.c.b16 %v6415, %v6414
      %v6503 = vpack.c.b16 %v6417, %v6416
      %v6504 = vpack.c.b16 %v6419, %v6418
      %v6505 = vpack.c.b16 %v6420, %v6420
      %v6506 = vpack.c.b16 %v6422, %v6421
      %v6507 = vpack.c.b16 %v6424, %v6423
      %v6508 = vpack.c.b16 %v6426, %v6425
      %v6509 = vpack.c.b16 %v6427, %v6427
      %v6510 = vpack.c.b16 %v6429, %v6428
      %v6511 = vpack.c.b16 %v6431, %v6430
      %v6512 = vpack.c.b16 %v6433, %v6432
      %v6513 = vpack.c.b16 %v6434, %v6434
      %v6514 = vpack.c.b16 %v6436, %v6435
      %v6515 = vpack.c.b16 %v6438, %v6437
      %v6516 = vpack.c.b16 %v6440, %v6439
      %v6517 = vpack.c.b16 %v6441, %v6441
      %v6518 = vpack.c.b16 %v6443, %v6442
      %v6519 = vpack.c.b16 %v6445, %v6444
      %v6520 = vpack.c.b16 %v6447, %v6446
      %v6521 = vpack.c.b16 %v6448, %v6448
      %v6522 = vpack.c.b16 %v6450, %v6449
      %v6523 = vpack.c.b16 %v6452, %v6451
      %v6524 = vpack.c.b16 %v6454, %v6453
      %v6525 = vpack.c.b16 %v6455, %v6455
      %v6526 = vpack.c.b16 %v6457, %v6456
      %v6527 = vpack.c.b16 %v6459, %v6458
      %v6528 = vpack.c.b16 %v6461, %v6460
      %v6529 = vpack.c.b16 %v6462, %v6462
      %v6530 = vpack.c.b16 %v6464, %v6463
      %v6531 = vpack.c.b16 %v6466, %v6465
      %v6532 = vpack.c.b16 %v6468, %v6467
      %v6533 = vpack.c.b16 %v6469, %v6469
      %6598 = vst [vmem:[%s477] sm:$0xff] %v6470
      %6599 = vst [vmem:[%s477 + $0x8] sm:$0xff] %v6471
      %6600 = vst [vmem:[%s477 + $0x10] sm:$0xff] %v6472
      %vm6601 = vcmask 125952
      %6602 = vst.msk [vmem:[%s477 + $0x18] sm:$0xf] %vm6601, %v6473
      %6603 = vst [vmem:[%s477 + $0x1c] sm:$0xff] %v6474
      %6604 = vst [vmem:[%s477 + $0x24] sm:$0xff] %v6475
      %6605 = vst [vmem:[%s477 + $0x2c] sm:$0xff] %v6476
      %6606 = vst.msk [vmem:[%s477 + $0x34] sm:$0xf] %vm6601, %v6477
      %6607 = vst [vmem:[%s477 + $0x38] sm:$0xff] %v6478
      %6608 = vst [vmem:[%s477 + $0x40] sm:$0xff] %v6479
      %6609 = vst [vmem:[%s477 + $0x48] sm:$0xff] %v6480
      %6610 = vst.msk [vmem:[%s477 + $0x50] sm:$0xf] %vm6601, %v6481
      %6611 = vst [vmem:[%s477 + $0x54] sm:$0xff] %v6482
      %6612 = vst [vmem:[%s477 + $0x5c] sm:$0xff] %v6483
      %6613 = vst [vmem:[%s477 + $0x64] sm:$0xff] %v6484
      %6614 = vst.msk [vmem:[%s477 + $0x6c] sm:$0xf] %vm6601, %v6485
      %6615 = vst [vmem:[%s477 + $0x70] sm:$0xff] %v6486
      %6616 = vst [vmem:[%s477 + $0x78] sm:$0xff] %v6487
      %6617 = vst [vmem:[%s477 + $0x80] sm:$0xff] %v6488
      %6618 = vst.msk [vmem:[%s477 + $0x88] sm:$0xf] %vm6601, %v6489
      %6619 = vst [vmem:[%s477 + $0x8c] sm:$0xff] %v6490
      %6620 = vst [vmem:[%s477 + $0x94] sm:$0xff] %v6491
      %6621 = vst [vmem:[%s477 + $0x9c] sm:$0xff] %v6492
      %6622 = vst.msk [vmem:[%s477 + $0xa4] sm:$0xf] %vm6601, %v6493
      %6623 = vst [vmem:[%s477 + $0xa8] sm:$0xff] %v6494
      %6624 = vst [vmem:[%s477 + $0xb0] sm:$0xff] %v6495
      %6625 = vst [vmem:[%s477 + $0xb8] sm:$0xff] %v6496
      %6626 = vst.msk [vmem:[%s477 + $0xc0] sm:$0xf] %vm6601, %v6497
      %6627 = vst [vmem:[%s477 + $0xc4] sm:$0xff] %v6498
      %6628 = vst [vmem:[%s477 + $0xcc] sm:$0xff] %v6499
      %6629 = vst [vmem:[%s477 + $0xd4] sm:$0xff] %v6500
      %6630 = vst.msk [vmem:[%s477 + $0xdc] sm:$0xf] %vm6601, %v6501
      %6631 = vst [vmem:[%s477 + $0xe0] sm:$0xff] %v6502
      %6632 = vst [vmem:[%s477 + $0xe8] sm:$0xff] %v6503
      %6633 = vst [vmem:[%s477 + $0xf0] sm:$0xff] %v6504
      %6634 = vst.msk [vmem:[%s477 + $0xf8] sm:$0xf] %vm6601, %v6505
      %6635 = vst [vmem:[%s477 + $0xfc] sm:$0xff] %v6506
      %6636 = vst [vmem:[%s477 + $0x104] sm:$0xff] %v6507
      %6637 = vst [vmem:[%s477 + $0x10c] sm:$0xff] %v6508
      %6638 = vst.msk [vmem:[%s477 + $0x114] sm:$0xf] %vm6601, %v6509
      %6639 = vst [vmem:[%s477 + $0x118] sm:$0xff] %v6510
      %6640 = vst [vmem:[%s477 + $0x120] sm:$0xff] %v6511
      %6641 = vst [vmem:[%s477 + $0x128] sm:$0xff] %v6512
      %6642 = vst.msk [vmem:[%s477 + $0x130] sm:$0xf] %vm6601, %v6513
      %6643 = vst [vmem:[%s477 + $0x134] sm:$0xff] %v6514
      %6644 = vst [vmem:[%s477 + $0x13c] sm:$0xff] %v6515
      %6645 = vst [vmem:[%s477 + $0x144] sm:$0xff] %v6516
      %6646 = vst.msk [vmem:[%s477 + $0x14c] sm:$0xf] %vm6601, %v6517
      %6647 = vst [vmem:[%s477 + $0x150] sm:$0xff] %v6518
      %6648 = vst [vmem:[%s477 + $0x158] sm:$0xff] %v6519
      %6649 = vst [vmem:[%s477 + $0x160] sm:$0xff] %v6520
      %6650 = vst.msk [vmem:[%s477 + $0x168] sm:$0xf] %vm6601, %v6521
      %6651 = vst [vmem:[%s477 + $0x16c] sm:$0xff] %v6522
      %6652 = vst [vmem:[%s477 + $0x174] sm:$0xff] %v6523
      %6653 = vst [vmem:[%s477 + $0x17c] sm:$0xff] %v6524
      %6654 = vst.msk [vmem:[%s477 + $0x184] sm:$0xf] %vm6601, %v6525
      %6655 = vst [vmem:[%s477 + $0x188] sm:$0xff] %v6526
      %6656 = vst [vmem:[%s477 + $0x190] sm:$0xff] %v6527
      %6657 = vst [vmem:[%s477 + $0x198] sm:$0xff] %v6528
      %6658 = vst.msk [vmem:[%s477 + $0x1a0] sm:$0xf] %vm6601, %v6529
      %6659 = vst [vmem:[%s477 + $0x1a4] sm:$0xff] %v6530
      %6660 = vst [vmem:[%s477 + $0x1ac] sm:$0xff] %v6531
      %6661 = vst [vmem:[%s477 + $0x1b4] sm:$0xff] %v6532
      %6662 = vst.msk [vmem:[%s477 + $0x1bc] sm:$0xf] %vm6601, %v6533
      %vm6663 = vcmask 31744
      %6664 = vst.msk [vmem:[%s483] sm:$0xff] %vm6663, %v3078
      %6665 = vst.msk [vmem:[%s483 + $0x8] sm:$0xff] %vm6663, %v3081
      %6666 = vst.msk [vmem:[%s483 + $0x10] sm:$0xff] %vm6663, %v3086
      %6667 = vst.msk [vmem:[%s483 + $0x18] sm:$0xff] %vm6663, %v3089
      %6668 = vst.msk [vmem:[%s483 + $0x20] sm:$0xff] %vm6663, %v3094
      %6669 = vst.msk [vmem:[%s483 + $0x28] sm:$0xff] %vm6663, %v3097
      %6670 = vst.msk [vmem:[%s483 + $0x30] sm:$0xff] %vm6663, %v3102
      %6671 = vst.msk [vmem:[%s483 + $0x38] sm:$0xff] %vm6663, %v3105
      %6672 = vst.msk [vmem:[%s483 + $0x40] sm:$0xff] %vm6663, %v3110
      %6673 = vst.msk [vmem:[%s483 + $0x48] sm:$0xff] %vm6663, %v3113
      %6674 = vst.msk [vmem:[%s483 + $0x50] sm:$0xff] %vm6663, %v3118
      %6675 = vst.msk [vmem:[%s483 + $0x58] sm:$0xff] %vm6663, %v3121
      %6676 = vst.msk [vmem:[%s483 + $0x60] sm:$0xff] %vm6663, %v3126
      %6677 = vst.msk [vmem:[%s483 + $0x68] sm:$0xff] %vm6663, %v3129
      %6678 = vst.msk [vmem:[%s483 + $0x70] sm:$0xff] %vm6663, %v3134
      %6679 = vst.msk [vmem:[%s483 + $0x78] sm:$0xff] %vm6663, %v3137
      %s6680 = smul.u32 16, %s25
      %p6681 = scmp.lt.s32.totalorder %s6680, 31
      %s6682 = scalar_select %p6681, %s6680, 31
      %s6683 = smul.addr %s6682, 7
      %s6684 = smul.addr %s6683, 4
      %s6685 = scalar_lea.vmem %s12, %s6684
      %s6686 = smul.u32 16, %s25
      %p6687 = scmp.lt.s32.totalorder %s6686, 31
      %s6688 = scalar_select %p6687, %s6686, 31
      %s6689 = smul.addr %s6688, 8
      %s6690 = scalar_lea.vmem %s13, %s6689
      // Predicated region
      $region69: #{tpu_custom_call.1} parent=67 // pred_check
        %p6691 = pneg %p305
      $region70: #{tpu_custom_call.1} parent=67 // pred_check_branch
        %6693 = sbr.rel (%p6691) target = $region72
      $region71: #{tpu_custom_call.1} parent=67 // pred_region
        %s6694 = smul.u32 16, %s25
      $region72: #{tpu_custom_call.1} parent=67 // pred_fallthru
        _
      // Predicated region
      $region73: #{tpu_custom_call.1} parent=67 // pred_check
        %p6695 = pneg %p331
      $region74: #{tpu_custom_call.1} parent=67 // pred_check_branch
        %6697 = sbr.rel (%p6695) target = $region76
      $region75: #{tpu_custom_call.1} parent=67 // pred_region
        %s6698 = smul.u32 16, %s25
      $region76: #{tpu_custom_call.1} parent=67 // pred_fallthru
        _
    $region68: #{tpu_custom_call.1} parent=5 // pred_fallthru
      _
    %p6699 = scmp.le.s32.totalorder 2, %s20
    // Predicated region
    $region77: #{tpu_custom_call.1} parent=5 // pred_check
      %p6700 = pneg %p6699
    $region78: #{tpu_custom_call.1} parent=5 // pred_check_branch
      %6702 = sbr.rel (%p6700) target = $region80
    $region79: #{tpu_custom_call.1} parent=5 // pred_region
      %s6703 = ssub.s32 %s20, 2
      // Predicated region
      $region81: #{tpu_custom_call.1} parent=79 // pred_check
        %p6704 = pneg %p311
      $region82: #{tpu_custom_call.1} parent=79 // pred_check_branch
        %6706 = sbr.rel (%p6704) target = $region84
      $region83: #{tpu_custom_call.1} parent=79 // pred_region
        %s6707 = smul.u32 16, %s26
        %p6708 = scmp.lt.s32.totalorder %s6707, 31
        %s6709 = scalar_select %p6708, %s6707, 31
        %s6710 = smul.addr %s6709, 7
        %s6711 = smul.addr %s6710, 4
        %s6712 = scalar_lea.vmem %s12, %s6711
      $region84: #{tpu_custom_call.1} parent=79 // pred_fallthru
        _
      // Predicated region
      $region85: #{tpu_custom_call.1} parent=79 // pred_check
        %p6713 = pneg %p337
      $region86: #{tpu_custom_call.1} parent=79 // pred_check_branch
        %6715 = sbr.rel (%p6713) target = $region88
      $region87: #{tpu_custom_call.1} parent=79 // pred_region
        %s6716 = smul.u32 16, %s26
        %p6717 = scmp.lt.s32.totalorder %s6716, 31
        %s6718 = scalar_select %p6717, %s6716, 31
        %s6719 = smul.addr %s6718, 8
        %s6720 = scalar_lea.vmem %s13, %s6719
      $region88: #{tpu_custom_call.1} parent=79 // pred_fallthru
        _
    $region80: #{tpu_custom_call.1} parent=5 // pred_fallthru
      _
  $region6: #{tpu_custom_call.1} parent=0 // loop_footer
    %s24 = sadd.s32 1, %s20
  $region7: #{tpu_custom_call.1} parent=0 // loop_footer_branch
    %19 = sbr.rel target = $region3
  $region8: #{tpu_custom_call.1} parent=0 // loop_exit
    _

</llo_original>
